<compile_context>
chip_gen: v5e
topology: v5e:2x2
jax: 0.10.0
libtpu: 0.0.40
codegen_flags: <defaults>
</compile_context>

<pallas_src>
import functools

import jax
import jax.numpy as jnp
from jax.experimental import pallas as pl
from jax.experimental.pallas import tpu as pltpu


def _postnet_kernel(x_ref, w1_ref, b1_ref, w2_ref, b2_ref, w3_ref, b3_ref,
                    w4_ref, b4_ref, mask_ref, out_ref, pad_ref, *,
                    C, H, W, K, PAD, LPAD):
    """One batch element of the fused 4-layer PostNet forward.

    x_ref    : (1, H*W)               f32  input slab (Cin == 1)
    wL_ref   : (K*K, CoutL, CinL)     per-tap conv weights (bf16 for L=2,3)
    bL_ref   : (CoutL, 1)             f32  biases
    mask_ref : (K, H*W)               f32  horizontal-wrap column masks per kw
    out_ref  : (1, H*W)               f32  output slab (Cout == 1)
    pad_ref  : (C, LPAD + H*W + PADF) f32  zero-halo-padded flat activations
    """
    HW = H * W
    PADF = PAD * (W + 1)

    # Zero only the halo columns taps can actually read; the interior
    # [LPAD, LPAD+HW) is overwritten every layer.  Done every grid step so a
    # "parallel"-sharded grid needs no cross-step scratch state.
    if PADF > 0:
        pad_ref[:, LPAD - PADF:LPAD] = jnp.zeros((C, PADF), jnp.float32)
        pad_ref[:, LPAD + HW:LPAD + HW + PADF] = jnp.zeros((C, PADF),
                                                           jnp.float32)

    def taps(cin):
        # Lane-shifted views of the padded slab, one per conv tap.  Vertical
        # out-of-range taps land in the zero halos; horizontal wrap into the
        # neighbouring image row is zeroed by the per-kw column mask.
        for kh in range(K):
            for kw in range(K):
                shift = (kh - PAD) * W + (kw - PAD)
                tap = pad_ref[0:cin, LPAD + shift:LPAD + shift + HW]
                if kw != PAD:
                    tap = tap * mask_ref[kw:kw + 1, :]
                yield kh * K + kw, tap
    # TODO(synk): if VALU-bound at small C, pre-build K horizontally
    # shifted+masked slab copies per layer to cut mask multiplies K*(K-1)->K-1.

    # ---- layer 1 (Cin == 1): per-tap outer product on the VPU, f32 ----------
    pad_ref[0:1, LPAD:LPAD + HW] = x_ref[...]
    acc = jnp.zeros((C, HW), jnp.float32)
    for t, tap in taps(1):
        acc = acc + w1_ref[t] * tap                      # (C,1)*(1,HW) bcast
    h = jnp.tanh(acc + b1_ref[...])                      # dropout == identity

    # ---- layers 2, 3: per-tap MXU matmuls, bf16 operands / f32 accumulate ---
    for w_ref, b_ref in ((w2_ref, b2_ref), (w3_ref, b3_ref)):
        pad_ref[:, LPAD:LPAD + HW] = h
        acc = jnp.zeros((C, HW), jnp.float32)
        for t, tap in taps(C):
            acc = acc + jnp.dot(w_ref[t], tap.astype(w_ref.dtype),
                                preferred_element_type=jnp.float32)
        h = jnp.tanh(acc + b_ref[...])

    # ---- layer 4 (Cout == 1): kept f32, fused residual add ------------------
    pad_ref[:, LPAD:LPAD + HW] = h
    acc = jnp.zeros((1, HW), jnp.float32)
    for t, tap in taps(C):
        acc = acc + jnp.dot(w4_ref[t], tap, preferred_element_type=jnp.float32)
    out_ref[...] = (acc + b4_ref[...] + x_ref[...]).astype(out_ref.dtype)


def _prep_weight(w, dtype):
    """OIHW (Cout, Cin, K, K) -> per-tap (K*K, Cout, Cin)."""
    Cout, Cin, K, _ = w.shape
    return jnp.transpose(w, (2, 3, 0, 1)).reshape(K * K, Cout, Cin).astype(dtype)


@functools.partial(jax.jit, static_argnames=("padding",))
def postnet_forward(x, params, *, padding):
    """params = ((w1,b1),(w2,b2),(w3,b3),(w4,b4)), OIHW conv weights."""
    N, Cin, H, W = x.shape
    (w1, b1), (w2, b2), (w3, b3), (w4, b4) = params
    C = w1.shape[0]                      # hidden width (out_channels)
    K = w1.shape[2]
    HW = H * W
    PADF = padding * (W + 1)             # flat halo width actually read
    LPAD = max(((PADF + 127) // 128) * 128, 128)  # lane-aligned interior start

    assert Cin == 1 and w4.shape[0] == 1, "residual add requires in_channels == 1"
    assert 2 * padding == K - 1, "residual add requires 'same' convolutions"

    # Ragged per-layer per-tap weights; bf16 only where they feed the MXU.
    w1p = _prep_weight(w1, jnp.float32)            # (K*K, C, 1)  VPU path
    w2p = _prep_weight(w2, jnp.bfloat16)           # (K*K, C, C)  MXU bf16
    w3p = _prep_weight(w3, jnp.bfloat16)           # (K*K, C, C)  MXU bf16
    w4p = _prep_weight(w4, jnp.float32)            # (K*K, 1, C)  residual layer
    b1p = b1.reshape(C, 1).astype(jnp.float32)
    b2p = b2.reshape(C, 1).astype(jnp.float32)
    b3p = b3.reshape(C, 1).astype(jnp.float32)
    b4p = b4.reshape(1, 1).astype(jnp.float32)

    # Column masks: tap kw is invalid where w + (kw - padding) leaves [0, W).
    w_idx = jnp.arange(HW, dtype=jnp.int32) % W
    col_masks = jnp.stack(
        [((w_idx + (kw - padding) >= 0) & (w_idx + (kw - padding) < W))
         .astype(jnp.float32) for kw in range(K)])             # (K, HW)

    # Lane-dense HBM-facing slabs (last dim = H*W, a multiple of 128 here).
    x_slab = x.reshape(N, 1, HW).astype(jnp.float32)

    kern = functools.partial(_postnet_kernel, C=C, H=H, W=W, K=K,
                             PAD=padding, LPAD=LPAD)

    # Cost / VMEM budget for the restructured (ragged, batch-grid) kernel.
    weight_bytes = sum(int(a.size) * a.dtype.itemsize
                       for a in (w1p, w2p, w3p, w4p, b1p, b2p, b3p, b4p,
                                 col_masks))
    flops = 2 * N * K * K * HW * (C + 2 * C * C + C)
    transcendentals = 3 * N * C * HW
    bytes_accessed = 2 * N * HW * 4 + weight_bytes
    pad_bytes = C * (LPAD + HW + PADF) * 4
    resident = (weight_bytes + pad_bytes
                + 2 * 2 * HW * 4            # double-buffered in/out blocks
                + 3 * C * HW * 4)           # live activation / accumulator temps
    vmem_limit = min(max(2 * resident, 8 << 20), 64 << 20)  # <=64 MiB: v7x TC

    out_slab = pl.pallas_call(
        kern,
        out_shape=jax.ShapeDtypeStruct((N, 1, HW), jnp.float32),
        grid_spec=pltpu.PrefetchScalarGridSpec(
            num_scalar_prefetch=0,
            grid=(N,),                       # parallel over batch (no halo)
            in_specs=[
                pl.BlockSpec((None, 1, HW), lambda n: (n, 0, 0)),   # x
                pl.BlockSpec((K * K, C, 1), lambda n: (0, 0, 0)),   # w1 (resident)
                pl.BlockSpec((C, 1), lambda n: (0, 0)),             # b1
                pl.BlockSpec((K * K, C, C), lambda n: (0, 0, 0)),   # w2
                pl.BlockSpec((C, 1), lambda n: (0, 0)),             # b2
                pl.BlockSpec((K * K, C, C), lambda n: (0, 0, 0)),   # w3
                pl.BlockSpec((C, 1), lambda n: (0, 0)),             # b3
                pl.BlockSpec((K * K, 1, C), lambda n: (0, 0, 0)),   # w4
                pl.BlockSpec((1, 1), lambda n: (0, 0)),             # b4
                pl.BlockSpec((K, HW), lambda n: (0, 0)),            # masks
            ],
            out_specs=pl.BlockSpec((None, 1, HW), lambda n: (n, 0, 0)),
            scratch_shapes=[pltpu.VMEM((C, LPAD + HW + PADF), jnp.float32)],
        ),
        compiler_params=pltpu.CompilerParams(
            dimension_semantics=("parallel",),
            vmem_limit_bytes=vmem_limit),
        cost_estimate=pl.CostEstimate(flops=flops,
                                      transcendentals=transcendentals,
                                      bytes_accessed=bytes_accessed),
        # TODO(synk): for realistic PostNet sizes (H = hundreds of frames) add
        # an H-tile grid axis with a (n_layers-1)*PAD-row recompute halo so the
        # activation slab fits per-TC VMEM; for very large C on v7x keep the
        # bf16 weights in HBM (memory_space=pl.ANY) and double-buffer them per
        # layer with pltpu.make_async_copy.
    )(x_slab, w1p, b1p, w2p, b2p, w3p, b3p, w4p, b4p, col_masks)
    return out_slab.reshape(N, 1, H, W)


class PostNetPallas:
    """Pallas re-implementation of PostNet (inference: dropout == identity)."""

    def __init__(self, in_channels, out_channels, kernel, stride, padding,
                 dropout, *, key):
        assert stride == 1 and 2 * padding == kernel - 1, \
            "residual add requires 'same' convolutions (stride=1, pad=(k-1)/2)"
        assert in_channels == 1, "x += residual requires in_channels == 1"
        del dropout                      # nn.Dropout is identity at inference.
        self.padding = padding
        keys = jax.random.split(key, 8)

        def conv_params(w_key, b_key, cin, cout):
            fan_in = cin * kernel * kernel
            bound = 1.0 / jnp.sqrt(jnp.float32(fan_in))
            w = jax.random.uniform(w_key, (cout, cin, kernel, kernel),
                                   jnp.float32, -bound, bound)
            b = jax.random.uniform(b_key, (cout,), jnp.float32, -bound, bound)
            return w, b

        self.params = (
            conv_params(keys[0], keys[1], in_channels, out_channels),
            conv_params(keys[2], keys[3], out_channels, out_channels),
            conv_params(keys[4], keys[5], out_channels, out_channels),
            conv_params(keys[6], keys[7], out_channels, 1),
        )

    def __call__(self, x):
        return postnet_forward(x, self.params, padding=self.padding)


def _reference_forward(net, x):
    """Pure-JAX f32 reference (matches PyTorch eval-mode semantics)."""
    def conv(h, w, b, p):
        y = jax.lax.conv_general_dilated(
            h, w, window_strides=(1, 1), padding=[(p, p), (p, p)],
            dimension_numbers=("NCHW", "OIHW", "NCHW"))
        return y + b.reshape(1, -1, 1, 1)

    (w1, b1), (w2, b2), (w3, b3), (w4, b4) = net.params
    h = jnp.tanh(conv(x, w1, b1, net.padding))
    h = jnp.tanh(conv(h, w2, b2, net.padding))
    h = jnp.tanh(conv(h, w3, b3, net.padding))
    return conv(h, w4, b4, net.padding) + x


if __name__ == "__main__":
    # Small shapes consistent with the module: in_channels must be 1 for the
    # residual add (cnn4 has 1 output channel).
    N, Cin, H, W = 2, 1, 16, 16
    Cout, kernel, stride, padding, dropout = 4, 3, 1, 1, 0.5

    root = jax.random.PRNGKey(0)
    x_key, p_key = jax.random.split(root)
    x = jax.random.normal(x_key, (N, Cin, H, W), jnp.float32)
    net = PostNetPallas(Cin, Cout, kernel, stride, padding, dropout, key=p_key)

    y = jax.block_until_ready(net(x))
    y_ref = _reference_forward(net, x)

    assert y.shape == (N, 1, H, W)
    max_err = jnp.max(jnp.abs(y - y_ref))
    # Layers 2/3 use bf16 MXU operands -> relaxed tolerance vs the f32 reference.
    assert jnp.allclose(y, y_ref, atol=2e-2, rtol=2e-2), \
        f"mismatch vs reference (max abs err {max_err:.3e})"
    print("KERNEL_OK")
</pallas_src>

<mosaic_0001>
module attributes {stable_mosaic.version = 11 : i64} {
  func.func @_postnet_kernel(%arg0: i32, %arg1: memref<1x1x256xf32, #tpu.memory_space<vmem>>, %arg2: memref<9x4x1xf32, #tpu.memory_space<vmem>>, %arg3: memref<4x1xf32, #tpu.memory_space<vmem>>, %arg4: memref<9x4x4xbf16, #tpu.memory_space<vmem>>, %arg5: memref<4x1xf32, #tpu.memory_space<vmem>>, %arg6: memref<9x4x4xbf16, #tpu.memory_space<vmem>>, %arg7: memref<4x1xf32, #tpu.memory_space<vmem>>, %arg8: memref<9x1x4xf32, #tpu.memory_space<vmem>>, %arg9: memref<1x1xf32, #tpu.memory_space<vmem>>, %arg10: memref<3x256xf32, #tpu.memory_space<vmem>>, %arg11: memref<1x1x256xf32, #tpu.memory_space<vmem>>, %arg12: memref<4x401xf32, #tpu.memory_space<vmem>>) attributes {dimension_semantics = [#tpu.dimension_semantics<parallel>], iteration_bounds = array<i64: 2>, scalar_prefetch = 0 : i64, scratch_operands = 1 : i64, tpu.core_type = #tpu.core_type<tc>, window_params = [{transform_indices = @transform_0, window_bounds = array<i64: 1, 1, 256>}, {pipeline_mode = #tpu.pipeline_mode<synchronous>, transform_indices = @transform_1, window_bounds = array<i64: 9, 4, 1>}, {pipeline_mode = #tpu.pipeline_mode<synchronous>, transform_indices = @transform_2, window_bounds = array<i64: 4, 1>}, {pipeline_mode = #tpu.pipeline_mode<synchronous>, transform_indices = @transform_3, window_bounds = array<i64: 9, 4, 4>}, {pipeline_mode = #tpu.pipeline_mode<synchronous>, transform_indices = @transform_4, window_bounds = array<i64: 4, 1>}, {pipeline_mode = #tpu.pipeline_mode<synchronous>, transform_indices = @transform_5, window_bounds = array<i64: 9, 4, 4>}, {pipeline_mode = #tpu.pipeline_mode<synchronous>, transform_indices = @transform_6, window_bounds = array<i64: 4, 1>}, {pipeline_mode = #tpu.pipeline_mode<synchronous>, transform_indices = @transform_7, window_bounds = array<i64: 9, 1, 4>}, {pipeline_mode = #tpu.pipeline_mode<synchronous>, transform_indices = @transform_8, window_bounds = array<i64: 1, 1>}, {pipeline_mode = #tpu.pipeline_mode<synchronous>, transform_indices = @transform_9, window_bounds = array<i64: 3, 256>}, {transform_indices = @transform_10, window_bounds = array<i64: 1, 1, 256>}]} {
    %cst = arith.constant 0.000000e+00 : f32
    %0 = vector.broadcast %cst : f32 to vector<4x17xf32>
    %c0 = arith.constant 0 : index
    %c111 = arith.constant 111 : index
    %1 = vector.load %arg12[%c0, %c111] : memref<4x401xf32, #tpu.memory_space<vmem>>, vector<4x17xf32>
    tpu.vector_store %arg12[%c0, %c111], %0 {strides = array<i32>} : memref<4x401xf32, #tpu.memory_space<vmem>>, vector<4x17xf32>,
    %cst_0 = arith.constant 0.000000e+00 : f32
    %2 = vector.broadcast %cst_0 : f32 to vector<4x17xf32>
    %c0_1 = arith.constant 0 : index
    %c384 = arith.constant 384 : index
    %3 = vector.load %arg12[%c0_1, %c384] : memref<4x401xf32, #tpu.memory_space<vmem>>, vector<4x17xf32>
    tpu.vector_store %arg12[%c0_1, %c384], %2 {strides = array<i32>} : memref<4x401xf32, #tpu.memory_space<vmem>>, vector<4x17xf32>,
    %c0_2 = arith.constant 0 : index
    %c0_3 = arith.constant 0 : index
    %c0_4 = arith.constant 0 : index
    %4 = vector.load %arg1[%c0_2, %c0_3, %c0_4] : memref<1x1x256xf32, #tpu.memory_space<vmem>>, vector<1x1x256xf32>
    %5 = vector.shape_cast %4 : vector<1x1x256xf32> to vector<1x256xf32>
    %c0_5 = arith.constant 0 : index
    %c128 = arith.constant 128 : index
    %6 = vector.load %arg12[%c0_5, %c128] : memref<4x401xf32, #tpu.memory_space<vmem>>, vector<1x256xf32>
    tpu.vector_store %arg12[%c0_5, %c128], %5 {strides = array<i32>} : memref<4x401xf32, #tpu.memory_space<vmem>>, vector<1x256xf32>,
    %cst_6 = arith.constant 0.000000e+00 : f32
    %7 = vector.broadcast %cst_6 : f32 to vector<4x256xf32>
    %c0_7 = arith.constant 0 : index
    %c111_8 = arith.constant 111 : index
    %8 = vector.load %arg12[%c0_7, %c111_8] : memref<4x401xf32, #tpu.memory_space<vmem>>, vector<1x256xf32>
    %c0_9 = arith.constant 0 : index
    %c0_10 = arith.constant 0 : index
    %9 = vector.load %arg10[%c0_9, %c0_10] : memref<3x256xf32, #tpu.memory_space<vmem>>, vector<1x256xf32>
    %10 = arith.mulf %8, %9 : vector<1x256xf32>
    %c0_11 = arith.constant 0 : index
    %c0_12 = arith.constant 0 : index
    %c0_13 = arith.constant 0 : index
    %11 = vector.load %arg2[%c0_11, %c0_12, %c0_13] : memref<9x4x1xf32, #tpu.memory_space<vmem>>, vector<1x4x1xf32>
    %12 = vector.shape_cast %11 : vector<1x4x1xf32> to vector<4x1xf32>
    %13 = vector.broadcast %12 : vector<4x1xf32> to vector<4x256xf32>
    %14 = vector.broadcast %10 : vector<1x256xf32> to vector<4x256xf32>
    %15 = arith.mulf %13, %14 : vector<4x256xf32>
    %16 = arith.addf %7, %15 : vector<4x256xf32>
    %c0_14 = arith.constant 0 : index
    %c112 = arith.constant 112 : index
    %17 = vector.load %arg12[%c0_14, %c112] : memref<4x401xf32, #tpu.memory_space<vmem>>, vector<1x256xf32>
    %c1 = arith.constant 1 : index
    %c0_15 = arith.constant 0 : index
    %c0_16 = arith.constant 0 : index
    %18 = vector.load %arg2[%c1, %c0_15, %c0_16] : memref<9x4x1xf32, #tpu.memory_space<vmem>>, vector<1x4x1xf32>
    %19 = vector.shape_cast %18 : vector<1x4x1xf32> to vector<4x1xf32>
    %20 = vector.broadcast %19 : vector<4x1xf32> to vector<4x256xf32>
    %21 = vector.broadcast %17 : vector<1x256xf32> to vector<4x256xf32>
    %22 = arith.mulf %20, %21 : vector<4x256xf32>
    %23 = arith.addf %16, %22 : vector<4x256xf32>
    %c0_17 = arith.constant 0 : index
    %c113 = arith.constant 113 : index
    %24 = vector.load %arg12[%c0_17, %c113] : memref<4x401xf32, #tpu.memory_space<vmem>>, vector<1x256xf32>
    %c2 = arith.constant 2 : index
    %c0_18 = arith.constant 0 : index
    %25 = vector.load %arg10[%c2, %c0_18] : memref<3x256xf32, #tpu.memory_space<vmem>>, vector<1x256xf32>
    %26 = arith.mulf %24, %25 : vector<1x256xf32>
    %c2_19 = arith.constant 2 : index
    %c0_20 = arith.constant 0 : index
    %c0_21 = arith.constant 0 : index
    %27 = vector.load %arg2[%c2_19, %c0_20, %c0_21] : memref<9x4x1xf32, #tpu.memory_space<vmem>>, vector<1x4x1xf32>
    %28 = vector.shape_cast %27 : vector<1x4x1xf32> to vector<4x1xf32>
    %29 = vector.broadcast %28 : vector<4x1xf32> to vector<4x256xf32>
    %30 = vector.broadcast %26 : vector<1x256xf32> to vector<4x256xf32>
    %31 = arith.mulf %29, %30 : vector<4x256xf32>
    %32 = arith.addf %23, %31 : vector<4x256xf32>
    %c0_22 = arith.constant 0 : index
    %c127 = arith.constant 127 : index
    %33 = vector.load %arg12[%c0_22, %c127] : memref<4x401xf32, #tpu.memory_space<vmem>>, vector<1x256xf32>
    %c0_23 = arith.constant 0 : index
    %c0_24 = arith.constant 0 : index
    %34 = vector.load %arg10[%c0_23, %c0_24] : memref<3x256xf32, #tpu.memory_space<vmem>>, vector<1x256xf32>
    %35 = arith.mulf %33, %34 : vector<1x256xf32>
    %c3 = arith.constant 3 : index
    %c0_25 = arith.constant 0 : index
    %c0_26 = arith.constant 0 : index
    %36 = vector.load %arg2[%c3, %c0_25, %c0_26] : memref<9x4x1xf32, #tpu.memory_space<vmem>>, vector<1x4x1xf32>
    %37 = vector.shape_cast %36 : vector<1x4x1xf32> to vector<4x1xf32>
    %38 = vector.broadcast %37 : vector<4x1xf32> to vector<4x256xf32>
    %39 = vector.broadcast %35 : vector<1x256xf32> to vector<4x256xf32>
    %40 = arith.mulf %38, %39 : vector<4x256xf32>
    %41 = arith.addf %32, %40 : vector<4x256xf32>
    %c0_27 = arith.constant 0 : index
    %c128_28 = arith.constant 128 : index
    %42 = vector.load %arg12[%c0_27, %c128_28] : memref<4x401xf32, #tpu.memory_space<vmem>>, vector<1x256xf32>
    %c4 = arith.constant 4 : index
    %c0_29 = arith.constant 0 : index
    %c0_30 = arith.constant 0 : index
    %43 = vector.load %arg2[%c4, %c0_29, %c0_30] : memref<9x4x1xf32, #tpu.memory_space<vmem>>, vector<1x4x1xf32>
    %44 = vector.shape_cast %43 : vector<1x4x1xf32> to vector<4x1xf32>
    %45 = vector.broadcast %44 : vector<4x1xf32> to vector<4x256xf32>
    %46 = vector.broadcast %42 : vector<1x256xf32> to vector<4x256xf32>
    %47 = arith.mulf %45, %46 : vector<4x256xf32>
    %48 = arith.addf %41, %47 : vector<4x256xf32>
    %c0_31 = arith.constant 0 : index
    %c129 = arith.constant 129 : index
    %49 = vector.load %arg12[%c0_31, %c129] : memref<4x401xf32, #tpu.memory_space<vmem>>, vector<1x256xf32>
    %c2_32 = arith.constant 2 : index
    %c0_33 = arith.constant 0 : index
    %50 = vector.load %arg10[%c2_32, %c0_33] : memref<3x256xf32, #tpu.memory_space<vmem>>, vector<1x256xf32>
    %51 = arith.mulf %49, %50 : vector<1x256xf32>
    %c5 = arith.constant 5 : index
    %c0_34 = arith.constant 0 : index
    %c0_35 = arith.constant 0 : index
    %52 = vector.load %arg2[%c5, %c0_34, %c0_35] : memref<9x4x1xf32, #tpu.memory_space<vmem>>, vector<1x4x1xf32>
    %53 = vector.shape_cast %52 : vector<1x4x1xf32> to vector<4x1xf32>
    %54 = vector.broadcast %53 : vector<4x1xf32> to vector<4x256xf32>
    %55 = vector.broadcast %51 : vector<1x256xf32> to vector<4x256xf32>
    %56 = arith.mulf %54, %55 : vector<4x256xf32>
    %57 = arith.addf %48, %56 : vector<4x256xf32>
    %c0_36 = arith.constant 0 : index
    %c143 = arith.constant 143 : index
    %58 = vector.load %arg12[%c0_36, %c143] : memref<4x401xf32, #tpu.memory_space<vmem>>, vector<1x256xf32>
    %c0_37 = arith.constant 0 : index
    %c0_38 = arith.constant 0 : index
    %59 = vector.load %arg10[%c0_37, %c0_38] : memref<3x256xf32, #tpu.memory_space<vmem>>, vector<1x256xf32>
    %60 = arith.mulf %58, %59 : vector<1x256xf32>
    %c6 = arith.constant 6 : index
    %c0_39 = arith.constant 0 : index
    %c0_40 = arith.constant 0 : index
    %61 = vector.load %arg2[%c6, %c0_39, %c0_40] : memref<9x4x1xf32, #tpu.memory_space<vmem>>, vector<1x4x1xf32>
    %62 = vector.shape_cast %61 : vector<1x4x1xf32> to vector<4x1xf32>
    %63 = vector.broadcast %62 : vector<4x1xf32> to vector<4x256xf32>
    %64 = vector.broadcast %60 : vector<1x256xf32> to vector<4x256xf32>
    %65 = arith.mulf %63, %64 : vector<4x256xf32>
    %66 = arith.addf %57, %65 : vector<4x256xf32>
    %c0_41 = arith.constant 0 : index
    %c144 = arith.constant 144 : index
    %67 = vector.load %arg12[%c0_41, %c144] : memref<4x401xf32, #tpu.memory_space<vmem>>, vector<1x256xf32>
    %c7 = arith.constant 7 : index
    %c0_42 = arith.constant 0 : index
    %c0_43 = arith.constant 0 : index
    %68 = vector.load %arg2[%c7, %c0_42, %c0_43] : memref<9x4x1xf32, #tpu.memory_space<vmem>>, vector<1x4x1xf32>
    %69 = vector.shape_cast %68 : vector<1x4x1xf32> to vector<4x1xf32>
    %70 = vector.broadcast %69 : vector<4x1xf32> to vector<4x256xf32>
    %71 = vector.broadcast %67 : vector<1x256xf32> to vector<4x256xf32>
    %72 = arith.mulf %70, %71 : vector<4x256xf32>
    %73 = arith.addf %66, %72 : vector<4x256xf32>
    %c0_44 = arith.constant 0 : index
    %c145 = arith.constant 145 : index
    %74 = vector.load %arg12[%c0_44, %c145] : memref<4x401xf32, #tpu.memory_space<vmem>>, vector<1x256xf32>
    %c2_45 = arith.constant 2 : index
    %c0_46 = arith.constant 0 : index
    %75 = vector.load %arg10[%c2_45, %c0_46] : memref<3x256xf32, #tpu.memory_space<vmem>>, vector<1x256xf32>
    %76 = arith.mulf %74, %75 : vector<1x256xf32>
    %c8 = arith.constant 8 : index
    %c0_47 = arith.constant 0 : index
    %c0_48 = arith.constant 0 : index
    %77 = vector.load %arg2[%c8, %c0_47, %c0_48] : memref<9x4x1xf32, #tpu.memory_space<vmem>>, vector<1x4x1xf32>
    %78 = vector.shape_cast %77 : vector<1x4x1xf32> to vector<4x1xf32>
    %79 = vector.broadcast %78 : vector<4x1xf32> to vector<4x256xf32>
    %80 = vector.broadcast %76 : vector<1x256xf32> to vector<4x256xf32>
    %81 = arith.mulf %79, %80 : vector<4x256xf32>
    %82 = arith.addf %73, %81 : vector<4x256xf32>
    %c0_49 = arith.constant 0 : index
    %c0_50 = arith.constant 0 : index
    %83 = vector.load %arg3[%c0_49, %c0_50] : memref<4x1xf32, #tpu.memory_space<vmem>>, vector<4x1xf32>
    %84 = vector.broadcast %83 : vector<4x1xf32> to vector<4x256xf32>
    %85 = arith.addf %82, %84 : vector<4x256xf32>
    %86 = math.tanh %85 : vector<4x256xf32>
    %c0_51 = arith.constant 0 : index
    %c128_52 = arith.constant 128 : index
    %87 = vector.load %arg12[%c0_51, %c128_52] : memref<4x401xf32, #tpu.memory_space<vmem>>, vector<4x256xf32>
    tpu.vector_store %arg12[%c0_51, %c128_52], %86 {strides = array<i32>} : memref<4x401xf32, #tpu.memory_space<vmem>>, vector<4x256xf32>,
    %cst_53 = arith.constant 0.000000e+00 : f32
    %88 = vector.broadcast %cst_53 : f32 to vector<4x256xf32>
    %c0_54 = arith.constant 0 : index
    %c111_55 = arith.constant 111 : index
    %89 = vector.load %arg12[%c0_54, %c111_55] : memref<4x401xf32, #tpu.memory_space<vmem>>, vector<4x256xf32>
    %c0_56 = arith.constant 0 : index
    %c0_57 = arith.constant 0 : index
    %90 = vector.load %arg10[%c0_56, %c0_57] : memref<3x256xf32, #tpu.memory_space<vmem>>, vector<1x256xf32>
    %91 = vector.broadcast %90 : vector<1x256xf32> to vector<4x256xf32>
    %92 = arith.mulf %89, %91 : vector<4x256xf32>
    %c0_58 = arith.constant 0 : index
    %c0_59 = arith.constant 0 : index
    %c0_60 = arith.constant 0 : index
    %93 = vector.load %arg4[%c0_58, %c0_59, %c0_60] : memref<9x4x4xbf16, #tpu.memory_space<vmem>>, vector<1x4x4xbf16>
    %94 = vector.shape_cast %93 : vector<1x4x4xbf16> to vector<4x4xbf16>
    %95 = arith.truncf %92 : vector<4x256xf32> to vector<4x256xbf16>
    %cst_61 = arith.constant dense<0.000000e+00> : vector<4x256xf32>
    %96 = tpu.matmul %94, %95, %cst_61 {dimension_numbers = #tpu.dot_dimension_numbers<[1], [0], [0], [1], [0, 0, 1, 1], [], []>} : vector<4x4xbf16>, vector<4x256xbf16>, vector<4x256xf32> -> vector<4x256xf32>
    %97 = arith.addf %88, %96 : vector<4x256xf32>
    %c0_62 = arith.constant 0 : index
    %c112_63 = arith.constant 112 : index
    %98 = vector.load %arg12[%c0_62, %c112_63] : memref<4x401xf32, #tpu.memory_space<vmem>>, vector<4x256xf32>
    %c1_64 = arith.constant 1 : index
    %c0_65 = arith.constant 0 : index
    %c0_66 = arith.constant 0 : index
    %99 = vector.load %arg4[%c1_64, %c0_65, %c0_66] : memref<9x4x4xbf16, #tpu.memory_space<vmem>>, vector<1x4x4xbf16>
    %100 = vector.shape_cast %99 : vector<1x4x4xbf16> to vector<4x4xbf16>
    %101 = arith.truncf %98 : vector<4x256xf32> to vector<4x256xbf16>
    %cst_67 = arith.constant dense<0.000000e+00> : vector<4x256xf32>
    %102 = tpu.matmul %100, %101, %cst_67 {dimension_numbers = #tpu.dot_dimension_numbers<[1], [0], [0], [1], [0, 0, 1, 1], [], []>} : vector<4x4xbf16>, vector<4x256xbf16>, vector<4x256xf32> -> vector<4x256xf32>
    %103 = arith.addf %97, %102 : vector<4x256xf32>
    %c0_68 = arith.constant 0 : index
    %c113_69 = arith.constant 113 : index
    %104 = vector.load %arg12[%c0_68, %c113_69] : memref<4x401xf32, #tpu.memory_space<vmem>>, vector<4x256xf32>
    %c2_70 = arith.constant 2 : index
    %c0_71 = arith.constant 0 : index
    %105 = vector.load %arg10[%c2_70, %c0_71] : memref<3x256xf32, #tpu.memory_space<vmem>>, vector<1x256xf32>
    %106 = vector.broadcast %105 : vector<1x256xf32> to vector<4x256xf32>
    %107 = arith.mulf %104, %106 : vector<4x256xf32>
    %c2_72 = arith.constant 2 : index
    %c0_73 = arith.constant 0 : index
    %c0_74 = arith.constant 0 : index
    %108 = vector.load %arg4[%c2_72, %c0_73, %c0_74] : memref<9x4x4xbf16, #tpu.memory_space<vmem>>, vector<1x4x4xbf16>
    %109 = vector.shape_cast %108 : vector<1x4x4xbf16> to vector<4x4xbf16>
    %110 = arith.truncf %107 : vector<4x256xf32> to vector<4x256xbf16>
    %cst_75 = arith.constant dense<0.000000e+00> : vector<4x256xf32>
    %111 = tpu.matmul %109, %110, %cst_75 {dimension_numbers = #tpu.dot_dimension_numbers<[1], [0], [0], [1], [0, 0, 1, 1], [], []>} : vector<4x4xbf16>, vector<4x256xbf16>, vector<4x256xf32> -> vector<4x256xf32>
    %112 = arith.addf %103, %111 : vector<4x256xf32>
    %c0_76 = arith.constant 0 : index
    %c127_77 = arith.constant 127 : index
    %113 = vector.load %arg12[%c0_76, %c127_77] : memref<4x401xf32, #tpu.memory_space<vmem>>, vector<4x256xf32>
    %c0_78 = arith.constant 0 : index
    %c0_79 = arith.constant 0 : index
    %114 = vector.load %arg10[%c0_78, %c0_79] : memref<3x256xf32, #tpu.memory_space<vmem>>, vector<1x256xf32>
    %115 = vector.broadcast %114 : vector<1x256xf32> to vector<4x256xf32>
    %116 = arith.mulf %113, %115 : vector<4x256xf32>
    %c3_80 = arith.constant 3 : index
    %c0_81 = arith.constant 0 : index
    %c0_82 = arith.constant 0 : index
    %117 = vector.load %arg4[%c3_80, %c0_81, %c0_82] : memref<9x4x4xbf16, #tpu.memory_space<vmem>>, vector<1x4x4xbf16>
    %118 = vector.shape_cast %117 : vector<1x4x4xbf16> to vector<4x4xbf16>
    %119 = arith.truncf %116 : vector<4x256xf32> to vector<4x256xbf16>
    %cst_83 = arith.constant dense<0.000000e+00> : vector<4x256xf32>
    %120 = tpu.matmul %118, %119, %cst_83 {dimension_numbers = #tpu.dot_dimension_numbers<[1], [0], [0], [1], [0, 0, 1, 1], [], []>} : vector<4x4xbf16>, vector<4x256xbf16>, vector<4x256xf32> -> vector<4x256xf32>
    %121 = arith.addf %112, %120 : vector<4x256xf32>
    %c0_84 = arith.constant 0 : index
    %c128_85 = arith.constant 128 : index
    %122 = vector.load %arg12[%c0_84, %c128_85] : memref<4x401xf32, #tpu.memory_space<vmem>>, vector<4x256xf32>
    %c4_86 = arith.constant 4 : index
    %c0_87 = arith.constant 0 : index
    %c0_88 = arith.constant 0 : index
    %123 = vector.load %arg4[%c4_86, %c0_87, %c0_88] : memref<9x4x4xbf16, #tpu.memory_space<vmem>>, vector<1x4x4xbf16>
    %124 = vector.shape_cast %123 : vector<1x4x4xbf16> to vector<4x4xbf16>
    %125 = arith.truncf %122 : vector<4x256xf32> to vector<4x256xbf16>
    %cst_89 = arith.constant dense<0.000000e+00> : vector<4x256xf32>
    %126 = tpu.matmul %124, %125, %cst_89 {dimension_numbers = #tpu.dot_dimension_numbers<[1], [0], [0], [1], [0, 0, 1, 1], [], []>} : vector<4x4xbf16>, vector<4x256xbf16>, vector<4x256xf32> -> vector<4x256xf32>
    %127 = arith.addf %121, %126 : vector<4x256xf32>
    %c0_90 = arith.constant 0 : index
    %c129_91 = arith.constant 129 : index
    %128 = vector.load %arg12[%c0_90, %c129_91] : memref<4x401xf32, #tpu.memory_space<vmem>>, vector<4x256xf32>
    %c2_92 = arith.constant 2 : index
    %c0_93 = arith.constant 0 : index
    %129 = vector.load %arg10[%c2_92, %c0_93] : memref<3x256xf32, #tpu.memory_space<vmem>>, vector<1x256xf32>
    %130 = vector.broadcast %129 : vector<1x256xf32> to vector<4x256xf32>
    %131 = arith.mulf %128, %130 : vector<4x256xf32>
    %c5_94 = arith.constant 5 : index
    %c0_95 = arith.constant 0 : index
    %c0_96 = arith.constant 0 : index
    %132 = vector.load %arg4[%c5_94, %c0_95, %c0_96] : memref<9x4x4xbf16, #tpu.memory_space<vmem>>, vector<1x4x4xbf16>
    %133 = vector.shape_cast %132 : vector<1x4x4xbf16> to vector<4x4xbf16>
    %134 = arith.truncf %131 : vector<4x256xf32> to vector<4x256xbf16>
    %cst_97 = arith.constant dense<0.000000e+00> : vector<4x256xf32>
    %135 = tpu.matmul %133, %134, %cst_97 {dimension_numbers = #tpu.dot_dimension_numbers<[1], [0], [0], [1], [0, 0, 1, 1], [], []>} : vector<4x4xbf16>, vector<4x256xbf16>, vector<4x256xf32> -> vector<4x256xf32>
    %136 = arith.addf %127, %135 : vector<4x256xf32>
    %c0_98 = arith.constant 0 : index
    %c143_99 = arith.constant 143 : index
    %137 = vector.load %arg12[%c0_98, %c143_99] : memref<4x401xf32, #tpu.memory_space<vmem>>, vector<4x256xf32>
    %c0_100 = arith.constant 0 : index
    %c0_101 = arith.constant 0 : index
    %138 = vector.load %arg10[%c0_100, %c0_101] : memref<3x256xf32, #tpu.memory_space<vmem>>, vector<1x256xf32>
    %139 = vector.broadcast %138 : vector<1x256xf32> to vector<4x256xf32>
    %140 = arith.mulf %137, %139 : vector<4x256xf32>
    %c6_102 = arith.constant 6 : index
    %c0_103 = arith.constant 0 : index
    %c0_104 = arith.constant 0 : index
    %141 = vector.load %arg4[%c6_102, %c0_103, %c0_104] : memref<9x4x4xbf16, #tpu.memory_space<vmem>>, vector<1x4x4xbf16>
    %142 = vector.shape_cast %141 : vector<1x4x4xbf16> to vector<4x4xbf16>
    %143 = arith.truncf %140 : vector<4x256xf32> to vector<4x256xbf16>
    %cst_105 = arith.constant dense<0.000000e+00> : vector<4x256xf32>
    %144 = tpu.matmul %142, %143, %cst_105 {dimension_numbers = #tpu.dot_dimension_numbers<[1], [0], [0], [1], [0, 0, 1, 1], [], []>} : vector<4x4xbf16>, vector<4x256xbf16>, vector<4x256xf32> -> vector<4x256xf32>
    %145 = arith.addf %136, %144 : vector<4x256xf32>
    %c0_106 = arith.constant 0 : index
    %c144_107 = arith.constant 144 : index
    %146 = vector.load %arg12[%c0_106, %c144_107] : memref<4x401xf32, #tpu.memory_space<vmem>>, vector<4x256xf32>
    %c7_108 = arith.constant 7 : index
    %c0_109 = arith.constant 0 : index
    %c0_110 = arith.constant 0 : index
    %147 = vector.load %arg4[%c7_108, %c0_109, %c0_110] : memref<9x4x4xbf16, #tpu.memory_space<vmem>>, vector<1x4x4xbf16>
    %148 = vector.shape_cast %147 : vector<1x4x4xbf16> to vector<4x4xbf16>
    %149 = arith.truncf %146 : vector<4x256xf32> to vector<4x256xbf16>
    %cst_111 = arith.constant dense<0.000000e+00> : vector<4x256xf32>
    %150 = tpu.matmul %148, %149, %cst_111 {dimension_numbers = #tpu.dot_dimension_numbers<[1], [0], [0], [1], [0, 0, 1, 1], [], []>} : vector<4x4xbf16>, vector<4x256xbf16>, vector<4x256xf32> -> vector<4x256xf32>
    %151 = arith.addf %145, %150 : vector<4x256xf32>
    %c0_112 = arith.constant 0 : index
    %c145_113 = arith.constant 145 : index
    %152 = vector.load %arg12[%c0_112, %c145_113] : memref<4x401xf32, #tpu.memory_space<vmem>>, vector<4x256xf32>
    %c2_114 = arith.constant 2 : index
    %c0_115 = arith.constant 0 : index
    %153 = vector.load %arg10[%c2_114, %c0_115] : memref<3x256xf32, #tpu.memory_space<vmem>>, vector<1x256xf32>
    %154 = vector.broadcast %153 : vector<1x256xf32> to vector<4x256xf32>
    %155 = arith.mulf %152, %154 : vector<4x256xf32>
    %c8_116 = arith.constant 8 : index
    %c0_117 = arith.constant 0 : index
    %c0_118 = arith.constant 0 : index
    %156 = vector.load %arg4[%c8_116, %c0_117, %c0_118] : memref<9x4x4xbf16, #tpu.memory_space<vmem>>, vector<1x4x4xbf16>
    %157 = vector.shape_cast %156 : vector<1x4x4xbf16> to vector<4x4xbf16>
    %158 = arith.truncf %155 : vector<4x256xf32> to vector<4x256xbf16>
    %cst_119 = arith.constant dense<0.000000e+00> : vector<4x256xf32>
    %159 = tpu.matmul %157, %158, %cst_119 {dimension_numbers = #tpu.dot_dimension_numbers<[1], [0], [0], [1], [0, 0, 1, 1], [], []>} : vector<4x4xbf16>, vector<4x256xbf16>, vector<4x256xf32> -> vector<4x256xf32>
    %160 = arith.addf %151, %159 : vector<4x256xf32>
    %c0_120 = arith.constant 0 : index
    %c0_121 = arith.constant 0 : index
    %161 = vector.load %arg5[%c0_120, %c0_121] : memref<4x1xf32, #tpu.memory_space<vmem>>, vector<4x1xf32>
    %162 = vector.broadcast %161 : vector<4x1xf32> to vector<4x256xf32>
    %163 = arith.addf %160, %162 : vector<4x256xf32>
    %164 = math.tanh %163 : vector<4x256xf32>
    %c0_122 = arith.constant 0 : index
    %c128_123 = arith.constant 128 : index
    %165 = vector.load %arg12[%c0_122, %c128_123] : memref<4x401xf32, #tpu.memory_space<vmem>>, vector<4x256xf32>
    tpu.vector_store %arg12[%c0_122, %c128_123], %164 {strides = array<i32>} : memref<4x401xf32, #tpu.memory_space<vmem>>, vector<4x256xf32>,
    %cst_124 = arith.constant 0.000000e+00 : f32
    %166 = vector.broadcast %cst_124 : f32 to vector<4x256xf32>
    %c0_125 = arith.constant 0 : index
    %c111_126 = arith.constant 111 : index
    %167 = vector.load %arg12[%c0_125, %c111_126] : memref<4x401xf32, #tpu.memory_space<vmem>>, vector<4x256xf32>
    %c0_127 = arith.constant 0 : index
    %c0_128 = arith.constant 0 : index
    %168 = vector.load %arg10[%c0_127, %c0_128] : memref<3x256xf32, #tpu.memory_space<vmem>>, vector<1x256xf32>
    %169 = vector.broadcast %168 : vector<1x256xf32> to vector<4x256xf32>
    %170 = arith.mulf %167, %169 : vector<4x256xf32>
    %c0_129 = arith.constant 0 : index
    %c0_130 = arith.constant 0 : index
    %c0_131 = arith.constant 0 : index
    %171 = vector.load %arg6[%c0_129, %c0_130, %c0_131] : memref<9x4x4xbf16, #tpu.memory_space<vmem>>, vector<1x4x4xbf16>
    %172 = vector.shape_cast %171 : vector<1x4x4xbf16> to vector<4x4xbf16>
    %173 = arith.truncf %170 : vector<4x256xf32> to vector<4x256xbf16>
    %cst_132 = arith.constant dense<0.000000e+00> : vector<4x256xf32>
    %174 = tpu.matmul %172, %173, %cst_132 {dimension_numbers = #tpu.dot_dimension_numbers<[1], [0], [0], [1], [0, 0, 1, 1], [], []>} : vector<4x4xbf16>, vector<4x256xbf16>, vector<4x256xf32> -> vector<4x256xf32>
    %175 = arith.addf %166, %174 : vector<4x256xf32>
    %c0_133 = arith.constant 0 : index
    %c112_134 = arith.constant 112 : index
    %176 = vector.load %arg12[%c0_133, %c112_134] : memref<4x401xf32, #tpu.memory_space<vmem>>, vector<4x256xf32>
    %c1_135 = arith.constant 1 : index
    %c0_136 = arith.constant 0 : index
    %c0_137 = arith.constant 0 : index
    %177 = vector.load %arg6[%c1_135, %c0_136, %c0_137] : memref<9x4x4xbf16, #tpu.memory_space<vmem>>, vector<1x4x4xbf16>
    %178 = vector.shape_cast %177 : vector<1x4x4xbf16> to vector<4x4xbf16>
    %179 = arith.truncf %176 : vector<4x256xf32> to vector<4x256xbf16>
    %cst_138 = arith.constant dense<0.000000e+00> : vector<4x256xf32>
    %180 = tpu.matmul %178, %179, %cst_138 {dimension_numbers = #tpu.dot_dimension_numbers<[1], [0], [0], [1], [0, 0, 1, 1], [], []>} : vector<4x4xbf16>, vector<4x256xbf16>, vector<4x256xf32> -> vector<4x256xf32>
    %181 = arith.addf %175, %180 : vector<4x256xf32>
    %c0_139 = arith.constant 0 : index
    %c113_140 = arith.constant 113 : index
    %182 = vector.load %arg12[%c0_139, %c113_140] : memref<4x401xf32, #tpu.memory_space<vmem>>, vector<4x256xf32>
    %c2_141 = arith.constant 2 : index
    %c0_142 = arith.constant 0 : index
    %183 = vector.load %arg10[%c2_141, %c0_142] : memref<3x256xf32, #tpu.memory_space<vmem>>, vector<1x256xf32>
    %184 = vector.broadcast %183 : vector<1x256xf32> to vector<4x256xf32>
    %185 = arith.mulf %182, %184 : vector<4x256xf32>
    %c2_143 = arith.constant 2 : index
    %c0_144 = arith.constant 0 : index
    %c0_145 = arith.constant 0 : index
    %186 = vector.load %arg6[%c2_143, %c0_144, %c0_145] : memref<9x4x4xbf16, #tpu.memory_space<vmem>>, vector<1x4x4xbf16>
    %187 = vector.shape_cast %186 : vector<1x4x4xbf16> to vector<4x4xbf16>
    %188 = arith.truncf %185 : vector<4x256xf32> to vector<4x256xbf16>
    %cst_146 = arith.constant dense<0.000000e+00> : vector<4x256xf32>
    %189 = tpu.matmul %187, %188, %cst_146 {dimension_numbers = #tpu.dot_dimension_numbers<[1], [0], [0], [1], [0, 0, 1, 1], [], []>} : vector<4x4xbf16>, vector<4x256xbf16>, vector<4x256xf32> -> vector<4x256xf32>
    %190 = arith.addf %181, %189 : vector<4x256xf32>
    %c0_147 = arith.constant 0 : index
    %c127_148 = arith.constant 127 : index
    %191 = vector.load %arg12[%c0_147, %c127_148] : memref<4x401xf32, #tpu.memory_space<vmem>>, vector<4x256xf32>
    %c0_149 = arith.constant 0 : index
    %c0_150 = arith.constant 0 : index
    %192 = vector.load %arg10[%c0_149, %c0_150] : memref<3x256xf32, #tpu.memory_space<vmem>>, vector<1x256xf32>
    %193 = vector.broadcast %192 : vector<1x256xf32> to vector<4x256xf32>
    %194 = arith.mulf %191, %193 : vector<4x256xf32>
    %c3_151 = arith.constant 3 : index
    %c0_152 = arith.constant 0 : index
    %c0_153 = arith.constant 0 : index
    %195 = vector.load %arg6[%c3_151, %c0_152, %c0_153] : memref<9x4x4xbf16, #tpu.memory_space<vmem>>, vector<1x4x4xbf16>
    %196 = vector.shape_cast %195 : vector<1x4x4xbf16> to vector<4x4xbf16>
    %197 = arith.truncf %194 : vector<4x256xf32> to vector<4x256xbf16>
    %cst_154 = arith.constant dense<0.000000e+00> : vector<4x256xf32>
    %198 = tpu.matmul %196, %197, %cst_154 {dimension_numbers = #tpu.dot_dimension_numbers<[1], [0], [0], [1], [0, 0, 1, 1], [], []>} : vector<4x4xbf16>, vector<4x256xbf16>, vector<4x256xf32> -> vector<4x256xf32>
    %199 = arith.addf %190, %198 : vector<4x256xf32>
    %c0_155 = arith.constant 0 : index
    %c128_156 = arith.constant 128 : index
    %200 = vector.load %arg12[%c0_155, %c128_156] : memref<4x401xf32, #tpu.memory_space<vmem>>, vector<4x256xf32>
    %c4_157 = arith.constant 4 : index
    %c0_158 = arith.constant 0 : index
    %c0_159 = arith.constant 0 : index
    %201 = vector.load %arg6[%c4_157, %c0_158, %c0_159] : memref<9x4x4xbf16, #tpu.memory_space<vmem>>, vector<1x4x4xbf16>
    %202 = vector.shape_cast %201 : vector<1x4x4xbf16> to vector<4x4xbf16>
    %203 = arith.truncf %200 : vector<4x256xf32> to vector<4x256xbf16>
    %cst_160 = arith.constant dense<0.000000e+00> : vector<4x256xf32>
    %204 = tpu.matmul %202, %203, %cst_160 {dimension_numbers = #tpu.dot_dimension_numbers<[1], [0], [0], [1], [0, 0, 1, 1], [], []>} : vector<4x4xbf16>, vector<4x256xbf16>, vector<4x256xf32> -> vector<4x256xf32>
    %205 = arith.addf %199, %204 : vector<4x256xf32>
    %c0_161 = arith.constant 0 : index
    %c129_162 = arith.constant 129 : index
    %206 = vector.load %arg12[%c0_161, %c129_162] : memref<4x401xf32, #tpu.memory_space<vmem>>, vector<4x256xf32>
    %c2_163 = arith.constant 2 : index
    %c0_164 = arith.constant 0 : index
    %207 = vector.load %arg10[%c2_163, %c0_164] : memref<3x256xf32, #tpu.memory_space<vmem>>, vector<1x256xf32>
    %208 = vector.broadcast %207 : vector<1x256xf32> to vector<4x256xf32>
    %209 = arith.mulf %206, %208 : vector<4x256xf32>
    %c5_165 = arith.constant 5 : index
    %c0_166 = arith.constant 0 : index
    %c0_167 = arith.constant 0 : index
    %210 = vector.load %arg6[%c5_165, %c0_166, %c0_167] : memref<9x4x4xbf16, #tpu.memory_space<vmem>>, vector<1x4x4xbf16>
    %211 = vector.shape_cast %210 : vector<1x4x4xbf16> to vector<4x4xbf16>
    %212 = arith.truncf %209 : vector<4x256xf32> to vector<4x256xbf16>
    %cst_168 = arith.constant dense<0.000000e+00> : vector<4x256xf32>
    %213 = tpu.matmul %211, %212, %cst_168 {dimension_numbers = #tpu.dot_dimension_numbers<[1], [0], [0], [1], [0, 0, 1, 1], [], []>} : vector<4x4xbf16>, vector<4x256xbf16>, vector<4x256xf32> -> vector<4x256xf32>
    %214 = arith.addf %205, %213 : vector<4x256xf32>
    %c0_169 = arith.constant 0 : index
    %c143_170 = arith.constant 143 : index
    %215 = vector.load %arg12[%c0_169, %c143_170] : memref<4x401xf32, #tpu.memory_space<vmem>>, vector<4x256xf32>
    %c0_171 = arith.constant 0 : index
    %c0_172 = arith.constant 0 : index
    %216 = vector.load %arg10[%c0_171, %c0_172] : memref<3x256xf32, #tpu.memory_space<vmem>>, vector<1x256xf32>
    %217 = vector.broadcast %216 : vector<1x256xf32> to vector<4x256xf32>
    %218 = arith.mulf %215, %217 : vector<4x256xf32>
    %c6_173 = arith.constant 6 : index
    %c0_174 = arith.constant 0 : index
    %c0_175 = arith.constant 0 : index
    %219 = vector.load %arg6[%c6_173, %c0_174, %c0_175] : memref<9x4x4xbf16, #tpu.memory_space<vmem>>, vector<1x4x4xbf16>
    %220 = vector.shape_cast %219 : vector<1x4x4xbf16> to vector<4x4xbf16>
    %221 = arith.truncf %218 : vector<4x256xf32> to vector<4x256xbf16>
    %cst_176 = arith.constant dense<0.000000e+00> : vector<4x256xf32>
    %222 = tpu.matmul %220, %221, %cst_176 {dimension_numbers = #tpu.dot_dimension_numbers<[1], [0], [0], [1], [0, 0, 1, 1], [], []>} : vector<4x4xbf16>, vector<4x256xbf16>, vector<4x256xf32> -> vector<4x256xf32>
    %223 = arith.addf %214, %222 : vector<4x256xf32>
    %c0_177 = arith.constant 0 : index
    %c144_178 = arith.constant 144 : index
    %224 = vector.load %arg12[%c0_177, %c144_178] : memref<4x401xf32, #tpu.memory_space<vmem>>, vector<4x256xf32>
    %c7_179 = arith.constant 7 : index
    %c0_180 = arith.constant 0 : index
    %c0_181 = arith.constant 0 : index
    %225 = vector.load %arg6[%c7_179, %c0_180, %c0_181] : memref<9x4x4xbf16, #tpu.memory_space<vmem>>, vector<1x4x4xbf16>
    %226 = vector.shape_cast %225 : vector<1x4x4xbf16> to vector<4x4xbf16>
    %227 = arith.truncf %224 : vector<4x256xf32> to vector<4x256xbf16>
    %cst_182 = arith.constant dense<0.000000e+00> : vector<4x256xf32>
    %228 = tpu.matmul %226, %227, %cst_182 {dimension_numbers = #tpu.dot_dimension_numbers<[1], [0], [0], [1], [0, 0, 1, 1], [], []>} : vector<4x4xbf16>, vector<4x256xbf16>, vector<4x256xf32> -> vector<4x256xf32>
    %229 = arith.addf %223, %228 : vector<4x256xf32>
    %c0_183 = arith.constant 0 : index
    %c145_184 = arith.constant 145 : index
    %230 = vector.load %arg12[%c0_183, %c145_184] : memref<4x401xf32, #tpu.memory_space<vmem>>, vector<4x256xf32>
    %c2_185 = arith.constant 2 : index
    %c0_186 = arith.constant 0 : index
    %231 = vector.load %arg10[%c2_185, %c0_186] : memref<3x256xf32, #tpu.memory_space<vmem>>, vector<1x256xf32>
    %232 = vector.broadcast %231 : vector<1x256xf32> to vector<4x256xf32>
    %233 = arith.mulf %230, %232 : vector<4x256xf32>
    %c8_187 = arith.constant 8 : index
    %c0_188 = arith.constant 0 : index
    %c0_189 = arith.constant 0 : index
    %234 = vector.load %arg6[%c8_187, %c0_188, %c0_189] : memref<9x4x4xbf16, #tpu.memory_space<vmem>>, vector<1x4x4xbf16>
    %235 = vector.shape_cast %234 : vector<1x4x4xbf16> to vector<4x4xbf16>
    %236 = arith.truncf %233 : vector<4x256xf32> to vector<4x256xbf16>
    %cst_190 = arith.constant dense<0.000000e+00> : vector<4x256xf32>
    %237 = tpu.matmul %235, %236, %cst_190 {dimension_numbers = #tpu.dot_dimension_numbers<[1], [0], [0], [1], [0, 0, 1, 1], [], []>} : vector<4x4xbf16>, vector<4x256xbf16>, vector<4x256xf32> -> vector<4x256xf32>
    %238 = arith.addf %229, %237 : vector<4x256xf32>
    %c0_191 = arith.constant 0 : index
    %c0_192 = arith.constant 0 : index
    %239 = vector.load %arg7[%c0_191, %c0_192] : memref<4x1xf32, #tpu.memory_space<vmem>>, vector<4x1xf32>
    %240 = vector.broadcast %239 : vector<4x1xf32> to vector<4x256xf32>
    %241 = arith.addf %238, %240 : vector<4x256xf32>
    %242 = math.tanh %241 : vector<4x256xf32>
    %c0_193 = arith.constant 0 : index
    %c128_194 = arith.constant 128 : index
    %243 = vector.load %arg12[%c0_193, %c128_194] : memref<4x401xf32, #tpu.memory_space<vmem>>, vector<4x256xf32>
    tpu.vector_store %arg12[%c0_193, %c128_194], %242 {strides = array<i32>} : memref<4x401xf32, #tpu.memory_space<vmem>>, vector<4x256xf32>,
    %cst_195 = arith.constant 0.000000e+00 : f32
    %244 = vector.broadcast %cst_195 : f32 to vector<1x256xf32>
    %c0_196 = arith.constant 0 : index
    %c111_197 = arith.constant 111 : index
    %245 = vector.load %arg12[%c0_196, %c111_197] : memref<4x401xf32, #tpu.memory_space<vmem>>, vector<4x256xf32>
    %c0_198 = arith.constant 0 : index
    %c0_199 = arith.constant 0 : index
    %246 = vector.load %arg10[%c0_198, %c0_199] : memref<3x256xf32, #tpu.memory_space<vmem>>, vector<1x256xf32>
    %247 = vector.broadcast %246 : vector<1x256xf32> to vector<4x256xf32>
    %248 = arith.mulf %245, %247 : vector<4x256xf32>
    %c0_200 = arith.constant 0 : index
    %c0_201 = arith.constant 0 : index
    %c0_202 = arith.constant 0 : index
    %249 = vector.load %arg8[%c0_200, %c0_201, %c0_202] : memref<9x1x4xf32, #tpu.memory_space<vmem>>, vector<1x1x4xf32>
    %250 = vector.shape_cast %249 : vector<1x1x4xf32> to vector<1x4xf32>
    %cst_203 = arith.constant dense<0.000000e+00> : vector<1x256xf32>
    %251 = tpu.matmul %250, %248, %cst_203 {dimension_numbers = #tpu.dot_dimension_numbers<[1], [0], [0], [1], [0, 0, 1, 1], [], []>} : vector<1x4xf32>, vector<4x256xf32>, vector<1x256xf32> -> vector<1x256xf32>
    %252 = arith.addf %244, %251 : vector<1x256xf32>
    %c0_204 = arith.constant 0 : index
    %c112_205 = arith.constant 112 : index
    %253 = vector.load %arg12[%c0_204, %c112_205] : memref<4x401xf32, #tpu.memory_space<vmem>>, vector<4x256xf32>
    %c1_206 = arith.constant 1 : index
    %c0_207 = arith.constant 0 : index
    %c0_208 = arith.constant 0 : index
    %254 = vector.load %arg8[%c1_206, %c0_207, %c0_208] : memref<9x1x4xf32, #tpu.memory_space<vmem>>, vector<1x1x4xf32>
    %255 = vector.shape_cast %254 : vector<1x1x4xf32> to vector<1x4xf32>
    %cst_209 = arith.constant dense<0.000000e+00> : vector<1x256xf32>
    %256 = tpu.matmul %255, %253, %cst_209 {dimension_numbers = #tpu.dot_dimension_numbers<[1], [0], [0], [1], [0, 0, 1, 1], [], []>} : vector<1x4xf32>, vector<4x256xf32>, vector<1x256xf32> -> vector<1x256xf32>
    %257 = arith.addf %252, %256 : vector<1x256xf32>
    %c0_210 = arith.constant 0 : index
    %c113_211 = arith.constant 113 : index
    %258 = vector.load %arg12[%c0_210, %c113_211] : memref<4x401xf32, #tpu.memory_space<vmem>>, vector<4x256xf32>
    %c2_212 = arith.constant 2 : index
    %c0_213 = arith.constant 0 : index
    %259 = vector.load %arg10[%c2_212, %c0_213] : memref<3x256xf32, #tpu.memory_space<vmem>>, vector<1x256xf32>
    %260 = vector.broadcast %259 : vector<1x256xf32> to vector<4x256xf32>
    %261 = arith.mulf %258, %260 : vector<4x256xf32>
    %c2_214 = arith.constant 2 : index
    %c0_215 = arith.constant 0 : index
    %c0_216 = arith.constant 0 : index
    %262 = vector.load %arg8[%c2_214, %c0_215, %c0_216] : memref<9x1x4xf32, #tpu.memory_space<vmem>>, vector<1x1x4xf32>
    %263 = vector.shape_cast %262 : vector<1x1x4xf32> to vector<1x4xf32>
    %cst_217 = arith.constant dense<0.000000e+00> : vector<1x256xf32>
    %264 = tpu.matmul %263, %261, %cst_217 {dimension_numbers = #tpu.dot_dimension_numbers<[1], [0], [0], [1], [0, 0, 1, 1], [], []>} : vector<1x4xf32>, vector<4x256xf32>, vector<1x256xf32> -> vector<1x256xf32>
    %265 = arith.addf %257, %264 : vector<1x256xf32>
    %c0_218 = arith.constant 0 : index
    %c127_219 = arith.constant 127 : index
    %266 = vector.load %arg12[%c0_218, %c127_219] : memref<4x401xf32, #tpu.memory_space<vmem>>, vector<4x256xf32>
    %c0_220 = arith.constant 0 : index
    %c0_221 = arith.constant 0 : index
    %267 = vector.load %arg10[%c0_220, %c0_221] : memref<3x256xf32, #tpu.memory_space<vmem>>, vector<1x256xf32>
    %268 = vector.broadcast %267 : vector<1x256xf32> to vector<4x256xf32>
    %269 = arith.mulf %266, %268 : vector<4x256xf32>
    %c3_222 = arith.constant 3 : index
    %c0_223 = arith.constant 0 : index
    %c0_224 = arith.constant 0 : index
    %270 = vector.load %arg8[%c3_222, %c0_223, %c0_224] : memref<9x1x4xf32, #tpu.memory_space<vmem>>, vector<1x1x4xf32>
    %271 = vector.shape_cast %270 : vector<1x1x4xf32> to vector<1x4xf32>
    %cst_225 = arith.constant dense<0.000000e+00> : vector<1x256xf32>
    %272 = tpu.matmul %271, %269, %cst_225 {dimension_numbers = #tpu.dot_dimension_numbers<[1], [0], [0], [1], [0, 0, 1, 1], [], []>} : vector<1x4xf32>, vector<4x256xf32>, vector<1x256xf32> -> vector<1x256xf32>
    %273 = arith.addf %265, %272 : vector<1x256xf32>
    %c0_226 = arith.constant 0 : index
    %c128_227 = arith.constant 128 : index
    %274 = vector.load %arg12[%c0_226, %c128_227] : memref<4x401xf32, #tpu.memory_space<vmem>>, vector<4x256xf32>
    %c4_228 = arith.constant 4 : index
    %c0_229 = arith.constant 0 : index
    %c0_230 = arith.constant 0 : index
    %275 = vector.load %arg8[%c4_228, %c0_229, %c0_230] : memref<9x1x4xf32, #tpu.memory_space<vmem>>, vector<1x1x4xf32>
    %276 = vector.shape_cast %275 : vector<1x1x4xf32> to vector<1x4xf32>
    %cst_231 = arith.constant dense<0.000000e+00> : vector<1x256xf32>
    %277 = tpu.matmul %276, %274, %cst_231 {dimension_numbers = #tpu.dot_dimension_numbers<[1], [0], [0], [1], [0, 0, 1, 1], [], []>} : vector<1x4xf32>, vector<4x256xf32>, vector<1x256xf32> -> vector<1x256xf32>
    %278 = arith.addf %273, %277 : vector<1x256xf32>
    %c0_232 = arith.constant 0 : index
    %c129_233 = arith.constant 129 : index
    %279 = vector.load %arg12[%c0_232, %c129_233] : memref<4x401xf32, #tpu.memory_space<vmem>>, vector<4x256xf32>
    %c2_234 = arith.constant 2 : index
    %c0_235 = arith.constant 0 : index
    %280 = vector.load %arg10[%c2_234, %c0_235] : memref<3x256xf32, #tpu.memory_space<vmem>>, vector<1x256xf32>
    %281 = vector.broadcast %280 : vector<1x256xf32> to vector<4x256xf32>
    %282 = arith.mulf %279, %281 : vector<4x256xf32>
    %c5_236 = arith.constant 5 : index
    %c0_237 = arith.constant 0 : index
    %c0_238 = arith.constant 0 : index
    %283 = vector.load %arg8[%c5_236, %c0_237, %c0_238] : memref<9x1x4xf32, #tpu.memory_space<vmem>>, vector<1x1x4xf32>
    %284 = vector.shape_cast %283 : vector<1x1x4xf32> to vector<1x4xf32>
    %cst_239 = arith.constant dense<0.000000e+00> : vector<1x256xf32>
    %285 = tpu.matmul %284, %282, %cst_239 {dimension_numbers = #tpu.dot_dimension_numbers<[1], [0], [0], [1], [0, 0, 1, 1], [], []>} : vector<1x4xf32>, vector<4x256xf32>, vector<1x256xf32> -> vector<1x256xf32>
    %286 = arith.addf %278, %285 : vector<1x256xf32>
    %c0_240 = arith.constant 0 : index
    %c143_241 = arith.constant 143 : index
    %287 = vector.load %arg12[%c0_240, %c143_241] : memref<4x401xf32, #tpu.memory_space<vmem>>, vector<4x256xf32>
    %c0_242 = arith.constant 0 : index
    %c0_243 = arith.constant 0 : index
    %288 = vector.load %arg10[%c0_242, %c0_243] : memref<3x256xf32, #tpu.memory_space<vmem>>, vector<1x256xf32>
    %289 = vector.broadcast %288 : vector<1x256xf32> to vector<4x256xf32>
    %290 = arith.mulf %287, %289 : vector<4x256xf32>
    %c6_244 = arith.constant 6 : index
    %c0_245 = arith.constant 0 : index
    %c0_246 = arith.constant 0 : index
    %291 = vector.load %arg8[%c6_244, %c0_245, %c0_246] : memref<9x1x4xf32, #tpu.memory_space<vmem>>, vector<1x1x4xf32>
    %292 = vector.shape_cast %291 : vector<1x1x4xf32> to vector<1x4xf32>
    %cst_247 = arith.constant dense<0.000000e+00> : vector<1x256xf32>
    %293 = tpu.matmul %292, %290, %cst_247 {dimension_numbers = #tpu.dot_dimension_numbers<[1], [0], [0], [1], [0, 0, 1, 1], [], []>} : vector<1x4xf32>, vector<4x256xf32>, vector<1x256xf32> -> vector<1x256xf32>
    %294 = arith.addf %286, %293 : vector<1x256xf32>
    %c0_248 = arith.constant 0 : index
    %c144_249 = arith.constant 144 : index
    %295 = vector.load %arg12[%c0_248, %c144_249] : memref<4x401xf32, #tpu.memory_space<vmem>>, vector<4x256xf32>
    %c7_250 = arith.constant 7 : index
    %c0_251 = arith.constant 0 : index
    %c0_252 = arith.constant 0 : index
    %296 = vector.load %arg8[%c7_250, %c0_251, %c0_252] : memref<9x1x4xf32, #tpu.memory_space<vmem>>, vector<1x1x4xf32>
    %297 = vector.shape_cast %296 : vector<1x1x4xf32> to vector<1x4xf32>
    %cst_253 = arith.constant dense<0.000000e+00> : vector<1x256xf32>
    %298 = tpu.matmul %297, %295, %cst_253 {dimension_numbers = #tpu.dot_dimension_numbers<[1], [0], [0], [1], [0, 0, 1, 1], [], []>} : vector<1x4xf32>, vector<4x256xf32>, vector<1x256xf32> -> vector<1x256xf32>
    %299 = arith.addf %294, %298 : vector<1x256xf32>
    %c0_254 = arith.constant 0 : index
    %c145_255 = arith.constant 145 : index
    %300 = vector.load %arg12[%c0_254, %c145_255] : memref<4x401xf32, #tpu.memory_space<vmem>>, vector<4x256xf32>
    %c2_256 = arith.constant 2 : index
    %c0_257 = arith.constant 0 : index
    %301 = vector.load %arg10[%c2_256, %c0_257] : memref<3x256xf32, #tpu.memory_space<vmem>>, vector<1x256xf32>
    %302 = vector.broadcast %301 : vector<1x256xf32> to vector<4x256xf32>
    %303 = arith.mulf %300, %302 : vector<4x256xf32>
    %c8_258 = arith.constant 8 : index
    %c0_259 = arith.constant 0 : index
    %c0_260 = arith.constant 0 : index
    %304 = vector.load %arg8[%c8_258, %c0_259, %c0_260] : memref<9x1x4xf32, #tpu.memory_space<vmem>>, vector<1x1x4xf32>
    %305 = vector.shape_cast %304 : vector<1x1x4xf32> to vector<1x4xf32>
    %cst_261 = arith.constant dense<0.000000e+00> : vector<1x256xf32>
    %306 = tpu.matmul %305, %303, %cst_261 {dimension_numbers = #tpu.dot_dimension_numbers<[1], [0], [0], [1], [0, 0, 1, 1], [], []>} : vector<1x4xf32>, vector<4x256xf32>, vector<1x256xf32> -> vector<1x256xf32>
    %307 = arith.addf %299, %306 : vector<1x256xf32>
    %c0_262 = arith.constant 0 : index
    %c0_263 = arith.constant 0 : index
    %308 = vector.load %arg9[%c0_262, %c0_263] : memref<1x1xf32, #tpu.memory_space<vmem>>, vector<1x1xf32>
    %309 = vector.broadcast %308 : vector<1x1xf32> to vector<1x256xf32>
    %310 = arith.addf %307, %309 : vector<1x256xf32>
    %c0_264 = arith.constant 0 : index
    %c0_265 = arith.constant 0 : index
    %c0_266 = arith.constant 0 : index
    %311 = vector.load %arg1[%c0_264, %c0_265, %c0_266] : memref<1x1x256xf32, #tpu.memory_space<vmem>>, vector<1x1x256xf32>
    %312 = vector.shape_cast %311 : vector<1x1x256xf32> to vector<1x256xf32>
    %313 = arith.addf %310, %312 : vector<1x256xf32>
    %c0_267 = arith.constant 0 : index
    %c0_268 = arith.constant 0 : index
    %c0_269 = arith.constant 0 : index
    %314 = vector.load %arg11[%c0_267, %c0_268, %c0_269] : memref<1x1x256xf32, #tpu.memory_space<vmem>>, vector<1x1x256xf32>
    %315 = vector.shape_cast %314 : vector<1x1x256xf32> to vector<1x256xf32>
    %316 = vector.shape_cast %313 : vector<1x256xf32> to vector<1x1x256xf32>
    tpu.vector_store %arg11[%c0_267, %c0_268, %c0_269], %316 {strides = array<i32>} : memref<1x1x256xf32, #tpu.memory_space<vmem>>, vector<1x1x256xf32>,
    return
  }
  func.func @transform_0(%arg0: i32) -> (i32, i32, i32) {
    %c0_i32 = arith.constant 0 : i32
    %c0_i32_0 = arith.constant 0 : i32
    %c0_i32_1 = arith.constant 0 : i32
    return %arg0, %c0_i32, %c0_i32_0 : i32, i32, i32
  }
  func.func @transform_1(%arg0: i32) -> (i32, i32, i32) {
    %c0_i32 = arith.constant 0 : i32
    %c0_i32_0 = arith.constant 0 : i32
    %c0_i32_1 = arith.constant 0 : i32
    %c0_i32_2 = arith.constant 0 : i32
    return %c0_i32, %c0_i32_0, %c0_i32_1 : i32, i32, i32
  }
  func.func @transform_2(%arg0: i32) -> (i32, i32) {
    %c0_i32 = arith.constant 0 : i32
    %c0_i32_0 = arith.constant 0 : i32
    %c0_i32_1 = arith.constant 0 : i32
    return %c0_i32, %c0_i32_0 : i32, i32
  }
  func.func @transform_3(%arg0: i32) -> (i32, i32, i32) {
    %c0_i32 = arith.constant 0 : i32
    %c0_i32_0 = arith.constant 0 : i32
    %c0_i32_1 = arith.constant 0 : i32
    %c0_i32_2 = arith.constant 0 : i32
    return %c0_i32, %c0_i32_0, %c0_i32_1 : i32, i32, i32
  }
  func.func @transform_4(%arg0: i32) -> (i32, i32) {
    %c0_i32 = arith.constant 0 : i32
    %c0_i32_0 = arith.constant 0 : i32
    %c0_i32_1 = arith.constant 0 : i32
    return %c0_i32, %c0_i32_0 : i32, i32
  }
  func.func @transform_5(%arg0: i32) -> (i32, i32, i32) {
    %c0_i32 = arith.constant 0 : i32
    %c0_i32_0 = arith.constant 0 : i32
    %c0_i32_1 = arith.constant 0 : i32
    %c0_i32_2 = arith.constant 0 : i32
    return %c0_i32, %c0_i32_0, %c0_i32_1 : i32, i32, i32
  }
  func.func @transform_6(%arg0: i32) -> (i32, i32) {
    %c0_i32 = arith.constant 0 : i32
    %c0_i32_0 = arith.constant 0 : i32
    %c0_i32_1 = arith.constant 0 : i32
    return %c0_i32, %c0_i32_0 : i32, i32
  }
  func.func @transform_7(%arg0: i32) -> (i32, i32, i32) {
    %c0_i32 = arith.constant 0 : i32
    %c0_i32_0 = arith.constant 0 : i32
    %c0_i32_1 = arith.constant 0 : i32
    %c0_i32_2 = arith.constant 0 : i32
    return %c0_i32, %c0_i32_0, %c0_i32_1 : i32, i32, i32
  }
  func.func @transform_8(%arg0: i32) -> (i32, i32) {
    %c0_i32 = arith.constant 0 : i32
    %c0_i32_0 = arith.constant 0 : i32
    %c0_i32_1 = arith.constant 0 : i32
    return %c0_i32, %c0_i32_0 : i32, i32
  }
  func.func @transform_9(%arg0: i32) -> (i32, i32) {
    %c0_i32 = arith.constant 0 : i32
    %c0_i32_0 = arith.constant 0 : i32
    %c0_i32_1 = arith.constant 0 : i32
    return %c0_i32, %c0_i32_0 : i32, i32
  }
  func.func @transform_10(%arg0: i32) -> (i32, i32, i32) {
    %c0_i32 = arith.constant 0 : i32
    %c0_i32_0 = arith.constant 0 : i32
    %c0_i32_1 = arith.constant 0 : i32
    return %arg0, %c0_i32, %c0_i32_0 : i32, i32, i32
  }
}

</mosaic_0001>

<llo_original>
// kernel: postnet_forward.1
$region0: #{postnet_forward.1}
  #allocation0 [shape = 'u32[]', space=smem, size = 0x4, offset = 0x4, fixed_abs, tag = 'smem constant byte address 0x4 - core index']
  #allocation1 [shape = 'u32[72,128]{1,0:T(1,128)}', space=vmem, size = 0x9000, scoped, tag = 'internal scratch']
  #allocation2 [shape = 'f32[4,401]{1,0:T(4,128)}', space=vmem, size = 0x2000, scoped, tag = 'scratch operand']
  #allocation3 [shape = 'f32[1,1]{1,0:T(1,128)S(1)}', space=vmem, size = 0x200, scoped, tag = 'scoped memory for postnet_forward.1']
  %s0 = inlined_call_operand.vmem [shape: f32[2,1,256], index: 0, kind: input, shape index: {}]
  %s1 = inlined_call_operand.vmem [shape: f32[9,4,1], index: 1, kind: input, shape index: {}]
  %s2 = inlined_call_operand.vmem [shape: f32[4,1], index: 2, kind: input, shape index: {}]
  %s3 = inlined_call_operand.vmem [shape: bf16[9,4,4], index: 3, kind: input, shape index: {}]
  %s4 = inlined_call_operand.vmem [shape: f32[4,1], index: 4, kind: input, shape index: {}]
  %s5 = inlined_call_operand.vmem [shape: bf16[9,4,4], index: 5, kind: input, shape index: {}]
  %s6 = inlined_call_operand.vmem [shape: f32[4,1], index: 6, kind: input, shape index: {}]
  %s7 = inlined_call_operand.vmem [shape: f32[9,1,4], index: 7, kind: input, shape index: {}]
  %s8 = inlined_call_operand.<no memory space> [shape: f32[1,1], index: 8, kind: input, shape index: {}]
  %s9 = inlined_call_operand.vmem [shape: f32[3,256], index: 9, kind: input, shape index: {}]
  %s10 = inlined_call_operand.vmem [shape: f32[2,1,256], index: 10, kind: output, shape index: {}]
  %s11 = sld [smem:[#allocation0]]
  $region73: #{postnet_forward.1} parent=0
    _
  %s13 = ssub.s32 1, %s11
  %s14 = scalar_select 0, %s13, %s11
  %v15 = vstv %s8
  %16 = vst [vmem:[#allocation3] sm:$0x1] %v15
  loop: start=0, step=1, limit=4
  $region2: #{postnet_forward.1} parent=0 // loop_pre_header
    _
  $region3: #{postnet_forward.1} parent=0 // loop_header
    %s18 = sphi 0, %s22
    %p19 = scmp.ge.s32.totalorder %s18, 4
    %s28 = sphi 0, %s30
    %s31 = sphi 0, %s28
    %s32 = sphi 0, %s31
    %s48 = sphi 0, %s32
    %s52 = sphi 0, %s52
    %s54 = sphi 0, %s52
    %s55 = sphi 0, %s54
    %s69 = sphi 0, %s55
    %s73 = sphi 0, %s73
    %s75 = sphi 0, %s73
    %s76 = sphi 0, %s75
    %s90 = sphi 0, %s76
    %s94 = sphi 0, %s94
    %s96 = sphi 0, %s94
    %s97 = sphi 0, %s96
    %s111 = sphi 0, %s97
    %s115 = sphi 0, %s115
    %s117 = sphi 0, %s115
    %s118 = sphi 0, %s117
    %s132 = sphi 0, %s118
    %s136 = sphi 0, %s136
    %s138 = sphi 0, %s136
    %s139 = sphi 0, %s138
    %s153 = sphi 0, %s139
    %s157 = sphi 0, %s157
    %s159 = sphi 0, %s157
    %s160 = sphi 0, %s159
    %s174 = sphi 0, %s160
    %s178 = sphi 0, %s178
    %s180 = sphi 0, %s178
    %s181 = sphi 0, %s180
    %s195 = sphi 0, %s181
    %s199 = sphi 0, %s199
    %s201 = sphi 0, %s199
    %s202 = sphi 0, %s201
    %s216 = sphi 0, %s202
    %s220 = sphi 0, %s220
    %s222 = sphi 0, %s220
    %s223 = sphi 0, %s222
    %s237 = sphi 0, %s223
    %s243 = sphi 0, %s245
    %s246 = sphi 0, %s243
    %s247 = sphi 0, %s246
    %s263 = sphi 0, %s247
  $region4: #{postnet_forward.1} parent=0 // loop_header_branch
    %21 = sbr.rel (%p19) target = $region8
  $region5: #{postnet_forward.1} parent=0 // loop_body
    %s23 = ssub.s32 %s18, 1
    %s24 = ssub.s32 %s18, 2
    %s25 = sadd.s32 %s18, 1
    %s26 = ssub.s32 %s18, %s25
    %p27 = scmp.eq.s32.totalorder %s26, 0
    %s29 = sadd.s32 %s28, 1
    %s30 = scalar_select %p27, %s28, %s29
    %p33 = pneg %p27
    %p34 = scmp.eq.s32.totalorder %s18, 1
    %p35 = por %p33, %p34
    %p36 = scmp.ne.s32.totalorder %s28, %s31
    %p37 = scmp.eq.s32.totalorder %s18, 0
    %p38 = por %p36, %p37
    %p39 = scmp.ne.s32.totalorder %s28, %s31
    %p40 = scmp.eq.s32.totalorder %s23, 1
    %p41 = por %p39, %p40
    %p42 = scmp.ne.s32.totalorder %s31, %s32
    %p43 = scmp.eq.s32.totalorder %s23, 0
    %p44 = por %p42, %p43
    %p45 = scmp.ne.s32.totalorder %s31, %s32
    %p46 = scmp.eq.s32.totalorder %s24, 1
    %p47 = por %p45, %p46
    %p49 = scmp.ne.s32.totalorder %s32, %s48
    %p50 = scmp.eq.s32.totalorder %s24, 0
    %p51 = por %p49, %p50
    %s53 = sadd.s32 %s52, 1
    %p56 = scmp.eq.s32.totalorder %s18, 1
    %p57 = scmp.ne.s32.totalorder %s52, %s54
    %p58 = scmp.eq.s32.totalorder %s18, 0
    %p59 = por %p57, %p58
    %p60 = scmp.ne.s32.totalorder %s52, %s54
    %p61 = scmp.eq.s32.totalorder %s23, 1
    %p62 = por %p60, %p61
    %p63 = scmp.ne.s32.totalorder %s54, %s55
    %p64 = scmp.eq.s32.totalorder %s23, 0
    %p65 = por %p63, %p64
    %p66 = scmp.ne.s32.totalorder %s54, %s55
    %p67 = scmp.eq.s32.totalorder %s24, 1
    %p68 = por %p66, %p67
    %p70 = scmp.ne.s32.totalorder %s55, %s69
    %p71 = scmp.eq.s32.totalorder %s24, 0
    %p72 = por %p70, %p71
    %s74 = sadd.s32 %s73, 1
    %p77 = scmp.eq.s32.totalorder %s18, 1
    %p78 = scmp.ne.s32.totalorder %s73, %s75
    %p79 = scmp.eq.s32.totalorder %s18, 0
    %p80 = por %p78, %p79
    %p81 = scmp.ne.s32.totalorder %s73, %s75
    %p82 = scmp.eq.s32.totalorder %s23, 1
    %p83 = por %p81, %p82
    %p84 = scmp.ne.s32.totalorder %s75, %s76
    %p85 = scmp.eq.s32.totalorder %s23, 0
    %p86 = por %p84, %p85
    %p87 = scmp.ne.s32.totalorder %s75, %s76
    %p88 = scmp.eq.s32.totalorder %s24, 1
    %p89 = por %p87, %p88
    %p91 = scmp.ne.s32.totalorder %s76, %s90
    %p92 = scmp.eq.s32.totalorder %s24, 0
    %p93 = por %p91, %p92
    %s95 = sadd.s32 %s94, 1
    %p98 = scmp.eq.s32.totalorder %s18, 1
    %p99 = scmp.ne.s32.totalorder %s94, %s96
    %p100 = scmp.eq.s32.totalorder %s18, 0
    %p101 = por %p99, %p100
    %p102 = scmp.ne.s32.totalorder %s94, %s96
    %p103 = scmp.eq.s32.totalorder %s23, 1
    %p104 = por %p102, %p103
    %p105 = scmp.ne.s32.totalorder %s96, %s97
    %p106 = scmp.eq.s32.totalorder %s23, 0
    %p107 = por %p105, %p106
    %p108 = scmp.ne.s32.totalorder %s96, %s97
    %p109 = scmp.eq.s32.totalorder %s24, 1
    %p110 = por %p108, %p109
    %p112 = scmp.ne.s32.totalorder %s97, %s111
    %p113 = scmp.eq.s32.totalorder %s24, 0
    %p114 = por %p112, %p113
    %s116 = sadd.s32 %s115, 1
    %p119 = scmp.eq.s32.totalorder %s18, 1
    %p120 = scmp.ne.s32.totalorder %s115, %s117
    %p121 = scmp.eq.s32.totalorder %s18, 0
    %p122 = por %p120, %p121
    %p123 = scmp.ne.s32.totalorder %s115, %s117
    %p124 = scmp.eq.s32.totalorder %s23, 1
    %p125 = por %p123, %p124
    %p126 = scmp.ne.s32.totalorder %s117, %s118
    %p127 = scmp.eq.s32.totalorder %s23, 0
    %p128 = por %p126, %p127
    %p129 = scmp.ne.s32.totalorder %s117, %s118
    %p130 = scmp.eq.s32.totalorder %s24, 1
    %p131 = por %p129, %p130
    %p133 = scmp.ne.s32.totalorder %s118, %s132
    %p134 = scmp.eq.s32.totalorder %s24, 0
    %p135 = por %p133, %p134
    %s137 = sadd.s32 %s136, 1
    %p140 = scmp.eq.s32.totalorder %s18, 1
    %p141 = scmp.ne.s32.totalorder %s136, %s138
    %p142 = scmp.eq.s32.totalorder %s18, 0
    %p143 = por %p141, %p142
    %p144 = scmp.ne.s32.totalorder %s136, %s138
    %p145 = scmp.eq.s32.totalorder %s23, 1
    %p146 = por %p144, %p145
    %p147 = scmp.ne.s32.totalorder %s138, %s139
    %p148 = scmp.eq.s32.totalorder %s23, 0
    %p149 = por %p147, %p148
    %p150 = scmp.ne.s32.totalorder %s138, %s139
    %p151 = scmp.eq.s32.totalorder %s24, 1
    %p152 = por %p150, %p151
    %p154 = scmp.ne.s32.totalorder %s139, %s153
    %p155 = scmp.eq.s32.totalorder %s24, 0
    %p156 = por %p154, %p155
    %s158 = sadd.s32 %s157, 1
    %p161 = scmp.eq.s32.totalorder %s18, 1
    %p162 = scmp.ne.s32.totalorder %s157, %s159
    %p163 = scmp.eq.s32.totalorder %s18, 0
    %p164 = por %p162, %p163
    %p165 = scmp.ne.s32.totalorder %s157, %s159
    %p166 = scmp.eq.s32.totalorder %s23, 1
    %p167 = por %p165, %p166
    %p168 = scmp.ne.s32.totalorder %s159, %s160
    %p169 = scmp.eq.s32.totalorder %s23, 0
    %p170 = por %p168, %p169
    %p171 = scmp.ne.s32.totalorder %s159, %s160
    %p172 = scmp.eq.s32.totalorder %s24, 1
    %p173 = por %p171, %p172
    %p175 = scmp.ne.s32.totalorder %s160, %s174
    %p176 = scmp.eq.s32.totalorder %s24, 0
    %p177 = por %p175, %p176
    %s179 = sadd.s32 %s178, 1
    %p182 = scmp.eq.s32.totalorder %s18, 1
    %p183 = scmp.ne.s32.totalorder %s178, %s180
    %p184 = scmp.eq.s32.totalorder %s18, 0
    %p185 = por %p183, %p184
    %p186 = scmp.ne.s32.totalorder %s178, %s180
    %p187 = scmp.eq.s32.totalorder %s23, 1
    %p188 = por %p186, %p187
    %p189 = scmp.ne.s32.totalorder %s180, %s181
    %p190 = scmp.eq.s32.totalorder %s23, 0
    %p191 = por %p189, %p190
    %p192 = scmp.ne.s32.totalorder %s180, %s181
    %p193 = scmp.eq.s32.totalorder %s24, 1
    %p194 = por %p192, %p193
    %p196 = scmp.ne.s32.totalorder %s181, %s195
    %p197 = scmp.eq.s32.totalorder %s24, 0
    %p198 = por %p196, %p197
    %s200 = sadd.s32 %s199, 1
    %p203 = scmp.eq.s32.totalorder %s18, 1
    %p204 = scmp.ne.s32.totalorder %s199, %s201
    %p205 = scmp.eq.s32.totalorder %s18, 0
    %p206 = por %p204, %p205
    %p207 = scmp.ne.s32.totalorder %s199, %s201
    %p208 = scmp.eq.s32.totalorder %s23, 1
    %p209 = por %p207, %p208
    %p210 = scmp.ne.s32.totalorder %s201, %s202
    %p211 = scmp.eq.s32.totalorder %s23, 0
    %p212 = por %p210, %p211
    %p213 = scmp.ne.s32.totalorder %s201, %s202
    %p214 = scmp.eq.s32.totalorder %s24, 1
    %p215 = por %p213, %p214
    %p217 = scmp.ne.s32.totalorder %s202, %s216
    %p218 = scmp.eq.s32.totalorder %s24, 0
    %p219 = por %p217, %p218
    %s221 = sadd.s32 %s220, 1
    %p224 = scmp.eq.s32.totalorder %s18, 1
    %p225 = scmp.ne.s32.totalorder %s220, %s222
    %p226 = scmp.eq.s32.totalorder %s18, 0
    %p227 = por %p225, %p226
    %p228 = scmp.ne.s32.totalorder %s220, %s222
    %p229 = scmp.eq.s32.totalorder %s23, 1
    %p230 = por %p228, %p229
    %p231 = scmp.ne.s32.totalorder %s222, %s223
    %p232 = scmp.eq.s32.totalorder %s23, 0
    %p233 = por %p231, %p232
    %p234 = scmp.ne.s32.totalorder %s222, %s223
    %p235 = scmp.eq.s32.totalorder %s24, 1
    %p236 = por %p234, %p235
    %p238 = scmp.ne.s32.totalorder %s223, %s237
    %p239 = scmp.eq.s32.totalorder %s24, 0
    %p240 = por %p238, %p239
    %s241 = ssub.s32 %s18, %s25
    %p242 = scmp.eq.s32.totalorder %s241, 0
    %s244 = sadd.s32 %s243, 1
    %s245 = scalar_select %p242, %s243, %s244
    %p248 = pneg %p242
    %p249 = scmp.eq.s32.totalorder %s18, 1
    %p250 = por %p248, %p249
    %p251 = scmp.ne.s32.totalorder %s243, %s246
    %p252 = scmp.eq.s32.totalorder %s18, 0
    %p253 = por %p251, %p252
    %p254 = scmp.ne.s32.totalorder %s243, %s246
    %p255 = scmp.eq.s32.totalorder %s23, 1
    %p256 = por %p254, %p255
    %p257 = scmp.ne.s32.totalorder %s246, %s247
    %p258 = scmp.eq.s32.totalorder %s23, 0
    %p259 = por %p257, %p258
    %p260 = scmp.ne.s32.totalorder %s246, %s247
    %p261 = scmp.eq.s32.totalorder %s24, 1
    %p262 = por %p260, %p261
    %p264 = scmp.ne.s32.totalorder %s247, %s263
    %p265 = scmp.eq.s32.totalorder %s24, 0
    %p266 = por %p264, %p265
    %p267 = scmp.le.s32.totalorder 1, %s18
    %p268 = scmp.lt.s32.totalorder %s18, 3
    %p269 = pnand %p267, %p268
    %p270 = pneg %p269
    // Predicated region
    $region9: #{postnet_forward.1} parent=5 // pred_check
      _
    $region10: #{postnet_forward.1} parent=5 // pred_check_branch
      %272 = sbr.rel (%p269) target = $region12
    $region11: #{postnet_forward.1} parent=5 // pred_region
      %s273 = ssub.s32 %s18, 1
      // Predicated region
      $region13: #{postnet_forward.1} parent=11 // pred_check
        %p274 = pneg %p65
      $region14: #{postnet_forward.1} parent=11 // pred_check_branch
        %276 = sbr.rel (%p274) target = $region16
      $region15: #{postnet_forward.1} parent=11 // pred_region
        _
      $region16: #{postnet_forward.1} parent=11 // pred_fallthru
        _
      // Predicated region
      $region17: #{postnet_forward.1} parent=11 // pred_check
        %p277 = pneg %p86
      $region18: #{postnet_forward.1} parent=11 // pred_check_branch
        %279 = sbr.rel (%p277) target = $region20
      $region19: #{postnet_forward.1} parent=11 // pred_region
        _
      $region20: #{postnet_forward.1} parent=11 // pred_fallthru
        _
      // Predicated region
      $region21: #{postnet_forward.1} parent=11 // pred_check
        %p280 = pneg %p107
      $region22: #{postnet_forward.1} parent=11 // pred_check_branch
        %282 = sbr.rel (%p280) target = $region24
      $region23: #{postnet_forward.1} parent=11 // pred_region
        _
      $region24: #{postnet_forward.1} parent=11 // pred_fallthru
        _
      // Predicated region
      $region25: #{postnet_forward.1} parent=11 // pred_check
        %p283 = pneg %p128
      $region26: #{postnet_forward.1} parent=11 // pred_check_branch
        %285 = sbr.rel (%p283) target = $region28
      $region27: #{postnet_forward.1} parent=11 // pred_region
        _
      $region28: #{postnet_forward.1} parent=11 // pred_fallthru
        _
      // Predicated region
      $region29: #{postnet_forward.1} parent=11 // pred_check
        %p286 = pneg %p149
      $region30: #{postnet_forward.1} parent=11 // pred_check_branch
        %288 = sbr.rel (%p286) target = $region32
      $region31: #{postnet_forward.1} parent=11 // pred_region
        _
      $region32: #{postnet_forward.1} parent=11 // pred_fallthru
        _
      // Predicated region
      $region33: #{postnet_forward.1} parent=11 // pred_check
        %p289 = pneg %p170
      $region34: #{postnet_forward.1} parent=11 // pred_check_branch
        %291 = sbr.rel (%p289) target = $region36
      $region35: #{postnet_forward.1} parent=11 // pred_region
        _
      $region36: #{postnet_forward.1} parent=11 // pred_fallthru
        _
      // Predicated region
      $region37: #{postnet_forward.1} parent=11 // pred_check
        %p292 = pneg %p191
      $region38: #{postnet_forward.1} parent=11 // pred_check_branch
        %294 = sbr.rel (%p292) target = $region40
      $region39: #{postnet_forward.1} parent=11 // pred_region
        _
      $region40: #{postnet_forward.1} parent=11 // pred_fallthru
        _
      // Predicated region
      $region41: #{postnet_forward.1} parent=11 // pred_check
        %p295 = pneg %p212
      $region42: #{postnet_forward.1} parent=11 // pred_check_branch
        %297 = sbr.rel (%p295) target = $region44
      $region43: #{postnet_forward.1} parent=11 // pred_region
        _
      $region44: #{postnet_forward.1} parent=11 // pred_fallthru
        _
      // Predicated region
      $region45: #{postnet_forward.1} parent=11 // pred_check
        %p298 = pneg %p233
      $region46: #{postnet_forward.1} parent=11 // pred_check_branch
        %300 = sbr.rel (%p298) target = $region48
      $region47: #{postnet_forward.1} parent=11 // pred_region
        _
      $region48: #{postnet_forward.1} parent=11 // pred_fallthru
        _
    $region12: #{postnet_forward.1} parent=5 // pred_fallthru
      _
    %p301 = scmp.lt.s32.totalorder %s18, 2
    // Predicated region
    $region49: #{postnet_forward.1} parent=5 // pred_check
      %p302 = pneg %p301
    $region50: #{postnet_forward.1} parent=5 // pred_check_branch
      %304 = sbr.rel (%p302) target = $region52
    $region51: #{postnet_forward.1} parent=5 // pred_region
      // Predicated region
      $region53: #{postnet_forward.1} parent=51 // pred_check
        %p305 = pneg %p38
      $region54: #{postnet_forward.1} parent=51 // pred_check_branch
        %307 = sbr.rel (%p305) target = $region56
      $region55: #{postnet_forward.1} parent=51 // pred_region
        %p308 = scmp.lt.s32.totalorder %s18, 1
        %s309 = scalar_select %p308, %s18, 1
        %s310 = smul.addr %s309, 2
        %s311 = scalar_lea.vmem %s0, %s310
      $region56: #{postnet_forward.1} parent=51 // pred_fallthru
        _
    $region52: #{postnet_forward.1} parent=5 // pred_fallthru
      _
    %p312 = scmp.le.s32.totalorder 1, %s18
    %p313 = scmp.lt.s32.totalorder %s18, 3
    %p314 = pnand %p312, %p313
    %p315 = pneg %p314
    // Predicated region
    $region57: #{postnet_forward.1} parent=5 // pred_check
      _
    $region58: #{postnet_forward.1} parent=5 // pred_check_branch
      %317 = sbr.rel (%p314) target = $region60
    $region59: #{postnet_forward.1} parent=5 // pred_region
      %s318 = ssub.s32 %s18, 1
      %p319 = scmp.lt.s32.totalorder %s23, 1
      %s320 = scalar_select %p319, %s23, 1
      %s321 = smul.addr %s320, 2
      %s322 = scalar_lea.vmem %s0, %s321
      %p323 = pneg %p44
      %p324 = pneg %p41
      %p325 = pneg %p65
      %p326 = pneg %p62
      %p327 = pneg %p86
      %p328 = pneg %p83
      %p329 = pneg %p107
      %p330 = pneg %p104
      %p331 = pneg %p128
      %p332 = pneg %p125
      %p333 = pneg %p149
      %p334 = pneg %p146
      %p335 = pneg %p170
      %p336 = pneg %p167
      %p337 = pneg %p191
      %p338 = pneg %p188
      %p339 = pneg %p212
      %p340 = pneg %p209
      %p341 = pneg %p233
      %p342 = pneg %p230
      %p343 = pneg %p259
      %p344 = pneg %p256
      %p345 = scmp.lt.s32.totalorder %s23, 1
      %s346 = scalar_select %p345, %s23, 1
      %s347 = smul.addr %s346, 2
      %s348 = scalar_lea.vmem %s10, %s347
      %p349 = scmp.lt.s32.totalorder %s23, 1
      %s350 = scalar_select %p349, %s23, 1
      %s351 = smul.addr %s350, 2
      %s352 = scalar_lea.vmem %s0, %s351
      %p353 = scmp.lt.s32.totalorder %s23, 1
      %s354 = scalar_select %p353, %s23, 1
      %s355 = smul.addr %s354, 2
      %s356 = scalar_lea.vmem %s10, %s355
      %vm358 = vcmask 1044344
      %359 = vst.msk [vmem:[#allocation2] sm:$0xf] %vm358, 0.0
      %vm360 = vcmask 134144
      %361 = vst.msk [vmem:[#allocation2 + $0xc] sm:$0xf] %vm360, 0.0
      %v362 = vld [vmem:[%s352] sm:$0x3]
      %v363 = vlaneseq
      %vm364 = vcmp.ge.s32.totalorder %v363, 0
      %vm365 = vcmp.lt.s32.totalorder %v363, 256
      %vm366 = vmand %vm364, %vm365
      %s367 = scalar_lea.vmem [#allocation2], 4
      %368 = vst.msk [vmem:[%s367] ss:$4 sm:$0x3] %vm366, %v362
      %v369 = vld [vmem:[#allocation2] ss:$4 sm:$0x7]
      %v370 = vld [vmem:[%s9] ss:$4 sm:$0x3]
      %372 = vrot.lane.b32.xlu0 %v370, 111
      %v373 = vpop.permute.xlu0 %372
      %v374 = vrot.slane %v373, 7
      %vm375 = vcmask 908288
      %v376 = vsel %vm375, %v374, %v373
      %v378 = vmul.f32 %v369, %v376
      %v379 = vld [vmem:[%s1] sm:$0xf]
      %381 = vset.pattern.permute.xlu0 0
      %382 = vperm.xlu0 %381, %v379
      %v383 = vpop.permute.xlu0 %382
      %v386 = vperm.slane %v378, 0
      %v387 = vperm.slane %v378, 1
      %v388 = vperm.slane %v378, 2
      %v392 = vmul.f32 %v383, %v386
      %v393 = vmul.f32 %v383, %v387
      %v394 = vmul.f32 %v383, %v388
      %v395 = vadd.f32 %v392, 0.0
      %v396 = vadd.f32 %v393, 0.0
      %v397 = vadd.f32 %v394, 0.0
      %s398 = scalar_lea.vmem %s1, 4
      %v399 = vld [vmem:[%s398] sm:$0xf]
      %401 = vset.pattern.permute.xlu0 0
      %402 = vperm.xlu0 %401, %v399
      %v403 = vpop.permute.xlu0 %402
      %v406 = vperm.slane %v369, 0
      %v407 = vperm.slane %v369, 1
      %v408 = vperm.slane %v369, 2
      %v412 = vmul.f32 %v403, %v406
      %v413 = vmul.f32 %v403, %v407
      %v414 = vmul.f32 %v403, %v408
      %418 = vrot.lane.b32.xlu0 %v412, 127
      %v419 = vpop.permute.xlu0 %418
      %420 = vrot.lane.b32.xlu0 %v413, 127
      %v421 = vpop.permute.xlu0 %420
      %422 = vrot.lane.b32.xlu0 %v414, 127
      %v423 = vpop.permute.xlu0 %422
      %vm424 = vcmask 1039360
      %v425 = vsel %vm424, %v419, %v421
      %v426 = vsel %vm424, %v421, %v423
      %v430 = vadd.f32 %v395, %v425
      %v431 = vadd.f32 %v396, %v426
      %v432 = vadd.f32 %v397, %v423
      %s433 = scalar_lea.vmem %s9, 2
      %v434 = vld [vmem:[%s433] ss:$4 sm:$0x3]
      %436 = vrot.lane.b32.xlu0 %v434, 113
      %v437 = vpop.permute.xlu0 %436
      %v438 = vrot.slane %v437, 7
      %vm439 = vcmask 924672
      %v440 = vsel %vm439, %v438, %v437
      %v442 = vmul.f32 %v369, %v440
      %s443 = scalar_lea.vmem %s1, 8
      %v444 = vld [vmem:[%s443] sm:$0xf]
      %446 = vset.pattern.permute.xlu0 0
      %447 = vperm.xlu0 %446, %v444
      %v448 = vpop.permute.xlu0 %447
      %v451 = vperm.slane %v442, 0
      %v452 = vperm.slane %v442, 1
      %v453 = vperm.slane %v442, 2
      %v457 = vmul.f32 %v448, %v451
      %v458 = vmul.f32 %v448, %v452
      %v459 = vmul.f32 %v448, %v453
      %463 = vrot.lane.b32.xlu0 %v457, 126
      %v464 = vpop.permute.xlu0 %463
      %465 = vrot.lane.b32.xlu0 %v458, 126
      %v466 = vpop.permute.xlu0 %465
      %467 = vrot.lane.b32.xlu0 %v459, 126
      %v468 = vpop.permute.xlu0 %467
      %vm469 = vcmask 1031168
      %v470 = vsel %vm469, %v464, %v466
      %v471 = vsel %vm469, %v466, %v468
      %v475 = vadd.f32 %v430, %v470
      %v476 = vadd.f32 %v431, %v471
      %v477 = vadd.f32 %v432, %v468
      %478 = vrot.lane.b32.xlu0 %v370, 127
      %v479 = vpop.permute.xlu0 %478
      %v480 = vrot.slane %v479, 7
      %v481 = vsel %vm424, %v480, %v479
      %v483 = vmul.f32 %v369, %v481
      %s484 = scalar_lea.vmem %s1, 12
      %v485 = vld [vmem:[%s484] sm:$0xf]
      %487 = vset.pattern.permute.xlu0 0
      %488 = vperm.xlu0 %487, %v485
      %v489 = vpop.permute.xlu0 %488
      %v492 = vperm.slane %v483, 0
      %v493 = vperm.slane %v483, 1
      %v494 = vperm.slane %v483, 2
      %v498 = vmul.f32 %v489, %v492
      %v499 = vmul.f32 %v489, %v493
      %v500 = vmul.f32 %v489, %v494
      %504 = vrot.lane.b32.xlu0 %v498, 112
      %v505 = vpop.permute.xlu0 %504
      %506 = vrot.lane.b32.xlu0 %v499, 112
      %v507 = vpop.permute.xlu0 %506
      %508 = vrot.lane.b32.xlu0 %v500, 112
      %v509 = vpop.permute.xlu0 %508
      %vm510 = vcmask 916480
      %v511 = vsel %vm510, %v505, %v507
      %v512 = vsel %vm510, %v507, %v509
      %v516 = vadd.f32 %v475, %v511
      %v517 = vadd.f32 %v476, %v512
      %v518 = vadd.f32 %v477, %v509
      %v519 = vld [vmem:[%s367] ss:$4 sm:$0x3]
      %s520 = scalar_lea.vmem %s1, 16
      %v521 = vld [vmem:[%s520] sm:$0xf]
      %523 = vset.pattern.permute.xlu0 0
      %524 = vperm.xlu0 %523, %v521
      %v525 = vpop.permute.xlu0 %524
      %v528 = vperm.slane %v519, 0
      %v529 = vperm.slane %v519, 1
      %v532 = vmul.f32 %v525, %v528
      %v533 = vmul.f32 %v525, %v529
      %536 = vrot.lane.b32.xlu0 %v532, 111
      %v537 = vpop.permute.xlu0 %536
      %538 = vrot.lane.b32.xlu0 %v533, 111
      %v539 = vpop.permute.xlu0 %538
      %v540 = vsel %vm375, %v537, %v539
      %v544 = vadd.f32 %v516, %v537
      %v545 = vadd.f32 %v517, %v540
      %v546 = vadd.f32 %v518, %v539
      %v547 = vld [vmem:[%s367] ss:$4 sm:$0x7]
      %548 = vrot.lane.b32.xlu0 %v434, 1
      %v549 = vpop.permute.xlu0 %548
      %v550 = vrot.slane %v549, 7
      %vm551 = vcmask 7168
      %v552 = vsel %vm551, %v550, %v549
      %v554 = vmul.f32 %v547, %v552
      %s555 = scalar_lea.vmem %s1, 20
      %v556 = vld [vmem:[%s555] sm:$0xf]
      %558 = vset.pattern.permute.xlu0 0
      %559 = vperm.xlu0 %558, %v556
      %v560 = vpop.permute.xlu0 %559
      %v563 = vperm.slane %v554, 0
      %v564 = vperm.slane %v554, 1
      %v565 = vperm.slane %v554, 2
      %v569 = vmul.f32 %v560, %v563
      %v570 = vmul.f32 %v560, %v564
      %v571 = vmul.f32 %v560, %v565
      %575 = vrot.lane.b32.xlu0 %v569, 110
      %v576 = vpop.permute.xlu0 %575
      %577 = vrot.lane.b32.xlu0 %v570, 110
      %v578 = vpop.permute.xlu0 %577
      %579 = vrot.lane.b32.xlu0 %v571, 110
      %v580 = vpop.permute.xlu0 %579
      %vm581 = vcmask 900096
      %v582 = vsel %vm581, %v576, %v578
      %v583 = vsel %vm581, %v578, %v580
      %v587 = vadd.f32 %v544, %v576
      %v588 = vadd.f32 %v545, %v582
      %v589 = vadd.f32 %v546, %v583
      %590 = vrot.lane.b32.xlu0 %v370, 15
      %v591 = vpop.permute.xlu0 %590
      %v592 = vrot.slane %v591, 7
      %vm593 = vcmask 121856
      %v594 = vsel %vm593, %v592, %v591
      %v596 = vmul.f32 %v547, %v594
      %s597 = scalar_lea.vmem %s1, 24
      %v598 = vld [vmem:[%s597] sm:$0xf]
      %600 = vset.pattern.permute.xlu0 0
      %601 = vperm.xlu0 %600, %v598
      %v602 = vpop.permute.xlu0 %601
      %v605 = vperm.slane %v596, 0
      %v606 = vperm.slane %v596, 1
      %v607 = vperm.slane %v596, 2
      %v611 = vmul.f32 %v602, %v605
      %v612 = vmul.f32 %v602, %v606
      %v613 = vmul.f32 %v602, %v607
      %617 = vrot.lane.b32.xlu0 %v611, 96
      %v618 = vpop.permute.xlu0 %617
      %619 = vrot.lane.b32.xlu0 %v612, 96
      %v620 = vpop.permute.xlu0 %619
      %621 = vrot.lane.b32.xlu0 %v613, 96
      %v622 = vpop.permute.xlu0 %621
      %vm623 = vcmask 785408
      %v624 = vsel %vm623, %v618, %v620
      %v625 = vsel %vm623, %v620, %v622
      %v629 = vadd.f32 %v587, %v618
      %v630 = vadd.f32 %v588, %v624
      %v631 = vadd.f32 %v589, %v625
      %s632 = scalar_lea.vmem %s1, 28
      %v633 = vld [vmem:[%s632] sm:$0xf]
      %635 = vset.pattern.permute.xlu0 0
      %636 = vperm.xlu0 %635, %v633
      %v637 = vpop.permute.xlu0 %636
      %v640 = vperm.slane %v547, 0
      %v641 = vperm.slane %v547, 1
      %v642 = vperm.slane %v547, 2
      %v646 = vmul.f32 %v637, %v640
      %v647 = vmul.f32 %v637, %v641
      %v648 = vmul.f32 %v637, %v642
      %652 = vrot.lane.b32.xlu0 %v646, 95
      %v653 = vpop.permute.xlu0 %652
      %654 = vrot.lane.b32.xlu0 %v647, 95
      %v655 = vpop.permute.xlu0 %654
      %656 = vrot.lane.b32.xlu0 %v648, 95
      %v657 = vpop.permute.xlu0 %656
      %vm658 = vcmask 777216
      %v659 = vsel %vm658, %v653, %v655
      %v660 = vsel %vm658, %v655, %v657
      %v664 = vadd.f32 %v629, %v653
      %v665 = vadd.f32 %v630, %v659
      %v666 = vadd.f32 %v631, %v660
      %667 = vrot.lane.b32.xlu0 %v434, 17
      %v668 = vpop.permute.xlu0 %667
      %v669 = vrot.slane %v668, 7
      %vm670 = vcmask 138240
      %v671 = vsel %vm670, %v669, %v668
      %v673 = vmul.f32 %v547, %v671
      %s674 = scalar_lea.vmem %s1, 32
      %v675 = vld [vmem:[%s674] sm:$0xf]
      %677 = vset.pattern.permute.xlu0 0
      %678 = vperm.xlu0 %677, %v675
      %v679 = vpop.permute.xlu0 %678
      %v682 = vperm.slane %v673, 0
      %v683 = vperm.slane %v673, 1
      %v684 = vperm.slane %v673, 2
      %v688 = vmul.f32 %v679, %v682
      %v689 = vmul.f32 %v679, %v683
      %v690 = vmul.f32 %v679, %v684
      %694 = vrot.lane.b32.xlu0 %v688, 94
      %v695 = vpop.permute.xlu0 %694
      %696 = vrot.lane.b32.xlu0 %v689, 94
      %v697 = vpop.permute.xlu0 %696
      %698 = vrot.lane.b32.xlu0 %v690, 94
      %v699 = vpop.permute.xlu0 %698
      %vm700 = vcmask 769024
      %v701 = vsel %vm700, %v695, %v697
      %v702 = vsel %vm700, %v697, %v699
      %v706 = vadd.f32 %v664, %v695
      %v707 = vadd.f32 %v665, %v701
      %v708 = vadd.f32 %v666, %v702
      %v709 = vld [vmem:[%s2] sm:$0xf]
      %711 = vset.pattern.permute.xlu0 0
      %712 = vperm.xlu0 %711, %v709
      %v713 = vpop.permute.xlu0 %712
      %v715 = vadd.f32 %v706, %v713
      %v716 = vadd.f32 %v707, %v713
      %v717 = vadd.f32 %v708, %v713
      %v718 = vtanh.pop %v715
      %v719 = vtanh.pop %v716
      %v720 = vtanh.pop %v717
      %v724 = vrot.slane %v719, 4
      %vm725 = vcmask 1043456
      %v726 = vsel %vm725, %v718, %v724
      %727 = vrot.lane.b32.xlu0 %v726, 17
      %v728 = vpop.permute.xlu0 %727
      %729 = vrot.lane.b32.xlu0 %v720, 17
      %v730 = vpop.permute.xlu0 %729
      %v731 = vrot.slane %v728, 4
      %v732 = vrot.slane %v730, 4
      %v733 = vsel %vm725, %v731, %v732
      %v734 = vsel %vm670, %v728, %v733
      %736 = vst [vmem:[#allocation2 + $0x4] sm:$0xff] %v734
      %v737 = vld [vmem:[#allocation2] sm:$0xff]
      %v738 = vld [vmem:[#allocation2 + $0x8] sm:$0xf]
      %v739 = vld [vmem:[%s9] ss:$4 sm:$0x3]
      %v741 = vperm.slane %v739, 0
      %v742 = vperm.slane %v739, 1
      %v743 = vrot.slane %v742, 4
      %v744 = vsel %vm725, %v741, %v743
      %745 = vrot.lane.b32.xlu0 %v744, 111
      %v746 = vpop.permute.xlu0 %745
      %v747 = vrot.slane %v746, 4
      %v748 = vsel %vm375, %v747, %v746
      %v751 = vmul.f32 %v737, %v748
      %v752 = vmul.f32 %v738, %v747
      %v753 = vld [vmem:[%s3] sm:$0x3]
      %756 = vst [vmem:[#allocation1] ss:$2 sm:$0xff] %v751
      %s757 = scalar_lea.vmem [#allocation1], 16
      %758 = vst [vmem:[%s757] ss:$2 sm:$0xff] %v752
      %v759 = vld.sshfl [vmem:[#allocation1] sm:$0xff pattern:$0x75316420]
      %v760 = vld.sshfl [vmem:[#allocation1 + $0x8] sm:$0xff pattern:$0x75316420]
      %v761 = vld.sshfl [vmem:[#allocation1 + $0x10] sm:$0xff pattern:$0x75316420]
      %v765 = vpack.c.bf16 %v759, %v759
      %v766 = vpack.c.bf16 %v760, %v760
      %v767 = vpack.c.bf16 %v761, %v761
      %v768 = vld [vmem:[#allocation2] sm:$0xff]
      %v769 = vld [vmem:[#allocation2 + $0x8] sm:$0xf]
      %s770 = scalar_lea.vmem %s3, 2
      %v771 = vld [vmem:[%s770] sm:$0x3]
      %774 = vst [vmem:[#allocation1] ss:$2 sm:$0xff] %v768
      %s775 = scalar_lea.vmem [#allocation1], 16
      %776 = vst [vmem:[%s775] ss:$2 sm:$0xff] %v769
      %v777 = vld.sshfl [vmem:[#allocation1] sm:$0xff pattern:$0x75316420]
      %v778 = vld.sshfl [vmem:[#allocation1 + $0x8] sm:$0xff pattern:$0x75316420]
      %v779 = vld.sshfl [vmem:[#allocation1 + $0x10] sm:$0xff pattern:$0x75316420]
      %v783 = vpack.c.bf16 %v777, %v777
      %v784 = vpack.c.bf16 %v778, %v778
      %v785 = vpack.c.bf16 %v779, %v779
      %789 = vrot.lane.b32.xlu0 %v783, 16
      %v790 = vpop.permute.xlu0 %789
      %791 = vrot.lane.b32.xlu0 %v784, 16
      %v792 = vpop.permute.xlu0 %791
      %793 = vrot.lane.b32.xlu0 %v785, 16
      %v794 = vpop.permute.xlu0 %793
      %vm795 = vcmask 130048
      %v796 = vsel %vm795, %v790, %v792
      %v797 = vsel %vm795, %v792, %v794
      %vm798 = vcmask 31744
      %v800 = vsel %vm798, %v771, 0
      %vm802 = vcmask 1041408
      %v804 = vsel %vm802, %v796, 0
      %v807 = vsel %vm802, %v797, 0
      %809 = vmatpush.bf16.msra.mxu0 0
      %810 = vmatpush.bf16.msra.mxu0 0
      %811 = vmatpush.bf16.msra.mxu0 0
      %812 = vmatpush.bf16.msra.mxu0 0
      %813 = vmatpush.bf16.msra.mxu0 0
      %814 = vmatpush.bf16.msra.mxu0 0
      %815 = vmatpush.bf16.msra.mxu0 0
      %816 = vmatpush.bf16.msra.mxu0 %v804
      %817 = vmatmul.bf16.gmra.mxu0 %v800
      %v818 = vpop.f32.mrf.mxu0
      %v819 = vadd.f32 0.0, %v818
      %v820 = vpop.f32.mrf.mxu0
      %821 = vdwg.mxu0
      %822 = vmatpush.bf16.msra.mxu0 0
      %823 = vmatpush.bf16.msra.mxu0 0
      %824 = vmatpush.bf16.msra.mxu0 0
      %825 = vmatpush.bf16.msra.mxu0 0
      %826 = vmatpush.bf16.msra.mxu0 0
      %827 = vmatpush.bf16.msra.mxu0 0
      %828 = vmatpush.bf16.msra.mxu0 0
      %829 = vmatpush.bf16.msra.mxu0 %v807
      %830 = vmatmul.bf16.gmra.mxu0 %v800
      %v831 = vpop.f32.mrf.mxu0
      %v832 = vadd.f32 0.0, %v831
      %v833 = vpop.f32.mrf.mxu0
      %834 = vdwg.mxu0
      %838 = vrot.lane.b32.xlu0 %v765, 17
      %v839 = vpop.permute.xlu0 %838
      %840 = vrot.lane.b32.xlu0 %v766, 17
      %v841 = vpop.permute.xlu0 %840
      %842 = vrot.lane.b32.xlu0 %v767, 17
      %v843 = vpop.permute.xlu0 %842
      %vm844 = vcmask 138240
      %v845 = vsel %vm844, %v839, %v841
      %v846 = vsel %vm844, %v841, %v843
      %v848 = vsel %vm798, %v753, 0
      %v851 = vsel %vm802, %v845, 0
      %v854 = vsel %vm802, %v846, 0
      %856 = vmatpush.bf16.msra.mxu0 0
      %857 = vmatpush.bf16.msra.mxu0 0
      %858 = vmatpush.bf16.msra.mxu0 0
      %859 = vmatpush.bf16.msra.mxu0 0
      %860 = vmatpush.bf16.msra.mxu0 0
      %861 = vmatpush.bf16.msra.mxu0 0
      %862 = vmatpush.bf16.msra.mxu0 0
      %863 = vmatpush.bf16.msra.mxu0 %v851
      %864 = vmatmul.bf16.gmra.mxu0 %v848
      %v865 = vpop.f32.mrf.mxu0
      %v866 = vadd.f32 %v819, %v865
      %v867 = vpop.f32.mrf.mxu0
      %868 = vdwg.mxu0
      %869 = vmatpush.bf16.msra.mxu0 0
      %870 = vmatpush.bf16.msra.mxu0 0
      %871 = vmatpush.bf16.msra.mxu0 0
      %872 = vmatpush.bf16.msra.mxu0 0
      %873 = vmatpush.bf16.msra.mxu0 0
      %874 = vmatpush.bf16.msra.mxu0 0
      %875 = vmatpush.bf16.msra.mxu0 0
      %876 = vmatpush.bf16.msra.mxu0 %v854
      %877 = vmatmul.bf16.gmra.mxu0 %v848
      %v878 = vpop.f32.mrf.mxu0
      %v879 = vadd.f32 %v832, %v878
      %v880 = vpop.f32.mrf.mxu0
      %881 = vdwg.mxu0
      %v882 = vld [vmem:[#allocation2] sm:$0xff]
      %v883 = vld [vmem:[#allocation2 + $0x8] sm:$0xf]
      %v884 = vld [vmem:[%s433] ss:$4 sm:$0x3]
      %v886 = vperm.slane %v884, 0
      %v887 = vperm.slane %v884, 1
      %v888 = vrot.slane %v887, 4
      %v889 = vsel %vm725, %v886, %v888
      %890 = vrot.lane.b32.xlu0 %v889, 113
      %v891 = vpop.permute.xlu0 %890
      %v892 = vrot.slane %v891, 4
      %v893 = vsel %vm439, %v892, %v891
      %v896 = vmul.f32 %v882, %v893
      %v897 = vmul.f32 %v883, %v892
      %s898 = scalar_lea.vmem %s3, 4
      %v899 = vld [vmem:[%s898] sm:$0x3]
      %902 = vst [vmem:[#allocation1] ss:$2 sm:$0xff] %v896
      %s903 = scalar_lea.vmem [#allocation1], 16
      %904 = vst [vmem:[%s903] ss:$2 sm:$0xff] %v897
      %v905 = vld.sshfl [vmem:[#allocation1] sm:$0xff pattern:$0x75316420]
      %v906 = vld.sshfl [vmem:[#allocation1 + $0x8] sm:$0xff pattern:$0x75316420]
      %v907 = vld.sshfl [vmem:[#allocation1 + $0x10] sm:$0xff pattern:$0x75316420]
      %v911 = vpack.c.bf16 %v905, %v905
      %v912 = vpack.c.bf16 %v906, %v906
      %v913 = vpack.c.bf16 %v907, %v907
      %917 = vrot.lane.b32.xlu0 %v911, 15
      %v918 = vpop.permute.xlu0 %917
      %919 = vrot.lane.b32.xlu0 %v912, 15
      %v920 = vpop.permute.xlu0 %919
      %921 = vrot.lane.b32.xlu0 %v913, 15
      %v922 = vpop.permute.xlu0 %921
      %vm923 = vcmask 121856
      %v924 = vsel %vm923, %v918, %v920
      %v925 = vsel %vm923, %v920, %v922
      %v927 = vsel %vm798, %v899, 0
      %v930 = vsel %vm802, %v924, 0
      %v933 = vsel %vm802, %v925, 0
      %935 = vmatpush.bf16.msra.mxu0 0
      %936 = vmatpush.bf16.msra.mxu0 0
      %937 = vmatpush.bf16.msra.mxu0 0
      %938 = vmatpush.bf16.msra.mxu0 0
      %939 = vmatpush.bf16.msra.mxu0 0
      %940 = vmatpush.bf16.msra.mxu0 0
      %941 = vmatpush.bf16.msra.mxu0 0
      %942 = vmatpush.bf16.msra.mxu0 %v930
      %943 = vmatmul.bf16.gmra.mxu0 %v927
      %v944 = vpop.f32.mrf.mxu0
      %v945 = vadd.f32 0.0, %v944
      %v946 = vpop.f32.mrf.mxu0
      %947 = vdwg.mxu0
      %948 = vmatpush.bf16.msra.mxu0 0
      %949 = vmatpush.bf16.msra.mxu0 0
      %950 = vmatpush.bf16.msra.mxu0 0
      %951 = vmatpush.bf16.msra.mxu0 0
      %952 = vmatpush.bf16.msra.mxu0 0
      %953 = vmatpush.bf16.msra.mxu0 0
      %954 = vmatpush.bf16.msra.mxu0 0
      %955 = vmatpush.bf16.msra.mxu0 %v933
      %956 = vmatmul.bf16.gmra.mxu0 %v927
      %v957 = vpop.f32.mrf.mxu0
      %v958 = vadd.f32 0.0, %v957
      %v959 = vpop.f32.mrf.mxu0
      %960 = vdwg.mxu0
      %v961 = vadd.f32 %v866, %v945
      %v962 = vadd.f32 %v879, %v958
      %v963 = vld [vmem:[#allocation2] sm:$0xff]
      %v964 = vld [vmem:[#allocation2 + $0x8] sm:$0xf]
      %965 = vrot.lane.b32.xlu0 %v744, 127
      %v966 = vpop.permute.xlu0 %965
      %v967 = vrot.slane %v966, 4
      %v968 = vsel %vm424, %v967, %v966
      %v971 = vmul.f32 %v963, %v968
      %v972 = vmul.f32 %v964, %v967
      %s973 = scalar_lea.vmem %s3, 6
      %v974 = vld [vmem:[%s973] sm:$0x3]
      %977 = vst [vmem:[#allocation1] ss:$2 sm:$0xff] %v971
      %s978 = scalar_lea.vmem [#allocation1], 16
      %979 = vst [vmem:[%s978] ss:$2 sm:$0xff] %v972
      %v980 = vld.sshfl [vmem:[#allocation1] sm:$0xff pattern:$0x75316420]
      %v981 = vld.sshfl [vmem:[#allocation1 + $0x8] sm:$0xff pattern:$0x75316420]
      %v982 = vld.sshfl [vmem:[#allocation1 + $0x10] sm:$0xff pattern:$0x75316420]
      %v986 = vpack.c.bf16 %v980, %v980
      %v987 = vpack.c.bf16 %v981, %v981
      %v988 = vpack.c.bf16 %v982, %v982
      %992 = vrot.lane.b32.xlu0 %v986, 1
      %v993 = vpop.permute.xlu0 %992
      %994 = vrot.lane.b32.xlu0 %v987, 1
      %v995 = vpop.permute.xlu0 %994
      %996 = vrot.lane.b32.xlu0 %v988, 1
      %v997 = vpop.permute.xlu0 %996
      %vm998 = vcmask 7168
      %v999 = vsel %vm998, %v993, %v995
      %v1000 = vsel %vm998, %v995, %v997
      %v1002 = vsel %vm798, %v974, 0
      %v1005 = vsel %vm802, %v999, 0
      %v1008 = vsel %vm802, %v1000, 0
      %1010 = vmatpush.bf16.msra.mxu0 0
      %1011 = vmatpush.bf16.msra.mxu0 0
      %1012 = vmatpush.bf16.msra.mxu0 0
      %1013 = vmatpush.bf16.msra.mxu0 0
      %1014 = vmatpush.bf16.msra.mxu0 0
      %1015 = vmatpush.bf16.msra.mxu0 0
      %1016 = vmatpush.bf16.msra.mxu0 0
      %1017 = vmatpush.bf16.msra.mxu0 %v1005
      %1018 = vmatmul.bf16.gmra.mxu0 %v1002
      %v1019 = vpop.f32.mrf.mxu0
      %v1020 = vadd.f32 0.0, %v1019
      %v1021 = vpop.f32.mrf.mxu0
      %1022 = vdwg.mxu0
      %1023 = vmatpush.bf16.msra.mxu0 0
      %1024 = vmatpush.bf16.msra.mxu0 0
      %1025 = vmatpush.bf16.msra.mxu0 0
      %1026 = vmatpush.bf16.msra.mxu0 0
      %1027 = vmatpush.bf16.msra.mxu0 0
      %1028 = vmatpush.bf16.msra.mxu0 0
      %1029 = vmatpush.bf16.msra.mxu0 0
      %1030 = vmatpush.bf16.msra.mxu0 %v1008
      %1031 = vmatmul.bf16.gmra.mxu0 %v1002
      %v1032 = vpop.f32.mrf.mxu0
      %v1033 = vadd.f32 0.0, %v1032
      %v1034 = vpop.f32.mrf.mxu0
      %1035 = vdwg.mxu0
      %v1036 = vadd.f32 %v961, %v1020
      %v1037 = vadd.f32 %v962, %v1033
      %v1038 = vld [vmem:[#allocation2 + $0x4] sm:$0xff]
      %s1039 = scalar_lea.vmem %s3, 8
      %v1040 = vld [vmem:[%s1039] sm:$0x3]
      %1042 = vst [vmem:[#allocation1] ss:$2 sm:$0xff] %v1038
      %v1043 = vld.sshfl [vmem:[#allocation1] sm:$0xff pattern:$0x75316420]
      %v1044 = vld.sshfl [vmem:[#allocation1 + $0x8] sm:$0xff pattern:$0x75316420]
      %v1047 = vpack.c.bf16 %v1043, %v1043
      %v1048 = vpack.c.bf16 %v1044, %v1044
      %v1050 = vsel %vm798, %v1040, 0
      %v1053 = vsel %vm802, %v1047, 0
      %v1056 = vsel %vm802, %v1048, 0
      %1058 = vmatpush.bf16.msra.mxu0 0
      %1059 = vmatpush.bf16.msra.mxu0 0
      %1060 = vmatpush.bf16.msra.mxu0 0
      %1061 = vmatpush.bf16.msra.mxu0 0
      %1062 = vmatpush.bf16.msra.mxu0 0
      %1063 = vmatpush.bf16.msra.mxu0 0
      %1064 = vmatpush.bf16.msra.mxu0 0
      %1065 = vmatpush.bf16.msra.mxu0 %v1053
      %1066 = vmatmul.bf16.gmra.mxu0 %v1050
      %v1067 = vpop.f32.mrf.mxu0
      %v1068 = vadd.f32 0.0, %v1067
      %v1069 = vpop.f32.mrf.mxu0
      %1070 = vdwg.mxu0
      %1071 = vmatpush.bf16.msra.mxu0 0
      %1072 = vmatpush.bf16.msra.mxu0 0
      %1073 = vmatpush.bf16.msra.mxu0 0
      %1074 = vmatpush.bf16.msra.mxu0 0
      %1075 = vmatpush.bf16.msra.mxu0 0
      %1076 = vmatpush.bf16.msra.mxu0 0
      %1077 = vmatpush.bf16.msra.mxu0 0
      %1078 = vmatpush.bf16.msra.mxu0 %v1056
      %1079 = vmatmul.bf16.gmra.mxu0 %v1050
      %v1080 = vpop.f32.mrf.mxu0
      %v1081 = vadd.f32 0.0, %v1080
      %v1082 = vpop.f32.mrf.mxu0
      %1083 = vdwg.mxu0
      %v1084 = vadd.f32 %v1036, %v1068
      %v1085 = vadd.f32 %v1037, %v1081
      %v1086 = vld [vmem:[#allocation2 + $0x4] sm:$0xff]
      %v1087 = vld [vmem:[#allocation2 + $0xc] sm:$0xf]
      %1088 = vrot.lane.b32.xlu0 %v889, 1
      %v1089 = vpop.permute.xlu0 %1088
      %v1090 = vrot.slane %v1089, 4
      %v1091 = vsel %vm551, %v1090, %v1089
      %v1094 = vmul.f32 %v1086, %v1091
      %v1095 = vmul.f32 %v1087, %v1090
      %s1096 = scalar_lea.vmem %s3, 10
      %v1097 = vld [vmem:[%s1096] sm:$0x3]
      %1100 = vst [vmem:[#allocation1] ss:$2 sm:$0xff] %v1094
      %s1101 = scalar_lea.vmem [#allocation1], 16
      %1102 = vst [vmem:[%s1101] ss:$2 sm:$0xff] %v1095
      %v1103 = vld.sshfl [vmem:[#allocation1] sm:$0xff pattern:$0x75316420]
      %v1104 = vld.sshfl [vmem:[#allocation1 + $0x8] sm:$0xff pattern:$0x75316420]
      %v1105 = vld.sshfl [vmem:[#allocation1 + $0x10] sm:$0xff pattern:$0x75316420]
      %v1109 = vpack.c.bf16 %v1103, %v1103
      %v1110 = vpack.c.bf16 %v1104, %v1104
      %v1111 = vpack.c.bf16 %v1105, %v1105
      %1115 = vrot.lane.b32.xlu0 %v1109, 127
      %v1116 = vpop.permute.xlu0 %1115
      %1117 = vrot.lane.b32.xlu0 %v1110, 127
      %v1118 = vpop.permute.xlu0 %1117
      %1119 = vrot.lane.b32.xlu0 %v1111, 127
      %v1120 = vpop.permute.xlu0 %1119
      %vm1121 = vcmask 1039360
      %v1122 = vsel %vm1121, %v1116, %v1118
      %v1123 = vsel %vm1121, %v1118, %v1120
      %v1125 = vsel %vm798, %v1097, 0
      %v1128 = vsel %vm802, %v1122, 0
      %v1131 = vsel %vm802, %v1123, 0
      %1133 = vmatpush.bf16.msra.mxu0 0
      %1134 = vmatpush.bf16.msra.mxu0 0
      %1135 = vmatpush.bf16.msra.mxu0 0
      %1136 = vmatpush.bf16.msra.mxu0 0
      %1137 = vmatpush.bf16.msra.mxu0 0
      %1138 = vmatpush.bf16.msra.mxu0 0
      %1139 = vmatpush.bf16.msra.mxu0 0
      %1140 = vmatpush.bf16.msra.mxu0 %v1128
      %1141 = vmatmul.bf16.gmra.mxu0 %v1125
      %v1142 = vpop.f32.mrf.mxu0
      %v1143 = vadd.f32 0.0, %v1142
      %v1144 = vpop.f32.mrf.mxu0
      %1145 = vdwg.mxu0
      %1146 = vmatpush.bf16.msra.mxu0 0
      %1147 = vmatpush.bf16.msra.mxu0 0
      %1148 = vmatpush.bf16.msra.mxu0 0
      %1149 = vmatpush.bf16.msra.mxu0 0
      %1150 = vmatpush.bf16.msra.mxu0 0
      %1151 = vmatpush.bf16.msra.mxu0 0
      %1152 = vmatpush.bf16.msra.mxu0 0
      %1153 = vmatpush.bf16.msra.mxu0 %v1131
      %1154 = vmatmul.bf16.gmra.mxu0 %v1125
      %v1155 = vpop.f32.mrf.mxu0
      %v1156 = vadd.f32 0.0, %v1155
      %v1157 = vpop.f32.mrf.mxu0
      %1158 = vdwg.mxu0
      %v1159 = vadd.f32 %v1084, %v1143
      %v1160 = vadd.f32 %v1085, %v1156
      %v1161 = vld [vmem:[#allocation2 + $0x4] sm:$0xff]
      %v1162 = vld [vmem:[#allocation2 + $0xc] sm:$0xf]
      %1163 = vrot.lane.b32.xlu0 %v744, 15
      %v1164 = vpop.permute.xlu0 %1163
      %v1165 = vrot.slane %v1164, 4
      %v1166 = vsel %vm593, %v1165, %v1164
      %v1169 = vmul.f32 %v1161, %v1166
      %v1170 = vmul.f32 %v1162, %v1165
      %s1171 = scalar_lea.vmem %s3, 12
      %v1172 = vld [vmem:[%s1171] sm:$0x3]
      %1175 = vst [vmem:[#allocation1] ss:$2 sm:$0xff] %v1169
      %s1176 = scalar_lea.vmem [#allocation1], 16
      %1177 = vst [vmem:[%s1176] ss:$2 sm:$0xff] %v1170
      %v1178 = vld.sshfl [vmem:[#allocation1] sm:$0xff pattern:$0x75316420]
      %v1179 = vld.sshfl [vmem:[#allocation1 + $0x8] sm:$0xff pattern:$0x75316420]
      %v1180 = vld.sshfl [vmem:[#allocation1 + $0x10] sm:$0xff pattern:$0x75316420]
      %v1184 = vpack.c.bf16 %v1178, %v1178
      %v1185 = vpack.c.bf16 %v1179, %v1179
      %v1186 = vpack.c.bf16 %v1180, %v1180
      %1190 = vrot.lane.b32.xlu0 %v1184, 113
      %v1191 = vpop.permute.xlu0 %1190
      %1192 = vrot.lane.b32.xlu0 %v1185, 113
      %v1193 = vpop.permute.xlu0 %1192
      %1194 = vrot.lane.b32.xlu0 %v1186, 113
      %v1195 = vpop.permute.xlu0 %1194
      %vm1196 = vcmask 924672
      %v1197 = vsel %vm1196, %v1191, %v1193
      %v1198 = vsel %vm1196, %v1193, %v1195
      %v1200 = vsel %vm798, %v1172, 0
      %v1203 = vsel %vm802, %v1197, 0
      %v1206 = vsel %vm802, %v1198, 0
      %1208 = vmatpush.bf16.msra.mxu0 0
      %1209 = vmatpush.bf16.msra.mxu0 0
      %1210 = vmatpush.bf16.msra.mxu0 0
      %1211 = vmatpush.bf16.msra.mxu0 0
      %1212 = vmatpush.bf16.msra.mxu0 0
      %1213 = vmatpush.bf16.msra.mxu0 0
      %1214 = vmatpush.bf16.msra.mxu0 0
      %1215 = vmatpush.bf16.msra.mxu0 %v1203
      %1216 = vmatmul.bf16.gmra.mxu0 %v1200
      %v1217 = vpop.f32.mrf.mxu0
      %v1218 = vadd.f32 0.0, %v1217
      %v1219 = vpop.f32.mrf.mxu0
      %1220 = vdwg.mxu0
      %1221 = vmatpush.bf16.msra.mxu0 0
      %1222 = vmatpush.bf16.msra.mxu0 0
      %1223 = vmatpush.bf16.msra.mxu0 0
      %1224 = vmatpush.bf16.msra.mxu0 0
      %1225 = vmatpush.bf16.msra.mxu0 0
      %1226 = vmatpush.bf16.msra.mxu0 0
      %1227 = vmatpush.bf16.msra.mxu0 0
      %1228 = vmatpush.bf16.msra.mxu0 %v1206
      %1229 = vmatmul.bf16.gmra.mxu0 %v1200
      %v1230 = vpop.f32.mrf.mxu0
      %v1231 = vadd.f32 0.0, %v1230
      %v1232 = vpop.f32.mrf.mxu0
      %1233 = vdwg.mxu0
      %v1234 = vadd.f32 %v1159, %v1218
      %v1235 = vadd.f32 %v1160, %v1231
      %v1236 = vld [vmem:[#allocation2 + $0x4] sm:$0xff]
      %v1237 = vld [vmem:[#allocation2 + $0xc] sm:$0xf]
      %s1238 = scalar_lea.vmem %s3, 14
      %v1239 = vld [vmem:[%s1238] sm:$0x3]
      %1242 = vst [vmem:[#allocation1] ss:$2 sm:$0xff] %v1236
      %s1243 = scalar_lea.vmem [#allocation1], 16
      %1244 = vst [vmem:[%s1243] ss:$2 sm:$0xff] %v1237
      %v1245 = vld.sshfl [vmem:[#allocation1] sm:$0xff pattern:$0x75316420]
      %v1246 = vld.sshfl [vmem:[#allocation1 + $0x8] sm:$0xff pattern:$0x75316420]
      %v1247 = vld.sshfl [vmem:[#allocation1 + $0x10] sm:$0xff pattern:$0x75316420]
      %v1251 = vpack.c.bf16 %v1245, %v1245
      %v1252 = vpack.c.bf16 %v1246, %v1246
      %v1253 = vpack.c.bf16 %v1247, %v1247
      %1257 = vrot.lane.b32.xlu0 %v1251, 112
      %v1258 = vpop.permute.xlu0 %1257
      %1259 = vrot.lane.b32.xlu0 %v1252, 112
      %v1260 = vpop.permute.xlu0 %1259
      %1261 = vrot.lane.b32.xlu0 %v1253, 112
      %v1262 = vpop.permute.xlu0 %1261
      %vm1263 = vcmask 916480
      %v1264 = vsel %vm1263, %v1258, %v1260
      %v1265 = vsel %vm1263, %v1260, %v1262
      %v1267 = vsel %vm798, %v1239, 0
      %v1270 = vsel %vm802, %v1264, 0
      %v1273 = vsel %vm802, %v1265, 0
      %1275 = vmatpush.bf16.msra.mxu0 0
      %1276 = vmatpush.bf16.msra.mxu0 0
      %1277 = vmatpush.bf16.msra.mxu0 0
      %1278 = vmatpush.bf16.msra.mxu0 0
      %1279 = vmatpush.bf16.msra.mxu0 0
      %1280 = vmatpush.bf16.msra.mxu0 0
      %1281 = vmatpush.bf16.msra.mxu0 0
      %1282 = vmatpush.bf16.msra.mxu0 %v1270
      %1283 = vmatmul.bf16.gmra.mxu0 %v1267
      %v1284 = vpop.f32.mrf.mxu0
      %v1285 = vadd.f32 0.0, %v1284
      %v1286 = vpop.f32.mrf.mxu0
      %1287 = vdwg.mxu0
      %1288 = vmatpush.bf16.msra.mxu0 0
      %1289 = vmatpush.bf16.msra.mxu0 0
      %1290 = vmatpush.bf16.msra.mxu0 0
      %1291 = vmatpush.bf16.msra.mxu0 0
      %1292 = vmatpush.bf16.msra.mxu0 0
      %1293 = vmatpush.bf16.msra.mxu0 0
      %1294 = vmatpush.bf16.msra.mxu0 0
      %1295 = vmatpush.bf16.msra.mxu0 %v1273
      %1296 = vmatmul.bf16.gmra.mxu0 %v1267
      %v1297 = vpop.f32.mrf.mxu0
      %v1298 = vadd.f32 0.0, %v1297
      %v1299 = vpop.f32.mrf.mxu0
      %1300 = vdwg.mxu0
      %v1301 = vadd.f32 %v1234, %v1285
      %v1302 = vadd.f32 %v1235, %v1298
      %v1303 = vld [vmem:[#allocation2 + $0x4] sm:$0xff]
      %v1304 = vld [vmem:[#allocation2 + $0xc] sm:$0xf]
      %1305 = vrot.lane.b32.xlu0 %v889, 17
      %v1306 = vpop.permute.xlu0 %1305
      %v1307 = vrot.slane %v1306, 4
      %v1308 = vsel %vm670, %v1307, %v1306
      %v1311 = vmul.f32 %v1303, %v1308
      %v1312 = vmul.f32 %v1304, %v1307
      %s1313 = scalar_lea.vmem %s3, 16
      %v1314 = vld [vmem:[%s1313] sm:$0x3]
      %1317 = vst [vmem:[#allocation1] ss:$2 sm:$0xff] %v1311
      %s1318 = scalar_lea.vmem [#allocation1], 16
      %1319 = vst [vmem:[%s1318] ss:$2 sm:$0xff] %v1312
      %v1320 = vld.sshfl [vmem:[#allocation1] sm:$0xff pattern:$0x75316420]
      %v1321 = vld.sshfl [vmem:[#allocation1 + $0x8] sm:$0xff pattern:$0x75316420]
      %v1322 = vld.sshfl [vmem:[#allocation1 + $0x10] sm:$0xff pattern:$0x75316420]
      %v1326 = vpack.c.bf16 %v1320, %v1320
      %v1327 = vpack.c.bf16 %v1321, %v1321
      %v1328 = vpack.c.bf16 %v1322, %v1322
      %1332 = vrot.lane.b32.xlu0 %v1326, 111
      %v1333 = vpop.permute.xlu0 %1332
      %1334 = vrot.lane.b32.xlu0 %v1327, 111
      %v1335 = vpop.permute.xlu0 %1334
      %1336 = vrot.lane.b32.xlu0 %v1328, 111
      %v1337 = vpop.permute.xlu0 %1336
      %vm1338 = vcmask 908288
      %v1339 = vsel %vm1338, %v1333, %v1335
      %v1340 = vsel %vm1338, %v1335, %v1337
      %v1342 = vsel %vm798, %v1314, 0
      %v1345 = vsel %vm802, %v1339, 0
      %v1348 = vsel %vm802, %v1340, 0
      %1350 = vmatpush.bf16.msra.mxu0 0
      %1351 = vmatpush.bf16.msra.mxu0 0
      %1352 = vmatpush.bf16.msra.mxu0 0
      %1353 = vmatpush.bf16.msra.mxu0 0
      %1354 = vmatpush.bf16.msra.mxu0 0
      %1355 = vmatpush.bf16.msra.mxu0 0
      %1356 = vmatpush.bf16.msra.mxu0 0
      %1357 = vmatpush.bf16.msra.mxu0 %v1345
      %1358 = vmatmul.bf16.gmra.mxu0 %v1342
      %v1359 = vpop.f32.mrf.mxu0
      %v1360 = vadd.f32 0.0, %v1359
      %v1361 = vpop.f32.mrf.mxu0
      %1362 = vdwg.mxu0
      %1363 = vmatpush.bf16.msra.mxu0 0
      %1364 = vmatpush.bf16.msra.mxu0 0
      %1365 = vmatpush.bf16.msra.mxu0 0
      %1366 = vmatpush.bf16.msra.mxu0 0
      %1367 = vmatpush.bf16.msra.mxu0 0
      %1368 = vmatpush.bf16.msra.mxu0 0
      %1369 = vmatpush.bf16.msra.mxu0 0
      %1370 = vmatpush.bf16.msra.mxu0 %v1348
      %1371 = vmatmul.bf16.gmra.mxu0 %v1342
      %v1372 = vpop.f32.mrf.mxu0
      %v1373 = vadd.f32 0.0, %v1372
      %v1374 = vpop.f32.mrf.mxu0
      %1375 = vdwg.mxu0
      %v1376 = vadd.f32 %v1301, %v1360
      %v1377 = vadd.f32 %v1302, %v1373
      %v1378 = vld [vmem:[%s4] sm:$0xf]
      %1380 = vset.pattern.permute.xlu0 0
      %1381 = vperm.xlu0 %1380, %v1378
      %v1382 = vpop.permute.xlu0 %1381
      %v1384 = vadd.f32 %v1376, %v1382
      %v1385 = vadd.f32 %v1377, %v1382
      %v1386 = vtanh.pop %v1384
      %v1387 = vtanh.pop %v1385
      %v1390 = vrot.slane %v1387, 4
      %v1391 = vsel %vm725, %v1386, %v1390
      %1393 = vst [vmem:[#allocation2 + $0x4] sm:$0xff] %v1391
      %v1394 = vld [vmem:[#allocation2] sm:$0xff]
      %v1395 = vld [vmem:[#allocation2 + $0x8] sm:$0xf]
      %v1396 = vld [vmem:[%s9] ss:$4 sm:$0x3]
      %v1398 = vperm.slane %v1396, 0
      %v1399 = vperm.slane %v1396, 1
      %v1400 = vrot.slane %v1399, 4
      %v1401 = vsel %vm725, %v1398, %v1400
      %1402 = vrot.lane.b32.xlu0 %v1401, 111
      %v1403 = vpop.permute.xlu0 %1402
      %v1404 = vrot.slane %v1403, 4
      %v1405 = vsel %vm375, %v1404, %v1403
      %v1408 = vmul.f32 %v1394, %v1405
      %v1409 = vmul.f32 %v1395, %v1404
      %v1410 = vld [vmem:[%s5] sm:$0x3]
      %1413 = vst [vmem:[#allocation1] ss:$2 sm:$0xff] %v1408
      %s1414 = scalar_lea.vmem [#allocation1], 16
      %1415 = vst [vmem:[%s1414] ss:$2 sm:$0xff] %v1409
      %v1416 = vld.sshfl [vmem:[#allocation1] sm:$0xff pattern:$0x75316420]
      %v1417 = vld.sshfl [vmem:[#allocation1 + $0x8] sm:$0xff pattern:$0x75316420]
      %v1418 = vld.sshfl [vmem:[#allocation1 + $0x10] sm:$0xff pattern:$0x75316420]
      %v1422 = vpack.c.bf16 %v1416, %v1416
      %v1423 = vpack.c.bf16 %v1417, %v1417
      %v1424 = vpack.c.bf16 %v1418, %v1418
      %v1425 = vld [vmem:[#allocation2] sm:$0xff]
      %v1426 = vld [vmem:[#allocation2 + $0x8] sm:$0xf]
      %s1427 = scalar_lea.vmem %s5, 2
      %v1428 = vld [vmem:[%s1427] sm:$0x3]
      %1431 = vst [vmem:[#allocation1] ss:$2 sm:$0xff] %v1425
      %s1432 = scalar_lea.vmem [#allocation1], 16
      %1433 = vst [vmem:[%s1432] ss:$2 sm:$0xff] %v1426
      %v1434 = vld.sshfl [vmem:[#allocation1] sm:$0xff pattern:$0x75316420]
      %v1435 = vld.sshfl [vmem:[#allocation1 + $0x8] sm:$0xff pattern:$0x75316420]
      %v1436 = vld.sshfl [vmem:[#allocation1 + $0x10] sm:$0xff pattern:$0x75316420]
      %v1440 = vpack.c.bf16 %v1434, %v1434
      %v1441 = vpack.c.bf16 %v1435, %v1435
      %v1442 = vpack.c.bf16 %v1436, %v1436
      %1446 = vrot.lane.b32.xlu0 %v1440, 16
      %v1447 = vpop.permute.xlu0 %1446
      %1448 = vrot.lane.b32.xlu0 %v1441, 16
      %v1449 = vpop.permute.xlu0 %1448
      %1450 = vrot.lane.b32.xlu0 %v1442, 16
      %v1451 = vpop.permute.xlu0 %1450
      %v1452 = vsel %vm795, %v1447, %v1449
      %v1453 = vsel %vm795, %v1449, %v1451
      %v1455 = vsel %vm798, %v1428, 0
      %v1458 = vsel %vm802, %v1452, 0
      %v1461 = vsel %vm802, %v1453, 0
      %1463 = vmatpush.bf16.msra.mxu0 0
      %1464 = vmatpush.bf16.msra.mxu0 0
      %1465 = vmatpush.bf16.msra.mxu0 0
      %1466 = vmatpush.bf16.msra.mxu0 0
      %1467 = vmatpush.bf16.msra.mxu0 0
      %1468 = vmatpush.bf16.msra.mxu0 0
      %1469 = vmatpush.bf16.msra.mxu0 0
      %1470 = vmatpush.bf16.msra.mxu0 %v1458
      %1471 = vmatmul.bf16.gmra.mxu0 %v1455
      %v1472 = vpop.f32.mrf.mxu0
      %v1473 = vadd.f32 0.0, %v1472
      %v1474 = vpop.f32.mrf.mxu0
      %1475 = vdwg.mxu0
      %1476 = vmatpush.bf16.msra.mxu0 0
      %1477 = vmatpush.bf16.msra.mxu0 0
      %1478 = vmatpush.bf16.msra.mxu0 0
      %1479 = vmatpush.bf16.msra.mxu0 0
      %1480 = vmatpush.bf16.msra.mxu0 0
      %1481 = vmatpush.bf16.msra.mxu0 0
      %1482 = vmatpush.bf16.msra.mxu0 0
      %1483 = vmatpush.bf16.msra.mxu0 %v1461
      %1484 = vmatmul.bf16.gmra.mxu0 %v1455
      %v1485 = vpop.f32.mrf.mxu0
      %v1486 = vadd.f32 0.0, %v1485
      %v1487 = vpop.f32.mrf.mxu0
      %1488 = vdwg.mxu0
      %1492 = vrot.lane.b32.xlu0 %v1422, 17
      %v1493 = vpop.permute.xlu0 %1492
      %1494 = vrot.lane.b32.xlu0 %v1423, 17
      %v1495 = vpop.permute.xlu0 %1494
      %1496 = vrot.lane.b32.xlu0 %v1424, 17
      %v1497 = vpop.permute.xlu0 %1496
      %v1498 = vsel %vm844, %v1493, %v1495
      %v1499 = vsel %vm844, %v1495, %v1497
      %v1501 = vsel %vm798, %v1410, 0
      %v1504 = vsel %vm802, %v1498, 0
      %v1507 = vsel %vm802, %v1499, 0
      %1509 = vmatpush.bf16.msra.mxu0 0
      %1510 = vmatpush.bf16.msra.mxu0 0
      %1511 = vmatpush.bf16.msra.mxu0 0
      %1512 = vmatpush.bf16.msra.mxu0 0
      %1513 = vmatpush.bf16.msra.mxu0 0
      %1514 = vmatpush.bf16.msra.mxu0 0
      %1515 = vmatpush.bf16.msra.mxu0 0
      %1516 = vmatpush.bf16.msra.mxu0 %v1504
      %1517 = vmatmul.bf16.gmra.mxu0 %v1501
      %v1518 = vpop.f32.mrf.mxu0
      %v1519 = vadd.f32 %v1473, %v1518
      %v1520 = vpop.f32.mrf.mxu0
      %1521 = vdwg.mxu0
      %1522 = vmatpush.bf16.msra.mxu0 0
      %1523 = vmatpush.bf16.msra.mxu0 0
      %1524 = vmatpush.bf16.msra.mxu0 0
      %1525 = vmatpush.bf16.msra.mxu0 0
      %1526 = vmatpush.bf16.msra.mxu0 0
      %1527 = vmatpush.bf16.msra.mxu0 0
      %1528 = vmatpush.bf16.msra.mxu0 0
      %1529 = vmatpush.bf16.msra.mxu0 %v1507
      %1530 = vmatmul.bf16.gmra.mxu0 %v1501
      %v1531 = vpop.f32.mrf.mxu0
      %v1532 = vadd.f32 %v1486, %v1531
      %v1533 = vpop.f32.mrf.mxu0
      %1534 = vdwg.mxu0
      %v1535 = vld [vmem:[#allocation2] sm:$0xff]
      %v1536 = vld [vmem:[#allocation2 + $0x8] sm:$0xf]
      %v1537 = vld [vmem:[%s433] ss:$4 sm:$0x3]
      %v1539 = vperm.slane %v1537, 0
      %v1540 = vperm.slane %v1537, 1
      %v1541 = vrot.slane %v1540, 4
      %v1542 = vsel %vm725, %v1539, %v1541
      %1543 = vrot.lane.b32.xlu0 %v1542, 113
      %v1544 = vpop.permute.xlu0 %1543
      %v1545 = vrot.slane %v1544, 4
      %v1546 = vsel %vm439, %v1545, %v1544
      %v1549 = vmul.f32 %v1535, %v1546
      %v1550 = vmul.f32 %v1536, %v1545
      %s1551 = scalar_lea.vmem %s5, 4
      %v1552 = vld [vmem:[%s1551] sm:$0x3]
      %1555 = vst [vmem:[#allocation1] ss:$2 sm:$0xff] %v1549
      %s1556 = scalar_lea.vmem [#allocation1], 16
      %1557 = vst [vmem:[%s1556] ss:$2 sm:$0xff] %v1550
      %v1558 = vld.sshfl [vmem:[#allocation1] sm:$0xff pattern:$0x75316420]
      %v1559 = vld.sshfl [vmem:[#allocation1 + $0x8] sm:$0xff pattern:$0x75316420]
      %v1560 = vld.sshfl [vmem:[#allocation1 + $0x10] sm:$0xff pattern:$0x75316420]
      %v1564 = vpack.c.bf16 %v1558, %v1558
      %v1565 = vpack.c.bf16 %v1559, %v1559
      %v1566 = vpack.c.bf16 %v1560, %v1560
      %1570 = vrot.lane.b32.xlu0 %v1564, 15
      %v1571 = vpop.permute.xlu0 %1570
      %1572 = vrot.lane.b32.xlu0 %v1565, 15
      %v1573 = vpop.permute.xlu0 %1572
      %1574 = vrot.lane.b32.xlu0 %v1566, 15
      %v1575 = vpop.permute.xlu0 %1574
      %v1576 = vsel %vm923, %v1571, %v1573
      %v1577 = vsel %vm923, %v1573, %v1575
      %v1579 = vsel %vm798, %v1552, 0
      %v1582 = vsel %vm802, %v1576, 0
      %v1585 = vsel %vm802, %v1577, 0
      %1587 = vmatpush.bf16.msra.mxu0 0
      %1588 = vmatpush.bf16.msra.mxu0 0
      %1589 = vmatpush.bf16.msra.mxu0 0
      %1590 = vmatpush.bf16.msra.mxu0 0
      %1591 = vmatpush.bf16.msra.mxu0 0
      %1592 = vmatpush.bf16.msra.mxu0 0
      %1593 = vmatpush.bf16.msra.mxu0 0
      %1594 = vmatpush.bf16.msra.mxu0 %v1582
      %1595 = vmatmul.bf16.gmra.mxu0 %v1579
      %v1596 = vpop.f32.mrf.mxu0
      %v1597 = vadd.f32 0.0, %v1596
      %v1598 = vpop.f32.mrf.mxu0
      %1599 = vdwg.mxu0
      %1600 = vmatpush.bf16.msra.mxu0 0
      %1601 = vmatpush.bf16.msra.mxu0 0
      %1602 = vmatpush.bf16.msra.mxu0 0
      %1603 = vmatpush.bf16.msra.mxu0 0
      %1604 = vmatpush.bf16.msra.mxu0 0
      %1605 = vmatpush.bf16.msra.mxu0 0
      %1606 = vmatpush.bf16.msra.mxu0 0
      %1607 = vmatpush.bf16.msra.mxu0 %v1585
      %1608 = vmatmul.bf16.gmra.mxu0 %v1579
      %v1609 = vpop.f32.mrf.mxu0
      %v1610 = vadd.f32 0.0, %v1609
      %v1611 = vpop.f32.mrf.mxu0
      %1612 = vdwg.mxu0
      %v1613 = vadd.f32 %v1519, %v1597
      %v1614 = vadd.f32 %v1532, %v1610
      %v1615 = vld [vmem:[#allocation2] sm:$0xff]
      %v1616 = vld [vmem:[#allocation2 + $0x8] sm:$0xf]
      %1617 = vrot.lane.b32.xlu0 %v1401, 127
      %v1618 = vpop.permute.xlu0 %1617
      %v1619 = vrot.slane %v1618, 4
      %v1620 = vsel %vm424, %v1619, %v1618
      %v1623 = vmul.f32 %v1615, %v1620
      %v1624 = vmul.f32 %v1616, %v1619
      %s1625 = scalar_lea.vmem %s5, 6
      %v1626 = vld [vmem:[%s1625] sm:$0x3]
      %1629 = vst [vmem:[#allocation1] ss:$2 sm:$0xff] %v1623
      %s1630 = scalar_lea.vmem [#allocation1], 16
      %1631 = vst [vmem:[%s1630] ss:$2 sm:$0xff] %v1624
      %v1632 = vld.sshfl [vmem:[#allocation1] sm:$0xff pattern:$0x75316420]
      %v1633 = vld.sshfl [vmem:[#allocation1 + $0x8] sm:$0xff pattern:$0x75316420]
      %v1634 = vld.sshfl [vmem:[#allocation1 + $0x10] sm:$0xff pattern:$0x75316420]
      %v1638 = vpack.c.bf16 %v1632, %v1632
      %v1639 = vpack.c.bf16 %v1633, %v1633
      %v1640 = vpack.c.bf16 %v1634, %v1634
      %1644 = vrot.lane.b32.xlu0 %v1638, 1
      %v1645 = vpop.permute.xlu0 %1644
      %1646 = vrot.lane.b32.xlu0 %v1639, 1
      %v1647 = vpop.permute.xlu0 %1646
      %1648 = vrot.lane.b32.xlu0 %v1640, 1
      %v1649 = vpop.permute.xlu0 %1648
      %v1650 = vsel %vm998, %v1645, %v1647
      %v1651 = vsel %vm998, %v1647, %v1649
      %v1653 = vsel %vm798, %v1626, 0
      %v1656 = vsel %vm802, %v1650, 0
      %v1659 = vsel %vm802, %v1651, 0
      %1661 = vmatpush.bf16.msra.mxu0 0
      %1662 = vmatpush.bf16.msra.mxu0 0
      %1663 = vmatpush.bf16.msra.mxu0 0
      %1664 = vmatpush.bf16.msra.mxu0 0
      %1665 = vmatpush.bf16.msra.mxu0 0
      %1666 = vmatpush.bf16.msra.mxu0 0
      %1667 = vmatpush.bf16.msra.mxu0 0
      %1668 = vmatpush.bf16.msra.mxu0 %v1656
      %1669 = vmatmul.bf16.gmra.mxu0 %v1653
      %v1670 = vpop.f32.mrf.mxu0
      %v1671 = vadd.f32 0.0, %v1670
      %v1672 = vpop.f32.mrf.mxu0
      %1673 = vdwg.mxu0
      %1674 = vmatpush.bf16.msra.mxu0 0
      %1675 = vmatpush.bf16.msra.mxu0 0
      %1676 = vmatpush.bf16.msra.mxu0 0
      %1677 = vmatpush.bf16.msra.mxu0 0
      %1678 = vmatpush.bf16.msra.mxu0 0
      %1679 = vmatpush.bf16.msra.mxu0 0
      %1680 = vmatpush.bf16.msra.mxu0 0
      %1681 = vmatpush.bf16.msra.mxu0 %v1659
      %1682 = vmatmul.bf16.gmra.mxu0 %v1653
      %v1683 = vpop.f32.mrf.mxu0
      %v1684 = vadd.f32 0.0, %v1683
      %v1685 = vpop.f32.mrf.mxu0
      %1686 = vdwg.mxu0
      %v1687 = vadd.f32 %v1613, %v1671
      %v1688 = vadd.f32 %v1614, %v1684
      %v1689 = vld [vmem:[#allocation2 + $0x4] sm:$0xff]
      %s1690 = scalar_lea.vmem %s5, 8
      %v1691 = vld [vmem:[%s1690] sm:$0x3]
      %1693 = vst [vmem:[#allocation1] ss:$2 sm:$0xff] %v1689
      %v1694 = vld.sshfl [vmem:[#allocation1] sm:$0xff pattern:$0x75316420]
      %v1695 = vld.sshfl [vmem:[#allocation1 + $0x8] sm:$0xff pattern:$0x75316420]
      %v1698 = vpack.c.bf16 %v1694, %v1694
      %v1699 = vpack.c.bf16 %v1695, %v1695
      %v1701 = vsel %vm798, %v1691, 0
      %v1704 = vsel %vm802, %v1698, 0
      %v1707 = vsel %vm802, %v1699, 0
      %1709 = vmatpush.bf16.msra.mxu0 0
      %1710 = vmatpush.bf16.msra.mxu0 0
      %1711 = vmatpush.bf16.msra.mxu0 0
      %1712 = vmatpush.bf16.msra.mxu0 0
      %1713 = vmatpush.bf16.msra.mxu0 0
      %1714 = vmatpush.bf16.msra.mxu0 0
      %1715 = vmatpush.bf16.msra.mxu0 0
      %1716 = vmatpush.bf16.msra.mxu0 %v1704
      %1717 = vmatmul.bf16.gmra.mxu0 %v1701
      %v1718 = vpop.f32.mrf.mxu0
      %v1719 = vadd.f32 0.0, %v1718
      %v1720 = vpop.f32.mrf.mxu0
      %1721 = vdwg.mxu0
      %1722 = vmatpush.bf16.msra.mxu0 0
      %1723 = vmatpush.bf16.msra.mxu0 0
      %1724 = vmatpush.bf16.msra.mxu0 0
      %1725 = vmatpush.bf16.msra.mxu0 0
      %1726 = vmatpush.bf16.msra.mxu0 0
      %1727 = vmatpush.bf16.msra.mxu0 0
      %1728 = vmatpush.bf16.msra.mxu0 0
      %1729 = vmatpush.bf16.msra.mxu0 %v1707
      %1730 = vmatmul.bf16.gmra.mxu0 %v1701
      %v1731 = vpop.f32.mrf.mxu0
      %v1732 = vadd.f32 0.0, %v1731
      %v1733 = vpop.f32.mrf.mxu0
      %1734 = vdwg.mxu0
      %v1735 = vadd.f32 %v1687, %v1719
      %v1736 = vadd.f32 %v1688, %v1732
      %v1737 = vld [vmem:[#allocation2 + $0x4] sm:$0xff]
      %v1738 = vld [vmem:[#allocation2 + $0xc] sm:$0xf]
      %1739 = vrot.lane.b32.xlu0 %v1542, 1
      %v1740 = vpop.permute.xlu0 %1739
      %v1741 = vrot.slane %v1740, 4
      %v1742 = vsel %vm551, %v1741, %v1740
      %v1745 = vmul.f32 %v1737, %v1742
      %v1746 = vmul.f32 %v1738, %v1741
      %s1747 = scalar_lea.vmem %s5, 10
      %v1748 = vld [vmem:[%s1747] sm:$0x3]
      %1751 = vst [vmem:[#allocation1] ss:$2 sm:$0xff] %v1745
      %s1752 = scalar_lea.vmem [#allocation1], 16
      %1753 = vst [vmem:[%s1752] ss:$2 sm:$0xff] %v1746
      %v1754 = vld.sshfl [vmem:[#allocation1] sm:$0xff pattern:$0x75316420]
      %v1755 = vld.sshfl [vmem:[#allocation1 + $0x8] sm:$0xff pattern:$0x75316420]
      %v1756 = vld.sshfl [vmem:[#allocation1 + $0x10] sm:$0xff pattern:$0x75316420]
      %v1760 = vpack.c.bf16 %v1754, %v1754
      %v1761 = vpack.c.bf16 %v1755, %v1755
      %v1762 = vpack.c.bf16 %v1756, %v1756
      %1766 = vrot.lane.b32.xlu0 %v1760, 127
      %v1767 = vpop.permute.xlu0 %1766
      %1768 = vrot.lane.b32.xlu0 %v1761, 127
      %v1769 = vpop.permute.xlu0 %1768
      %1770 = vrot.lane.b32.xlu0 %v1762, 127
      %v1771 = vpop.permute.xlu0 %1770
      %v1772 = vsel %vm1121, %v1767, %v1769
      %v1773 = vsel %vm1121, %v1769, %v1771
      %v1775 = vsel %vm798, %v1748, 0
      %v1778 = vsel %vm802, %v1772, 0
      %v1781 = vsel %vm802, %v1773, 0
      %1783 = vmatpush.bf16.msra.mxu0 0
      %1784 = vmatpush.bf16.msra.mxu0 0
      %1785 = vmatpush.bf16.msra.mxu0 0
      %1786 = vmatpush.bf16.msra.mxu0 0
      %1787 = vmatpush.bf16.msra.mxu0 0
      %1788 = vmatpush.bf16.msra.mxu0 0
      %1789 = vmatpush.bf16.msra.mxu0 0
      %1790 = vmatpush.bf16.msra.mxu0 %v1778
      %1791 = vmatmul.bf16.gmra.mxu0 %v1775
      %v1792 = vpop.f32.mrf.mxu0
      %v1793 = vadd.f32 0.0, %v1792
      %v1794 = vpop.f32.mrf.mxu0
      %1795 = vdwg.mxu0
      %1796 = vmatpush.bf16.msra.mxu0 0
      %1797 = vmatpush.bf16.msra.mxu0 0
      %1798 = vmatpush.bf16.msra.mxu0 0
      %1799 = vmatpush.bf16.msra.mxu0 0
      %1800 = vmatpush.bf16.msra.mxu0 0
      %1801 = vmatpush.bf16.msra.mxu0 0
      %1802 = vmatpush.bf16.msra.mxu0 0
      %1803 = vmatpush.bf16.msra.mxu0 %v1781
      %1804 = vmatmul.bf16.gmra.mxu0 %v1775
      %v1805 = vpop.f32.mrf.mxu0
      %v1806 = vadd.f32 0.0, %v1805
      %v1807 = vpop.f32.mrf.mxu0
      %1808 = vdwg.mxu0
      %v1809 = vadd.f32 %v1735, %v1793
      %v1810 = vadd.f32 %v1736, %v1806
      %v1811 = vld [vmem:[#allocation2 + $0x4] sm:$0xff]
      %v1812 = vld [vmem:[#allocation2 + $0xc] sm:$0xf]
      %1813 = vrot.lane.b32.xlu0 %v1401, 15
      %v1814 = vpop.permute.xlu0 %1813
      %v1815 = vrot.slane %v1814, 4
      %v1816 = vsel %vm593, %v1815, %v1814
      %v1819 = vmul.f32 %v1811, %v1816
      %v1820 = vmul.f32 %v1812, %v1815
      %s1821 = scalar_lea.vmem %s5, 12
      %v1822 = vld [vmem:[%s1821] sm:$0x3]
      %1825 = vst [vmem:[#allocation1] ss:$2 sm:$0xff] %v1819
      %s1826 = scalar_lea.vmem [#allocation1], 16
      %1827 = vst [vmem:[%s1826] ss:$2 sm:$0xff] %v1820
      %v1828 = vld.sshfl [vmem:[#allocation1] sm:$0xff pattern:$0x75316420]
      %v1829 = vld.sshfl [vmem:[#allocation1 + $0x8] sm:$0xff pattern:$0x75316420]
      %v1830 = vld.sshfl [vmem:[#allocation1 + $0x10] sm:$0xff pattern:$0x75316420]
      %v1834 = vpack.c.bf16 %v1828, %v1828
      %v1835 = vpack.c.bf16 %v1829, %v1829
      %v1836 = vpack.c.bf16 %v1830, %v1830
      %1840 = vrot.lane.b32.xlu0 %v1834, 113
      %v1841 = vpop.permute.xlu0 %1840
      %1842 = vrot.lane.b32.xlu0 %v1835, 113
      %v1843 = vpop.permute.xlu0 %1842
      %1844 = vrot.lane.b32.xlu0 %v1836, 113
      %v1845 = vpop.permute.xlu0 %1844
      %v1846 = vsel %vm1196, %v1841, %v1843
      %v1847 = vsel %vm1196, %v1843, %v1845
      %v1849 = vsel %vm798, %v1822, 0
      %v1852 = vsel %vm802, %v1846, 0
      %v1855 = vsel %vm802, %v1847, 0
      %1857 = vmatpush.bf16.msra.mxu0 0
      %1858 = vmatpush.bf16.msra.mxu0 0
      %1859 = vmatpush.bf16.msra.mxu0 0
      %1860 = vmatpush.bf16.msra.mxu0 0
      %1861 = vmatpush.bf16.msra.mxu0 0
      %1862 = vmatpush.bf16.msra.mxu0 0
      %1863 = vmatpush.bf16.msra.mxu0 0
      %1864 = vmatpush.bf16.msra.mxu0 %v1852
      %1865 = vmatmul.bf16.gmra.mxu0 %v1849
      %v1866 = vpop.f32.mrf.mxu0
      %v1867 = vadd.f32 0.0, %v1866
      %v1868 = vpop.f32.mrf.mxu0
      %1869 = vdwg.mxu0
      %1870 = vmatpush.bf16.msra.mxu0 0
      %1871 = vmatpush.bf16.msra.mxu0 0
      %1872 = vmatpush.bf16.msra.mxu0 0
      %1873 = vmatpush.bf16.msra.mxu0 0
      %1874 = vmatpush.bf16.msra.mxu0 0
      %1875 = vmatpush.bf16.msra.mxu0 0
      %1876 = vmatpush.bf16.msra.mxu0 0
      %1877 = vmatpush.bf16.msra.mxu0 %v1855
      %1878 = vmatmul.bf16.gmra.mxu0 %v1849
      %v1879 = vpop.f32.mrf.mxu0
      %v1880 = vadd.f32 0.0, %v1879
      %v1881 = vpop.f32.mrf.mxu0
      %1882 = vdwg.mxu0
      %v1883 = vadd.f32 %v1809, %v1867
      %v1884 = vadd.f32 %v1810, %v1880
      %v1885 = vld [vmem:[#allocation2 + $0x4] sm:$0xff]
      %v1886 = vld [vmem:[#allocation2 + $0xc] sm:$0xf]
      %s1887 = scalar_lea.vmem %s5, 14
      %v1888 = vld [vmem:[%s1887] sm:$0x3]
      %1891 = vst [vmem:[#allocation1] ss:$2 sm:$0xff] %v1885
      %s1892 = scalar_lea.vmem [#allocation1], 16
      %1893 = vst [vmem:[%s1892] ss:$2 sm:$0xff] %v1886
      %v1894 = vld.sshfl [vmem:[#allocation1] sm:$0xff pattern:$0x75316420]
      %v1895 = vld.sshfl [vmem:[#allocation1 + $0x8] sm:$0xff pattern:$0x75316420]
      %v1896 = vld.sshfl [vmem:[#allocation1 + $0x10] sm:$0xff pattern:$0x75316420]
      %v1900 = vpack.c.bf16 %v1894, %v1894
      %v1901 = vpack.c.bf16 %v1895, %v1895
      %v1902 = vpack.c.bf16 %v1896, %v1896
      %1906 = vrot.lane.b32.xlu0 %v1900, 112
      %v1907 = vpop.permute.xlu0 %1906
      %1908 = vrot.lane.b32.xlu0 %v1901, 112
      %v1909 = vpop.permute.xlu0 %1908
      %1910 = vrot.lane.b32.xlu0 %v1902, 112
      %v1911 = vpop.permute.xlu0 %1910
      %v1912 = vsel %vm1263, %v1907, %v1909
      %v1913 = vsel %vm1263, %v1909, %v1911
      %v1915 = vsel %vm798, %v1888, 0
      %v1918 = vsel %vm802, %v1912, 0
      %v1921 = vsel %vm802, %v1913, 0
      %1923 = vmatpush.bf16.msra.mxu0 0
      %1924 = vmatpush.bf16.msra.mxu0 0
      %1925 = vmatpush.bf16.msra.mxu0 0
      %1926 = vmatpush.bf16.msra.mxu0 0
      %1927 = vmatpush.bf16.msra.mxu0 0
      %1928 = vmatpush.bf16.msra.mxu0 0
      %1929 = vmatpush.bf16.msra.mxu0 0
      %1930 = vmatpush.bf16.msra.mxu0 %v1918
      %1931 = vmatmul.bf16.gmra.mxu0 %v1915
      %v1932 = vpop.f32.mrf.mxu0
      %v1933 = vadd.f32 0.0, %v1932
      %v1934 = vpop.f32.mrf.mxu0
      %1935 = vdwg.mxu0
      %1936 = vmatpush.bf16.msra.mxu0 0
      %1937 = vmatpush.bf16.msra.mxu0 0
      %1938 = vmatpush.bf16.msra.mxu0 0
      %1939 = vmatpush.bf16.msra.mxu0 0
      %1940 = vmatpush.bf16.msra.mxu0 0
      %1941 = vmatpush.bf16.msra.mxu0 0
      %1942 = vmatpush.bf16.msra.mxu0 0
      %1943 = vmatpush.bf16.msra.mxu0 %v1921
      %1944 = vmatmul.bf16.gmra.mxu0 %v1915
      %v1945 = vpop.f32.mrf.mxu0
      %v1946 = vadd.f32 0.0, %v1945
      %v1947 = vpop.f32.mrf.mxu0
      %1948 = vdwg.mxu0
      %v1949 = vadd.f32 %v1883, %v1933
      %v1950 = vadd.f32 %v1884, %v1946
      %v1951 = vld [vmem:[#allocation2 + $0x4] sm:$0xff]
      %v1952 = vld [vmem:[#allocation2 + $0xc] sm:$0xf]
      %1953 = vrot.lane.b32.xlu0 %v1542, 17
      %v1954 = vpop.permute.xlu0 %1953
      %v1955 = vrot.slane %v1954, 4
      %v1956 = vsel %vm670, %v1955, %v1954
      %v1959 = vmul.f32 %v1951, %v1956
      %v1960 = vmul.f32 %v1952, %v1955
      %s1961 = scalar_lea.vmem %s5, 16
      %v1962 = vld [vmem:[%s1961] sm:$0x3]
      %1965 = vst [vmem:[#allocation1] ss:$2 sm:$0xff] %v1959
      %s1966 = scalar_lea.vmem [#allocation1], 16
      %1967 = vst [vmem:[%s1966] ss:$2 sm:$0xff] %v1960
      %v1968 = vld.sshfl [vmem:[#allocation1] sm:$0xff pattern:$0x75316420]
      %v1969 = vld.sshfl [vmem:[#allocation1 + $0x8] sm:$0xff pattern:$0x75316420]
      %v1970 = vld.sshfl [vmem:[#allocation1 + $0x10] sm:$0xff pattern:$0x75316420]
      %v1974 = vpack.c.bf16 %v1968, %v1968
      %v1975 = vpack.c.bf16 %v1969, %v1969
      %v1976 = vpack.c.bf16 %v1970, %v1970
      %1980 = vrot.lane.b32.xlu0 %v1974, 111
      %v1981 = vpop.permute.xlu0 %1980
      %1982 = vrot.lane.b32.xlu0 %v1975, 111
      %v1983 = vpop.permute.xlu0 %1982
      %1984 = vrot.lane.b32.xlu0 %v1976, 111
      %v1985 = vpop.permute.xlu0 %1984
      %v1986 = vsel %vm1338, %v1981, %v1983
      %v1987 = vsel %vm1338, %v1983, %v1985
      %v1989 = vsel %vm798, %v1962, 0
      %v1992 = vsel %vm802, %v1986, 0
      %v1995 = vsel %vm802, %v1987, 0
      %1997 = vmatpush.bf16.msra.mxu0 0
      %1998 = vmatpush.bf16.msra.mxu0 0
      %1999 = vmatpush.bf16.msra.mxu0 0
      %2000 = vmatpush.bf16.msra.mxu0 0
      %2001 = vmatpush.bf16.msra.mxu0 0
      %2002 = vmatpush.bf16.msra.mxu0 0
      %2003 = vmatpush.bf16.msra.mxu0 0
      %2004 = vmatpush.bf16.msra.mxu0 %v1992
      %2005 = vmatmul.bf16.gmra.mxu0 %v1989
      %v2006 = vpop.f32.mrf.mxu0
      %v2007 = vadd.f32 0.0, %v2006
      %v2008 = vpop.f32.mrf.mxu0
      %2009 = vdwg.mxu0
      %2010 = vmatpush.bf16.msra.mxu0 0
      %2011 = vmatpush.bf16.msra.mxu0 0
      %2012 = vmatpush.bf16.msra.mxu0 0
      %2013 = vmatpush.bf16.msra.mxu0 0
      %2014 = vmatpush.bf16.msra.mxu0 0
      %2015 = vmatpush.bf16.msra.mxu0 0
      %2016 = vmatpush.bf16.msra.mxu0 0
      %2017 = vmatpush.bf16.msra.mxu0 %v1995
      %2018 = vmatmul.bf16.gmra.mxu0 %v1989
      %v2019 = vpop.f32.mrf.mxu0
      %v2020 = vadd.f32 0.0, %v2019
      %v2021 = vpop.f32.mrf.mxu0
      %2022 = vdwg.mxu0
      %v2023 = vadd.f32 %v1949, %v2007
      %v2024 = vadd.f32 %v1950, %v2020
      %v2025 = vld [vmem:[%s6] sm:$0xf]
      %2027 = vset.pattern.permute.xlu0 0
      %2028 = vperm.xlu0 %2027, %v2025
      %v2029 = vpop.permute.xlu0 %2028
      %v2031 = vadd.f32 %v2023, %v2029
      %v2032 = vadd.f32 %v2024, %v2029
      %v2033 = vtanh.pop %v2031
      %v2034 = vtanh.pop %v2032
      %v2037 = vrot.slane %v2034, 4
      %v2038 = vsel %vm725, %v2033, %v2037
      %2040 = vst [vmem:[#allocation2 + $0x4] sm:$0xff] %v2038
      %v2041 = vld [vmem:[#allocation2] sm:$0xff]
      %v2042 = vld [vmem:[#allocation2 + $0x8] sm:$0xf]
      %v2043 = vld [vmem:[%s9] ss:$4 sm:$0x3]
      %v2045 = vperm.slane %v2043, 0
      %v2046 = vperm.slane %v2043, 1
      %v2047 = vrot.slane %v2046, 4
      %v2048 = vsel %vm725, %v2045, %v2047
      %2049 = vrot.lane.b32.xlu0 %v2048, 111
      %v2050 = vpop.permute.xlu0 %2049
      %v2051 = vrot.slane %v2050, 4
      %v2052 = vsel %vm375, %v2051, %v2050
      %v2055 = vmul.f32 %v2041, %v2052
      %v2056 = vmul.f32 %v2042, %v2051
      %v2057 = vld [vmem:[%s7] sm:$0x1]
      %s2058 = scalar_lea.vmem %s7, 1
      %v2059 = vld [vmem:[%s2058] sm:$0x1]
      %2062 = vst [vmem:[#allocation1] ss:$2 sm:$0xff] %v2041
      %s2063 = scalar_lea.vmem [#allocation1], 16
      %2064 = vst [vmem:[%s2063] ss:$2 sm:$0xff] %v2042
      %v2065 = vld.sshfl [vmem:[#allocation1] sm:$0xff pattern:$0x75316420]
      %v2066 = vld.sshfl [vmem:[#allocation1 + $0x8] sm:$0xff pattern:$0x75316420]
      %v2067 = vld.sshfl [vmem:[#allocation1 + $0x10] sm:$0xff pattern:$0x75316420]
      %2068 = vrot.lane.b32.xlu0 %v2065, 16
      %v2069 = vpop.permute.xlu0 %2068
      %2070 = vrot.lane.b32.xlu0 %v2066, 16
      %v2071 = vpop.permute.xlu0 %2070
      %2072 = vrot.lane.b32.xlu0 %v2067, 16
      %v2073 = vpop.permute.xlu0 %2072
      %vm2074 = vcmask 130048
      %v2075 = vsel %vm2074, %v2069, %v2071
      %v2076 = vsel %vm2074, %v2071, %v2073
      %v2078 = vsel %vm798, %v2059, 0
      %v2080 = vsel %vm725, %v2075, 0
      %v2082 = vsel %vm725, %v2076, 0
      %2084 = vmatpush.msra.mxu0 0.0
      %2085 = vmatpush.msra.mxu0 0.0
      %2086 = vmatpush.msra.mxu0 0.0
      %2087 = vmatpush.msra.mxu0 0.0
      %2088 = vmatpush.msra.mxu0 0.0
      %2089 = vmatpush.msra.mxu0 0.0
      %2090 = vmatpush.msra.mxu0 0.0
      %2091 = vmatpush.msra.mxu0 0.0
      %2092 = vmatpush.msra.mxu0 0.0
      %2093 = vmatpush.msra.mxu0 0.0
      %2094 = vmatpush.msra.mxu0 0.0
      %2095 = vmatpush.msra.mxu0 0.0
      %2096 = vmatpush.msra.mxu0 0.0
      %2097 = vmatpush.msra.mxu0 0.0
      %2098 = vmatpush.msra.mxu0 0.0
      %2099 = vmatpush.msra.mxu0 %v2080
      %2100 = vmatmul.f32.gmra.mxu0 %v2078
      %v2101 = vpop.f32.mrf.mxu0
      %v2102 = vadd.f32 0.0, %v2101
      %2103 = vdwg.mxu0
      %2104 = vmatpush.msra.mxu0 0.0
      %2105 = vmatpush.msra.mxu0 0.0
      %2106 = vmatpush.msra.mxu0 0.0
      %2107 = vmatpush.msra.mxu0 0.0
      %2108 = vmatpush.msra.mxu0 0.0
      %2109 = vmatpush.msra.mxu0 0.0
      %2110 = vmatpush.msra.mxu0 0.0
      %2111 = vmatpush.msra.mxu0 0.0
      %2112 = vmatpush.msra.mxu0 0.0
      %2113 = vmatpush.msra.mxu0 0.0
      %2114 = vmatpush.msra.mxu0 0.0
      %2115 = vmatpush.msra.mxu0 0.0
      %2116 = vmatpush.msra.mxu0 0.0
      %2117 = vmatpush.msra.mxu0 0.0
      %2118 = vmatpush.msra.mxu0 0.0
      %2119 = vmatpush.msra.mxu0 %v2082
      %2120 = vmatmul.f32.gmra.mxu0 %v2078
      %v2121 = vpop.f32.mrf.mxu0
      %v2122 = vadd.f32 0.0, %v2121
      %2123 = vdwg.mxu0
      %2126 = vst [vmem:[#allocation1] ss:$2 sm:$0xff] %v2055
      %s2127 = scalar_lea.vmem [#allocation1], 16
      %2128 = vst [vmem:[%s2127] ss:$2 sm:$0xff] %v2056
      %v2129 = vld.sshfl [vmem:[#allocation1] sm:$0xff pattern:$0x75316420]
      %v2130 = vld.sshfl [vmem:[#allocation1 + $0x8] sm:$0xff pattern:$0x75316420]
      %v2131 = vld.sshfl [vmem:[#allocation1 + $0x10] sm:$0xff pattern:$0x75316420]
      %2132 = vrot.lane.b32.xlu0 %v2129, 17
      %v2133 = vpop.permute.xlu0 %2132
      %2134 = vrot.lane.b32.xlu0 %v2130, 17
      %v2135 = vpop.permute.xlu0 %2134
      %2136 = vrot.lane.b32.xlu0 %v2131, 17
      %v2137 = vpop.permute.xlu0 %2136
      %v2138 = vsel %vm670, %v2133, %v2135
      %v2139 = vsel %vm670, %v2135, %v2137
      %v2141 = vsel %vm798, %v2057, 0
      %v2143 = vsel %vm725, %v2138, 0
      %v2145 = vsel %vm725, %v2139, 0
      %2147 = vmatpush.msra.mxu0 0.0
      %2148 = vmatpush.msra.mxu0 0.0
      %2149 = vmatpush.msra.mxu0 0.0
      %2150 = vmatpush.msra.mxu0 0.0
      %2151 = vmatpush.msra.mxu0 0.0
      %2152 = vmatpush.msra.mxu0 0.0
      %2153 = vmatpush.msra.mxu0 0.0
      %2154 = vmatpush.msra.mxu0 0.0
      %2155 = vmatpush.msra.mxu0 0.0
      %2156 = vmatpush.msra.mxu0 0.0
      %2157 = vmatpush.msra.mxu0 0.0
      %2158 = vmatpush.msra.mxu0 0.0
      %2159 = vmatpush.msra.mxu0 0.0
      %2160 = vmatpush.msra.mxu0 0.0
      %2161 = vmatpush.msra.mxu0 0.0
      %2162 = vmatpush.msra.mxu0 %v2143
      %2163 = vmatmul.f32.gmra.mxu0 %v2141
      %v2164 = vpop.f32.mrf.mxu0
      %v2165 = vadd.f32 %v2102, %v2164
      %2166 = vdwg.mxu0
      %2167 = vmatpush.msra.mxu0 0.0
      %2168 = vmatpush.msra.mxu0 0.0
      %2169 = vmatpush.msra.mxu0 0.0
      %2170 = vmatpush.msra.mxu0 0.0
      %2171 = vmatpush.msra.mxu0 0.0
      %2172 = vmatpush.msra.mxu0 0.0
      %2173 = vmatpush.msra.mxu0 0.0
      %2174 = vmatpush.msra.mxu0 0.0
      %2175 = vmatpush.msra.mxu0 0.0
      %2176 = vmatpush.msra.mxu0 0.0
      %2177 = vmatpush.msra.mxu0 0.0
      %2178 = vmatpush.msra.mxu0 0.0
      %2179 = vmatpush.msra.mxu0 0.0
      %2180 = vmatpush.msra.mxu0 0.0
      %2181 = vmatpush.msra.mxu0 0.0
      %2182 = vmatpush.msra.mxu0 %v2145
      %2183 = vmatmul.f32.gmra.mxu0 %v2141
      %v2184 = vpop.f32.mrf.mxu0
      %v2185 = vadd.f32 %v2122, %v2184
      %2186 = vdwg.mxu0
      %v2187 = vld [vmem:[#allocation2] sm:$0xff]
      %v2188 = vld [vmem:[#allocation2 + $0x8] sm:$0xf]
      %v2189 = vld [vmem:[%s433] ss:$4 sm:$0x3]
      %v2191 = vperm.slane %v2189, 0
      %v2192 = vperm.slane %v2189, 1
      %v2193 = vrot.slane %v2192, 4
      %v2194 = vsel %vm725, %v2191, %v2193
      %2195 = vrot.lane.b32.xlu0 %v2194, 113
      %v2196 = vpop.permute.xlu0 %2195
      %v2197 = vrot.slane %v2196, 4
      %v2198 = vsel %vm439, %v2197, %v2196
      %v2201 = vmul.f32 %v2187, %v2198
      %v2202 = vmul.f32 %v2188, %v2197
      %s2203 = scalar_lea.vmem %s7, 2
      %v2204 = vld [vmem:[%s2203] sm:$0x1]
      %2207 = vst [vmem:[#allocation1] ss:$2 sm:$0xff] %v2201
      %s2208 = scalar_lea.vmem [#allocation1], 16
      %2209 = vst [vmem:[%s2208] ss:$2 sm:$0xff] %v2202
      %v2210 = vld.sshfl [vmem:[#allocation1] sm:$0xff pattern:$0x75316420]
      %v2211 = vld.sshfl [vmem:[#allocation1 + $0x8] sm:$0xff pattern:$0x75316420]
      %v2212 = vld.sshfl [vmem:[#allocation1 + $0x10] sm:$0xff pattern:$0x75316420]
      %2213 = vrot.lane.b32.xlu0 %v2210, 15
      %v2214 = vpop.permute.xlu0 %2213
      %2215 = vrot.lane.b32.xlu0 %v2211, 15
      %v2216 = vpop.permute.xlu0 %2215
      %2217 = vrot.lane.b32.xlu0 %v2212, 15
      %v2218 = vpop.permute.xlu0 %2217
      %v2219 = vsel %vm593, %v2214, %v2216
      %v2220 = vsel %vm593, %v2216, %v2218
      %v2222 = vsel %vm798, %v2204, 0
      %v2224 = vsel %vm725, %v2219, 0
      %v2226 = vsel %vm725, %v2220, 0
      %2228 = vmatpush.msra.mxu0 0.0
      %2229 = vmatpush.msra.mxu0 0.0
      %2230 = vmatpush.msra.mxu0 0.0
      %2231 = vmatpush.msra.mxu0 0.0
      %2232 = vmatpush.msra.mxu0 0.0
      %2233 = vmatpush.msra.mxu0 0.0
      %2234 = vmatpush.msra.mxu0 0.0
      %2235 = vmatpush.msra.mxu0 0.0
      %2236 = vmatpush.msra.mxu0 0.0
      %2237 = vmatpush.msra.mxu0 0.0
      %2238 = vmatpush.msra.mxu0 0.0
      %2239 = vmatpush.msra.mxu0 0.0
      %2240 = vmatpush.msra.mxu0 0.0
      %2241 = vmatpush.msra.mxu0 0.0
      %2242 = vmatpush.msra.mxu0 0.0
      %2243 = vmatpush.msra.mxu0 %v2224
      %2244 = vmatmul.f32.gmra.mxu0 %v2222
      %v2245 = vpop.f32.mrf.mxu0
      %v2246 = vadd.f32 0.0, %v2245
      %2247 = vdwg.mxu0
      %2248 = vmatpush.msra.mxu0 0.0
      %2249 = vmatpush.msra.mxu0 0.0
      %2250 = vmatpush.msra.mxu0 0.0
      %2251 = vmatpush.msra.mxu0 0.0
      %2252 = vmatpush.msra.mxu0 0.0
      %2253 = vmatpush.msra.mxu0 0.0
      %2254 = vmatpush.msra.mxu0 0.0
      %2255 = vmatpush.msra.mxu0 0.0
      %2256 = vmatpush.msra.mxu0 0.0
      %2257 = vmatpush.msra.mxu0 0.0
      %2258 = vmatpush.msra.mxu0 0.0
      %2259 = vmatpush.msra.mxu0 0.0
      %2260 = vmatpush.msra.mxu0 0.0
      %2261 = vmatpush.msra.mxu0 0.0
      %2262 = vmatpush.msra.mxu0 0.0
      %2263 = vmatpush.msra.mxu0 %v2226
      %2264 = vmatmul.f32.gmra.mxu0 %v2222
      %v2265 = vpop.f32.mrf.mxu0
      %v2266 = vadd.f32 0.0, %v2265
      %2267 = vdwg.mxu0
      %v2268 = vadd.f32 %v2165, %v2246
      %v2269 = vadd.f32 %v2185, %v2266
      %v2270 = vld [vmem:[#allocation2] sm:$0xff]
      %v2271 = vld [vmem:[#allocation2 + $0x8] sm:$0xf]
      %2272 = vrot.lane.b32.xlu0 %v2048, 127
      %v2273 = vpop.permute.xlu0 %2272
      %v2274 = vrot.slane %v2273, 4
      %v2275 = vsel %vm424, %v2274, %v2273
      %v2278 = vmul.f32 %v2270, %v2275
      %v2279 = vmul.f32 %v2271, %v2274
      %s2280 = scalar_lea.vmem %s7, 3
      %v2281 = vld [vmem:[%s2280] sm:$0x1]
      %2284 = vst [vmem:[#allocation1] ss:$2 sm:$0xff] %v2278
      %s2285 = scalar_lea.vmem [#allocation1], 16
      %2286 = vst [vmem:[%s2285] ss:$2 sm:$0xff] %v2279
      %v2287 = vld.sshfl [vmem:[#allocation1] sm:$0xff pattern:$0x75316420]
      %v2288 = vld.sshfl [vmem:[#allocation1 + $0x8] sm:$0xff pattern:$0x75316420]
      %v2289 = vld.sshfl [vmem:[#allocation1 + $0x10] sm:$0xff pattern:$0x75316420]
      %2290 = vrot.lane.b32.xlu0 %v2287, 1
      %v2291 = vpop.permute.xlu0 %2290
      %2292 = vrot.lane.b32.xlu0 %v2288, 1
      %v2293 = vpop.permute.xlu0 %2292
      %2294 = vrot.lane.b32.xlu0 %v2289, 1
      %v2295 = vpop.permute.xlu0 %2294
      %v2296 = vsel %vm551, %v2291, %v2293
      %v2297 = vsel %vm551, %v2293, %v2295
      %v2299 = vsel %vm798, %v2281, 0
      %v2301 = vsel %vm725, %v2296, 0
      %v2303 = vsel %vm725, %v2297, 0
      %2305 = vmatpush.msra.mxu0 0.0
      %2306 = vmatpush.msra.mxu0 0.0
      %2307 = vmatpush.msra.mxu0 0.0
      %2308 = vmatpush.msra.mxu0 0.0
      %2309 = vmatpush.msra.mxu0 0.0
      %2310 = vmatpush.msra.mxu0 0.0
      %2311 = vmatpush.msra.mxu0 0.0
      %2312 = vmatpush.msra.mxu0 0.0
      %2313 = vmatpush.msra.mxu0 0.0
      %2314 = vmatpush.msra.mxu0 0.0
      %2315 = vmatpush.msra.mxu0 0.0
      %2316 = vmatpush.msra.mxu0 0.0
      %2317 = vmatpush.msra.mxu0 0.0
      %2318 = vmatpush.msra.mxu0 0.0
      %2319 = vmatpush.msra.mxu0 0.0
      %2320 = vmatpush.msra.mxu0 %v2301
      %2321 = vmatmul.f32.gmra.mxu0 %v2299
      %v2322 = vpop.f32.mrf.mxu0
      %v2323 = vadd.f32 0.0, %v2322
      %2324 = vdwg.mxu0
      %2325 = vmatpush.msra.mxu0 0.0
      %2326 = vmatpush.msra.mxu0 0.0
      %2327 = vmatpush.msra.mxu0 0.0
      %2328 = vmatpush.msra.mxu0 0.0
      %2329 = vmatpush.msra.mxu0 0.0
      %2330 = vmatpush.msra.mxu0 0.0
      %2331 = vmatpush.msra.mxu0 0.0
      %2332 = vmatpush.msra.mxu0 0.0
      %2333 = vmatpush.msra.mxu0 0.0
      %2334 = vmatpush.msra.mxu0 0.0
      %2335 = vmatpush.msra.mxu0 0.0
      %2336 = vmatpush.msra.mxu0 0.0
      %2337 = vmatpush.msra.mxu0 0.0
      %2338 = vmatpush.msra.mxu0 0.0
      %2339 = vmatpush.msra.mxu0 0.0
      %2340 = vmatpush.msra.mxu0 %v2303
      %2341 = vmatmul.f32.gmra.mxu0 %v2299
      %v2342 = vpop.f32.mrf.mxu0
      %v2343 = vadd.f32 0.0, %v2342
      %2344 = vdwg.mxu0
      %v2345 = vadd.f32 %v2268, %v2323
      %v2346 = vadd.f32 %v2269, %v2343
      %v2347 = vld [vmem:[#allocation2 + $0x4] sm:$0xff]
      %s2348 = scalar_lea.vmem %s7, 4
      %v2349 = vld [vmem:[%s2348] sm:$0x1]
      %2351 = vst [vmem:[#allocation1] ss:$2 sm:$0xff] %v2347
      %v2352 = vld.sshfl [vmem:[#allocation1] sm:$0xff pattern:$0x75316420]
      %v2353 = vld.sshfl [vmem:[#allocation1 + $0x8] sm:$0xff pattern:$0x75316420]
      %v2355 = vsel %vm798, %v2349, 0
      %v2357 = vsel %vm725, %v2352, 0
      %v2359 = vsel %vm725, %v2353, 0
      %2361 = vmatpush.msra.mxu0 0.0
      %2362 = vmatpush.msra.mxu0 0.0
      %2363 = vmatpush.msra.mxu0 0.0
      %2364 = vmatpush.msra.mxu0 0.0
      %2365 = vmatpush.msra.mxu0 0.0
      %2366 = vmatpush.msra.mxu0 0.0
      %2367 = vmatpush.msra.mxu0 0.0
      %2368 = vmatpush.msra.mxu0 0.0
      %2369 = vmatpush.msra.mxu0 0.0
      %2370 = vmatpush.msra.mxu0 0.0
      %2371 = vmatpush.msra.mxu0 0.0
      %2372 = vmatpush.msra.mxu0 0.0
      %2373 = vmatpush.msra.mxu0 0.0
      %2374 = vmatpush.msra.mxu0 0.0
      %2375 = vmatpush.msra.mxu0 0.0
      %2376 = vmatpush.msra.mxu0 %v2357
      %2377 = vmatmul.f32.gmra.mxu0 %v2355
      %v2378 = vpop.f32.mrf.mxu0
      %v2379 = vadd.f32 0.0, %v2378
      %2380 = vdwg.mxu0
      %2381 = vmatpush.msra.mxu0 0.0
      %2382 = vmatpush.msra.mxu0 0.0
      %2383 = vmatpush.msra.mxu0 0.0
      %2384 = vmatpush.msra.mxu0 0.0
      %2385 = vmatpush.msra.mxu0 0.0
      %2386 = vmatpush.msra.mxu0 0.0
      %2387 = vmatpush.msra.mxu0 0.0
      %2388 = vmatpush.msra.mxu0 0.0
      %2389 = vmatpush.msra.mxu0 0.0
      %2390 = vmatpush.msra.mxu0 0.0
      %2391 = vmatpush.msra.mxu0 0.0
      %2392 = vmatpush.msra.mxu0 0.0
      %2393 = vmatpush.msra.mxu0 0.0
      %2394 = vmatpush.msra.mxu0 0.0
      %2395 = vmatpush.msra.mxu0 0.0
      %2396 = vmatpush.msra.mxu0 %v2359
      %2397 = vmatmul.f32.gmra.mxu0 %v2355
      %v2398 = vpop.f32.mrf.mxu0
      %v2399 = vadd.f32 0.0, %v2398
      %2400 = vdwg.mxu0
      %v2401 = vadd.f32 %v2345, %v2379
      %v2402 = vadd.f32 %v2346, %v2399
      %v2403 = vld [vmem:[#allocation2 + $0x4] sm:$0xff]
      %v2404 = vld [vmem:[#allocation2 + $0xc] sm:$0xf]
      %2405 = vrot.lane.b32.xlu0 %v2194, 1
      %v2406 = vpop.permute.xlu0 %2405
      %v2407 = vrot.slane %v2406, 4
      %v2408 = vsel %vm551, %v2407, %v2406
      %v2411 = vmul.f32 %v2403, %v2408
      %v2412 = vmul.f32 %v2404, %v2407
      %s2413 = scalar_lea.vmem %s7, 5
      %v2414 = vld [vmem:[%s2413] sm:$0x1]
      %2417 = vst [vmem:[#allocation1] ss:$2 sm:$0xff] %v2411
      %s2418 = scalar_lea.vmem [#allocation1], 16
      %2419 = vst [vmem:[%s2418] ss:$2 sm:$0xff] %v2412
      %v2420 = vld.sshfl [vmem:[#allocation1] sm:$0xff pattern:$0x75316420]
      %v2421 = vld.sshfl [vmem:[#allocation1 + $0x8] sm:$0xff pattern:$0x75316420]
      %v2422 = vld.sshfl [vmem:[#allocation1 + $0x10] sm:$0xff pattern:$0x75316420]
      %2423 = vrot.lane.b32.xlu0 %v2420, 127
      %v2424 = vpop.permute.xlu0 %2423
      %2425 = vrot.lane.b32.xlu0 %v2421, 127
      %v2426 = vpop.permute.xlu0 %2425
      %2427 = vrot.lane.b32.xlu0 %v2422, 127
      %v2428 = vpop.permute.xlu0 %2427
      %v2429 = vsel %vm424, %v2424, %v2426
      %v2430 = vsel %vm424, %v2426, %v2428
      %v2432 = vsel %vm798, %v2414, 0
      %v2434 = vsel %vm725, %v2429, 0
      %v2436 = vsel %vm725, %v2430, 0
      %2438 = vmatpush.msra.mxu0 0.0
      %2439 = vmatpush.msra.mxu0 0.0
      %2440 = vmatpush.msra.mxu0 0.0
      %2441 = vmatpush.msra.mxu0 0.0
      %2442 = vmatpush.msra.mxu0 0.0
      %2443 = vmatpush.msra.mxu0 0.0
      %2444 = vmatpush.msra.mxu0 0.0
      %2445 = vmatpush.msra.mxu0 0.0
      %2446 = vmatpush.msra.mxu0 0.0
      %2447 = vmatpush.msra.mxu0 0.0
      %2448 = vmatpush.msra.mxu0 0.0
      %2449 = vmatpush.msra.mxu0 0.0
      %2450 = vmatpush.msra.mxu0 0.0
      %2451 = vmatpush.msra.mxu0 0.0
      %2452 = vmatpush.msra.mxu0 0.0
      %2453 = vmatpush.msra.mxu0 %v2434
      %2454 = vmatmul.f32.gmra.mxu0 %v2432
      %v2455 = vpop.f32.mrf.mxu0
      %v2456 = vadd.f32 0.0, %v2455
      %2457 = vdwg.mxu0
      %2458 = vmatpush.msra.mxu0 0.0
      %2459 = vmatpush.msra.mxu0 0.0
      %2460 = vmatpush.msra.mxu0 0.0
      %2461 = vmatpush.msra.mxu0 0.0
      %2462 = vmatpush.msra.mxu0 0.0
      %2463 = vmatpush.msra.mxu0 0.0
      %2464 = vmatpush.msra.mxu0 0.0
      %2465 = vmatpush.msra.mxu0 0.0
      %2466 = vmatpush.msra.mxu0 0.0
      %2467 = vmatpush.msra.mxu0 0.0
      %2468 = vmatpush.msra.mxu0 0.0
      %2469 = vmatpush.msra.mxu0 0.0
      %2470 = vmatpush.msra.mxu0 0.0
      %2471 = vmatpush.msra.mxu0 0.0
      %2472 = vmatpush.msra.mxu0 0.0
      %2473 = vmatpush.msra.mxu0 %v2436
      %2474 = vmatmul.f32.gmra.mxu0 %v2432
      %v2475 = vpop.f32.mrf.mxu0
      %v2476 = vadd.f32 0.0, %v2475
      %2477 = vdwg.mxu0
      %v2478 = vadd.f32 %v2401, %v2456
      %v2479 = vadd.f32 %v2402, %v2476
      %v2480 = vld [vmem:[#allocation2 + $0x4] sm:$0xff]
      %v2481 = vld [vmem:[#allocation2 + $0xc] sm:$0xf]
      %2482 = vrot.lane.b32.xlu0 %v2048, 15
      %v2483 = vpop.permute.xlu0 %2482
      %v2484 = vrot.slane %v2483, 4
      %v2485 = vsel %vm593, %v2484, %v2483
      %v2488 = vmul.f32 %v2480, %v2485
      %v2489 = vmul.f32 %v2481, %v2484
      %s2490 = scalar_lea.vmem %s7, 6
      %v2491 = vld [vmem:[%s2490] sm:$0x1]
      %2494 = vst [vmem:[#allocation1] ss:$2 sm:$0xff] %v2488
      %s2495 = scalar_lea.vmem [#allocation1], 16
      %2496 = vst [vmem:[%s2495] ss:$2 sm:$0xff] %v2489
      %v2497 = vld.sshfl [vmem:[#allocation1] sm:$0xff pattern:$0x75316420]
      %v2498 = vld.sshfl [vmem:[#allocation1 + $0x8] sm:$0xff pattern:$0x75316420]
      %v2499 = vld.sshfl [vmem:[#allocation1 + $0x10] sm:$0xff pattern:$0x75316420]
      %2500 = vrot.lane.b32.xlu0 %v2497, 113
      %v2501 = vpop.permute.xlu0 %2500
      %2502 = vrot.lane.b32.xlu0 %v2498, 113
      %v2503 = vpop.permute.xlu0 %2502
      %2504 = vrot.lane.b32.xlu0 %v2499, 113
      %v2505 = vpop.permute.xlu0 %2504
      %v2506 = vsel %vm439, %v2501, %v2503
      %v2507 = vsel %vm439, %v2503, %v2505
      %v2509 = vsel %vm798, %v2491, 0
      %v2511 = vsel %vm725, %v2506, 0
      %v2513 = vsel %vm725, %v2507, 0
      %2515 = vmatpush.msra.mxu0 0.0
      %2516 = vmatpush.msra.mxu0 0.0
      %2517 = vmatpush.msra.mxu0 0.0
      %2518 = vmatpush.msra.mxu0 0.0
      %2519 = vmatpush.msra.mxu0 0.0
      %2520 = vmatpush.msra.mxu0 0.0
      %2521 = vmatpush.msra.mxu0 0.0
      %2522 = vmatpush.msra.mxu0 0.0
      %2523 = vmatpush.msra.mxu0 0.0
      %2524 = vmatpush.msra.mxu0 0.0
      %2525 = vmatpush.msra.mxu0 0.0
      %2526 = vmatpush.msra.mxu0 0.0
      %2527 = vmatpush.msra.mxu0 0.0
      %2528 = vmatpush.msra.mxu0 0.0
      %2529 = vmatpush.msra.mxu0 0.0
      %2530 = vmatpush.msra.mxu0 %v2511
      %2531 = vmatmul.f32.gmra.mxu0 %v2509
      %v2532 = vpop.f32.mrf.mxu0
      %v2533 = vadd.f32 0.0, %v2532
      %2534 = vdwg.mxu0
      %2535 = vmatpush.msra.mxu0 0.0
      %2536 = vmatpush.msra.mxu0 0.0
      %2537 = vmatpush.msra.mxu0 0.0
      %2538 = vmatpush.msra.mxu0 0.0
      %2539 = vmatpush.msra.mxu0 0.0
      %2540 = vmatpush.msra.mxu0 0.0
      %2541 = vmatpush.msra.mxu0 0.0
      %2542 = vmatpush.msra.mxu0 0.0
      %2543 = vmatpush.msra.mxu0 0.0
      %2544 = vmatpush.msra.mxu0 0.0
      %2545 = vmatpush.msra.mxu0 0.0
      %2546 = vmatpush.msra.mxu0 0.0
      %2547 = vmatpush.msra.mxu0 0.0
      %2548 = vmatpush.msra.mxu0 0.0
      %2549 = vmatpush.msra.mxu0 0.0
      %2550 = vmatpush.msra.mxu0 %v2513
      %2551 = vmatmul.f32.gmra.mxu0 %v2509
      %v2552 = vpop.f32.mrf.mxu0
      %v2553 = vadd.f32 0.0, %v2552
      %2554 = vdwg.mxu0
      %v2555 = vadd.f32 %v2478, %v2533
      %v2556 = vadd.f32 %v2479, %v2553
      %v2557 = vld [vmem:[#allocation2 + $0x4] sm:$0xff]
      %v2558 = vld [vmem:[#allocation2 + $0xc] sm:$0xf]
      %s2559 = scalar_lea.vmem %s7, 7
      %v2560 = vld [vmem:[%s2559] sm:$0x1]
      %2563 = vst [vmem:[#allocation1] ss:$2 sm:$0xff] %v2557
      %s2564 = scalar_lea.vmem [#allocation1], 16
      %2565 = vst [vmem:[%s2564] ss:$2 sm:$0xff] %v2558
      %v2566 = vld.sshfl [vmem:[#allocation1] sm:$0xff pattern:$0x75316420]
      %v2567 = vld.sshfl [vmem:[#allocation1 + $0x8] sm:$0xff pattern:$0x75316420]
      %v2568 = vld.sshfl [vmem:[#allocation1 + $0x10] sm:$0xff pattern:$0x75316420]
      %2569 = vrot.lane.b32.xlu0 %v2566, 112
      %v2570 = vpop.permute.xlu0 %2569
      %2571 = vrot.lane.b32.xlu0 %v2567, 112
      %v2572 = vpop.permute.xlu0 %2571
      %2573 = vrot.lane.b32.xlu0 %v2568, 112
      %v2574 = vpop.permute.xlu0 %2573
      %v2575 = vsel %vm510, %v2570, %v2572
      %v2576 = vsel %vm510, %v2572, %v2574
      %v2578 = vsel %vm798, %v2560, 0
      %v2580 = vsel %vm725, %v2575, 0
      %v2582 = vsel %vm725, %v2576, 0
      %2584 = vmatpush.msra.mxu0 0.0
      %2585 = vmatpush.msra.mxu0 0.0
      %2586 = vmatpush.msra.mxu0 0.0
      %2587 = vmatpush.msra.mxu0 0.0
      %2588 = vmatpush.msra.mxu0 0.0
      %2589 = vmatpush.msra.mxu0 0.0
      %2590 = vmatpush.msra.mxu0 0.0
      %2591 = vmatpush.msra.mxu0 0.0
      %2592 = vmatpush.msra.mxu0 0.0
      %2593 = vmatpush.msra.mxu0 0.0
      %2594 = vmatpush.msra.mxu0 0.0
      %2595 = vmatpush.msra.mxu0 0.0
      %2596 = vmatpush.msra.mxu0 0.0
      %2597 = vmatpush.msra.mxu0 0.0
      %2598 = vmatpush.msra.mxu0 0.0
      %2599 = vmatpush.msra.mxu0 %v2580
      %2600 = vmatmul.f32.gmra.mxu0 %v2578
      %v2601 = vpop.f32.mrf.mxu0
      %v2602 = vadd.f32 0.0, %v2601
      %2603 = vdwg.mxu0
      %2604 = vmatpush.msra.mxu0 0.0
      %2605 = vmatpush.msra.mxu0 0.0
      %2606 = vmatpush.msra.mxu0 0.0
      %2607 = vmatpush.msra.mxu0 0.0
      %2608 = vmatpush.msra.mxu0 0.0
      %2609 = vmatpush.msra.mxu0 0.0
      %2610 = vmatpush.msra.mxu0 0.0
      %2611 = vmatpush.msra.mxu0 0.0
      %2612 = vmatpush.msra.mxu0 0.0
      %2613 = vmatpush.msra.mxu0 0.0
      %2614 = vmatpush.msra.mxu0 0.0
      %2615 = vmatpush.msra.mxu0 0.0
      %2616 = vmatpush.msra.mxu0 0.0
      %2617 = vmatpush.msra.mxu0 0.0
      %2618 = vmatpush.msra.mxu0 0.0
      %2619 = vmatpush.msra.mxu0 %v2582
      %2620 = vmatmul.f32.gmra.mxu0 %v2578
      %v2621 = vpop.f32.mrf.mxu0
      %v2622 = vadd.f32 0.0, %v2621
      %2623 = vdwg.mxu0
      %v2624 = vadd.f32 %v2555, %v2602
      %v2625 = vadd.f32 %v2556, %v2622
      %v2626 = vld [vmem:[#allocation2 + $0x4] sm:$0xff]
      %v2627 = vld [vmem:[#allocation2 + $0xc] sm:$0xf]
      %2628 = vrot.lane.b32.xlu0 %v2194, 17
      %v2629 = vpop.permute.xlu0 %2628
      %v2630 = vrot.slane %v2629, 4
      %v2631 = vsel %vm670, %v2630, %v2629
      %v2634 = vmul.f32 %v2626, %v2631
      %v2635 = vmul.f32 %v2627, %v2630
      %s2636 = scalar_lea.vmem %s7, 8
      %v2637 = vld [vmem:[%s2636] sm:$0x1]
      %2640 = vst [vmem:[#allocation1] ss:$2 sm:$0xff] %v2634
      %s2641 = scalar_lea.vmem [#allocation1], 16
      %2642 = vst [vmem:[%s2641] ss:$2 sm:$0xff] %v2635
      %v2643 = vld.sshfl [vmem:[#allocation1] sm:$0xff pattern:$0x75316420]
      %v2644 = vld.sshfl [vmem:[#allocation1 + $0x8] sm:$0xff pattern:$0x75316420]
      %v2645 = vld.sshfl [vmem:[#allocation1 + $0x10] sm:$0xff pattern:$0x75316420]
      %2646 = vrot.lane.b32.xlu0 %v2643, 111
      %v2647 = vpop.permute.xlu0 %2646
      %2648 = vrot.lane.b32.xlu0 %v2644, 111
      %v2649 = vpop.permute.xlu0 %2648
      %2650 = vrot.lane.b32.xlu0 %v2645, 111
      %v2651 = vpop.permute.xlu0 %2650
      %v2652 = vsel %vm375, %v2647, %v2649
      %v2653 = vsel %vm375, %v2649, %v2651
      %v2655 = vsel %vm798, %v2637, 0
      %v2657 = vsel %vm725, %v2652, 0
      %v2659 = vsel %vm725, %v2653, 0
      %2661 = vmatpush.msra.mxu0 0.0
      %2662 = vmatpush.msra.mxu0 0.0
      %2663 = vmatpush.msra.mxu0 0.0
      %2664 = vmatpush.msra.mxu0 0.0
      %2665 = vmatpush.msra.mxu0 0.0
      %2666 = vmatpush.msra.mxu0 0.0
      %2667 = vmatpush.msra.mxu0 0.0
      %2668 = vmatpush.msra.mxu0 0.0
      %2669 = vmatpush.msra.mxu0 0.0
      %2670 = vmatpush.msra.mxu0 0.0
      %2671 = vmatpush.msra.mxu0 0.0
      %2672 = vmatpush.msra.mxu0 0.0
      %2673 = vmatpush.msra.mxu0 0.0
      %2674 = vmatpush.msra.mxu0 0.0
      %2675 = vmatpush.msra.mxu0 0.0
      %2676 = vmatpush.msra.mxu0 %v2657
      %2677 = vmatmul.f32.gmra.mxu0 %v2655
      %v2678 = vpop.f32.mrf.mxu0
      %v2679 = vadd.f32 0.0, %v2678
      %2680 = vdwg.mxu0
      %2681 = vmatpush.msra.mxu0 0.0
      %2682 = vmatpush.msra.mxu0 0.0
      %2683 = vmatpush.msra.mxu0 0.0
      %2684 = vmatpush.msra.mxu0 0.0
      %2685 = vmatpush.msra.mxu0 0.0
      %2686 = vmatpush.msra.mxu0 0.0
      %2687 = vmatpush.msra.mxu0 0.0
      %2688 = vmatpush.msra.mxu0 0.0
      %2689 = vmatpush.msra.mxu0 0.0
      %2690 = vmatpush.msra.mxu0 0.0
      %2691 = vmatpush.msra.mxu0 0.0
      %2692 = vmatpush.msra.mxu0 0.0
      %2693 = vmatpush.msra.mxu0 0.0
      %2694 = vmatpush.msra.mxu0 0.0
      %2695 = vmatpush.msra.mxu0 0.0
      %2696 = vmatpush.msra.mxu0 %v2659
      %2697 = vmatmul.f32.gmra.mxu0 %v2655
      %v2698 = vpop.f32.mrf.mxu0
      %v2699 = vadd.f32 0.0, %v2698
      %2700 = vdwg.mxu0
      %v2701 = vadd.f32 %v2624, %v2679
      %v2702 = vadd.f32 %v2625, %v2699
      %v2703 = vld [vmem:[#allocation3] sm:$0x1]
      %2705 = vset.pattern.permute.xlu0 0
      %2706 = vperm.xlu0 %2705, %v2703
      %v2707 = vpop.permute.xlu0 %2706
      %v2709 = vperm.slane %v2707, 0
      %v2710 = vadd.f32 %v2701, %v2709
      %v2711 = vadd.f32 %v2702, %v2709
      %v2712 = vld [vmem:[%s352] sm:$0x3]
      %v2714 = vperm.slane %v2712, 0
      %v2715 = vperm.slane %v2712, 1
      %v2718 = vadd.f32 %v2710, %v2714
      %v2719 = vadd.f32 %v2711, %v2715
      %v2722 = vrot.slane %v2719, 7
      %vm2723 = vcmask 1040384
      %v2724 = vsel %vm2723, %v2718, %v2722
      %2726 = vst.msk [vmem:[%s356] sm:$0x3] %vm366, %v2724
      %p2727 = scmp.lt.s32.totalorder %s23, 1
      %s2728 = scalar_select %p2727, %s23, 1
      %s2729 = smul.addr %s2728, 2
      %s2730 = scalar_lea.vmem %s10, %s2729
      // Predicated region
      $region61: #{postnet_forward.1} parent=59 // pred_check
        %p2731 = pneg %p256
      $region62: #{postnet_forward.1} parent=59 // pred_check_branch
        %2733 = sbr.rel (%p2731) target = $region64
      $region63: #{postnet_forward.1} parent=59 // pred_region
        _
      $region64: #{postnet_forward.1} parent=59 // pred_fallthru
        _
    $region60: #{postnet_forward.1} parent=5 // pred_fallthru
      _
    %p2734 = scmp.le.s32.totalorder 2, %s18
    // Predicated region
    $region65: #{postnet_forward.1} parent=5 // pred_check
      %p2735 = pneg %p2734
    $region66: #{postnet_forward.1} parent=5 // pred_check_branch
      %2737 = sbr.rel (%p2735) target = $region68
    $region67: #{postnet_forward.1} parent=5 // pred_region
      %s2738 = ssub.s32 %s18, 2
      // Predicated region
      $region69: #{postnet_forward.1} parent=67 // pred_check
        %p2739 = pneg %p262
      $region70: #{postnet_forward.1} parent=67 // pred_check_branch
        %2741 = sbr.rel (%p2739) target = $region72
      $region71: #{postnet_forward.1} parent=67 // pred_region
        %p2742 = scmp.lt.s32.totalorder %s24, 1
        %s2743 = scalar_select %p2742, %s24, 1
        %s2744 = smul.addr %s2743, 2
        %s2745 = scalar_lea.vmem %s10, %s2744
      $region72: #{postnet_forward.1} parent=67 // pred_fallthru
        _
    $region68: #{postnet_forward.1} parent=5 // pred_fallthru
      _
  $region6: #{postnet_forward.1} parent=0 // loop_footer
    %s22 = sadd.s32 1, %s18
  $region7: #{postnet_forward.1} parent=0 // loop_footer_branch
    %17 = sbr.rel target = $region3
  $region8: #{postnet_forward.1} parent=0 // loop_exit
    _

</llo_original>
